<compile_context>
chip_gen: v6e
topology: v6e:2x2x1
jax: 0.10.0
libtpu: 0.0.40
codegen_flags: <defaults>
</compile_context>

<pallas_src>
import functools
import math

import jax
import jax.numpy as jnp
from jax import lax
from jax.experimental import pallas as pl
from jax.experimental.pallas import tpu as pltpu

TEMP_NTXENT = 0.07
INV_TEMP_NTXENT = 1.0 / TEMP_NTXENT
EPS_NORM = 1e-12                      # F.normalize / CosineSimilarity eps
EPS_NORM_SQ = EPS_NORM * EPS_NORM
NEG_FILL = -1.0e30                    # large-but-finite mask value (robust vs finfo.min)
PAD_LABEL = int(jnp.iinfo(jnp.int32).min)
# Scoped VMEM: safe on v7x's 64 MiB physical; raise toward ~64-100 MiB on
# v5e/v6e if you grow tiles / the st stripe cache.
VMEM_LIMIT = 40 * 1024 * 1024


def _round_up(x, m):
    return ((x + m - 1) // m) * m


# ---- stage 1: row-normalize features (bf16 copy) + Gram G = Z^T Z ----------
def _norm_gram_kernel(f_ref, zc_ref, g_ref):
    f = f_ref[...]                                           # (BLK_R, Dp) f32
    nsq = jnp.sum(f * f, axis=1, keepdims=True)
    z = f * lax.rsqrt(jnp.maximum(nsq, EPS_NORM_SQ))         # F.normalize
    zc = z.astype(zc_ref.dtype)
    zc_ref[...] = zc

    @pl.when(pl.program_id(0) == 0)
    def _():
        g_ref[...] = jnp.zeros_like(g_ref)

    # bf16 MXU operands, f32 accumulation (O(N*D^2) pass)
    g_ref[...] += lax.dot_general(zc, zc, (((0,), (0,)), ((), ())),
                                  preferred_element_type=jnp.float32)


# ---- stage 2: W = Z G, rinv = rsqrt(diag(Z G Z^T)); emit scaled operands ----
def _w_scale_kernel(zc_ref, g_ref, wc_ref, zs_ref):
    z = zc_ref[...].astype(jnp.float32)                      # (BLK_R, Dp)
    w = jnp.dot(z, g_ref[...], preferred_element_type=jnp.float32)
    rnsq = jnp.sum(w * z, axis=1, keepdims=True)             # ||logits row||^2
    rinv = lax.rsqrt(jnp.maximum(rnsq, EPS_NORM_SQ))
    # fold cosine normalization + 1/temperature into the MXU operands
    wc_ref[...] = (w * (rinv * INV_TEMP_NTXENT)).astype(wc_ref.dtype)
    zs_ref[...] = (z * rinv).astype(zs_ref.dtype)


# ---- stage 3 (fused): online LSE over negatives + positive-pair softplus ----
def _fused_loss_kernel(wc_ref, zs_ref, labc_ref, labr_ref, loss_ref,
                       m_sc, s_sc, st_sc, *, n_valid, blk_r, blk_c):
    i = pl.program_id(0)
    j = pl.program_id(1)

    @pl.when(j == 0)
    def _():
        m_sc[...] = jnp.full(m_sc.shape, NEG_FILL, dtype=jnp.float32)
        s_sc[...] = jnp.zeros_like(s_sc)

    # st[a, n] = cos(logits_a, logits_n) / 0.07  (scales pre-folded, bf16 MXU)
    st = lax.dot_general(wc_ref[...], zs_ref[...], (((1,), (1,)), ((), ())),
                         preferred_element_type=jnp.float32)

    col0 = pl.multiple_of(j * blk_c, blk_c)
    st_sc[:, pl.ds(col0, blk_c)] = st                        # cache stripe tile

    lab_i = labc_ref[...]                                    # (BLK_R, 1)
    lab_j = labr_ref[:, pl.ds(col0, blk_c)]                  # (1, BLK_C) resident
    col_idx = col0 + lax.broadcasted_iota(jnp.int32, st.shape, 1)
    neg_mask = jnp.logical_and(lab_i != lab_j, col_idx < n_valid)

    neg_vals = jnp.where(neg_mask, st, NEG_FILL)
    m_old = m_sc[...]
    m_new = jnp.maximum(m_old, jnp.max(neg_vals, axis=1, keepdims=True))
    s_sc[...] = s_sc[...] * jnp.exp(m_old - m_new) + jnp.sum(
        jnp.where(neg_mask, jnp.exp(neg_vals - m_new), 0.0),
        axis=1, keepdims=True)
    m_sc[...] = m_new

    @pl.when(j == pl.num_programs(1) - 1)
    def _():
        s = s_sc[...]
        # lse_a = log sum_{neg of a} exp(st_an); -inf if anchor has no negative
        lse = jnp.where(s > 0.0, m_sc[...] + jnp.log(s), -jnp.inf)

        st_all = st_sc[...]                                  # (BLK_R, Np)
        row_g = i * blk_r + lax.broadcasted_iota(jnp.int32, st_all.shape, 0)
        col_g = lax.broadcasted_iota(jnp.int32, st_all.shape, 1)
        pos_mask = (lab_i == labr_ref[...]) & (row_g != col_g)
        pos_mask = pos_mask & (row_g < n_valid) & (col_g < n_valid)

        # per-pair loss = -log(exp(st_ap)/(exp(st_ap)+Z_a)) = softplus(lse - st_ap)
        x = lse - st_all
        sp = jnp.maximum(x, 0.0) + jnp.log(1.0 + jnp.exp(-jnp.abs(x)))
        # write-once, only at the last column step
        loss_ref[...] = jnp.sum(jnp.where(pos_mask, sp, 0.0),
                                axis=1, keepdims=True)


@functools.partial(jax.jit, static_argnames=("block_r", "block_c", "use_bf16"))
def supervised_contrastive_loss(feature_vectors, labels, *, block_r=256,
                                block_c=256, use_bf16=True):
    """feature_vectors: (N, D) float; labels: (N,) or (N, 1) int."""
    N, D = feature_vectors.shape
    lab = jnp.reshape(labels, (-1,)).astype(jnp.int32)       # torch.squeeze(labels)

    cdt = jnp.bfloat16 if use_bf16 else jnp.float32
    BLK_R, BLK_C = block_r, block_c
    align = math.lcm(BLK_R, BLK_C)
    Np = _round_up(max(N, align), align)
    Dp = max(_round_up(D, 128), 128)
    nrb = Np // BLK_R
    ncb = Np // BLK_C

    f = jnp.pad(feature_vectors.astype(jnp.float32), ((0, Np - N), (0, Dp - D)))
    labp = jnp.pad(lab, (0, Np - N), constant_values=PAD_LABEL)
    lab_col = labp.reshape(Np, 1)
    lab_row = labp.reshape(1, Np)

    # ---- stage 1: normalized bf16 copy + Gram G = Z^T Z ----------------------
    zc, g = pl.pallas_call(
        _norm_gram_kernel,
        out_shape=(jax.ShapeDtypeStruct((Np, Dp), cdt),
                   jax.ShapeDtypeStruct((Dp, Dp), jnp.float32)),
        grid=(nrb,),
        in_specs=[pl.BlockSpec((BLK_R, Dp), lambda i: (i, 0))],
        out_specs=(pl.BlockSpec((BLK_R, Dp), lambda i: (i, 0)),
                   pl.BlockSpec((Dp, Dp), lambda i: (0, 0))),
        compiler_params=pltpu.CompilerParams(
            dimension_semantics=("arbitrary",),
            vmem_limit_bytes=VMEM_LIMIT),
    )(f)

    # ---- stage 2: scaled MXU operands wc = W*rinv/temp, zs = Z*rinv ----------
    wc, zs = pl.pallas_call(
        _w_scale_kernel,
        out_shape=(jax.ShapeDtypeStruct((Np, Dp), cdt),
                   jax.ShapeDtypeStruct((Np, Dp), cdt)),
        grid=(nrb,),
        in_specs=[pl.BlockSpec((BLK_R, Dp), lambda i: (i, 0)),
                  pl.BlockSpec((Dp, Dp), lambda i: (0, 0))],
        out_specs=(pl.BlockSpec((BLK_R, Dp), lambda i: (i, 0)),
                   pl.BlockSpec((BLK_R, Dp), lambda i: (i, 0))),
        compiler_params=pltpu.CompilerParams(
            dimension_semantics=("parallel",),
            vmem_limit_bytes=VMEM_LIMIT),
    )(zc, g)

    # ---- stage 3: fused flash sweep (LSE over negatives + positive softplus) -
    kernel = functools.partial(_fused_loss_kernel, n_valid=N,
                               blk_r=BLK_R, blk_c=BLK_C)
    row_loss = pl.pallas_call(
        kernel,
        out_shape=jax.ShapeDtypeStruct((Np, 1), jnp.float32),
        grid=(nrb, ncb),
        in_specs=[pl.BlockSpec((BLK_R, Dp), lambda i, j: (i, 0)),   # wc row block
                  pl.BlockSpec((BLK_C, Dp), lambda i, j: (j, 0)),   # zs col block
                  pl.BlockSpec((BLK_R, 1), lambda i, j: (i, 0)),    # label rows
                  pl.BlockSpec((1, Np), lambda i, j: (0, 0))],      # label row (resident)
        out_specs=pl.BlockSpec((BLK_R, 1), lambda i, j: (i, 0)),
        scratch_shapes=[pltpu.VMEM((BLK_R, 1), jnp.float32),        # running max
                        pltpu.VMEM((BLK_R, 1), jnp.float32),        # running sumexp
                        pltpu.VMEM((BLK_R, Np), jnp.float32)],      # st stripe cache
        compiler_params=pltpu.CompilerParams(
            dimension_semantics=("parallel", "arbitrary"),
            vmem_limit_bytes=VMEM_LIMIT),
    )(wc, zs, lab_col, lab_row)

    loss_sum = jnp.sum(row_loss)

    # ---- pair-count bookkeeping off the N x N path (O(N log N), wrapper) -----
    lab_sorted = jnp.sort(lab)
    is_new = jnp.concatenate(
        [jnp.ones((1,), jnp.int32),
         (lab_sorted[1:] != lab_sorted[:-1]).astype(jnp.int32)])
    seg_id = jnp.cumsum(is_new) - 1
    counts = jnp.zeros((N,), jnp.float32).at[seg_id].add(1.0)
    sum_c2 = jnp.sum(counts * counts)
    n_pos = sum_c2 - float(N)            # ordered same-label pairs (a != p)
    n_neg = float(N * N) - sum_c2        # ordered different-label pairs

    loss = jnp.where(jnp.logical_and(n_pos > 0.0, n_neg > 0.0),
                     loss_sum / jnp.maximum(n_pos, 1.0),
                     0.0)
    return loss


if __name__ == "__main__":
    key = jax.random.PRNGKey(0)
    N, D = 8, 32
    kf, kl = jax.random.split(key)
    feats = jax.random.normal(kf, (N, D), dtype=jnp.float32)
    labels = jax.random.randint(kl, (N, 1), 0, 3, dtype=jnp.int32)

    loss = supervised_contrastive_loss(feats, labels)
    jax.block_until_ready(loss)
    print("KERNEL_OK")
</pallas_src>

<mosaic_0001>
module attributes {stable_mosaic.version = 11 : i64} {
  func.func private @main(%arg0: i32) attributes {dimension_semantics = [#tpu.dimension_semantics<core_parallel>], iteration_bounds = array<i64: 2>, tpu.core_type = #tpu.core_type<sc_scalar_subcore>, window_params = []} {
    return
  }
}

module attributes {stable_mosaic.version = 11 : i64} {
  func.func private @main(%arg0: i32) attributes {dimension_semantics = [#tpu.dimension_semantics<core_parallel>], iteration_bounds = array<i64: 2>, tpu.core_type = #tpu.core_type<sc_scalar_subcore>, window_params = []} {
    return
  }
}

module attributes {stable_mosaic.version = 11 : i64} {
  func.func @_norm_gram_kernel(%arg0: i32, %arg1: memref<256x128xf32, #tpu.memory_space<vmem>>, %arg2: memref<256x128xbf16, #tpu.memory_space<vmem>>, %arg3: memref<128x128xf32, #tpu.memory_space<vmem>>) attributes {dimension_semantics = [#tpu.dimension_semantics<arbitrary>], iteration_bounds = array<i64: 1>, scalar_prefetch = 0 : i64, scratch_operands = 0 : i64, tpu.core_type = #tpu.core_type<tc>, window_params = [{transform_indices = @transform_0, window_bounds = array<i64: 256, 128>}, {transform_indices = @transform_1, window_bounds = array<i64: 256, 128>}, {pipeline_mode = #tpu.pipeline_mode<synchronous>, transform_indices = @transform_2, window_bounds = array<i64: 128, 128>}]} {
    %c0 = arith.constant 0 : index
    %c0_0 = arith.constant 0 : index
    %0 = vector.load %arg1[%c0, %c0_0] : memref<256x128xf32, #tpu.memory_space<vmem>>, vector<256x128xf32>
    %1 = arith.mulf %0, %0 : vector<256x128xf32>
    %cst = arith.constant dense<0.000000e+00> : vector<256xf32>
    %2 = vector.multi_reduction <add>, %1, %cst [1] : vector<256x128xf32> to vector<256xf32>
    %3 = vector.shape_cast %2 : vector<256xf32> to vector<256x1xf32>
    %cst_1 = arith.constant 1.000000e-24 : f32
    %4 = vector.broadcast %cst_1 : f32 to vector<256x1xf32>
    %5 = arith.maximumf %3, %4 : vector<256x1xf32>
    %6 = math.rsqrt %5 : vector<256x1xf32>
    %7 = vector.broadcast %6 : vector<256x1xf32> to vector<256x128xf32>
    %8 = arith.mulf %0, %7 : vector<256x128xf32>
    %9 = arith.truncf %8 : vector<256x128xf32> to vector<256x128xbf16>
    %c0_2 = arith.constant 0 : index
    %c0_3 = arith.constant 0 : index
    %10 = vector.load %arg2[%c0_2, %c0_3] : memref<256x128xbf16, #tpu.memory_space<vmem>>, vector<256x128xbf16>
    tpu.vector_store %arg2[%c0_2, %c0_3], %9 {strides = array<i32>} : memref<256x128xbf16, #tpu.memory_space<vmem>>, vector<256x128xbf16>,
    %c0_i32 = arith.constant 0 : i32
    %11 = arith.cmpi eq, %arg0, %c0_i32 : i32
    %12 = arith.extui %11 : i1 to i32
    %c0_i32_4 = arith.constant 0 : i32
    %13 = arith.cmpi ne, %12, %c0_i32_4 : i32
    scf.if %13 {
      %cst_10 = arith.constant 0.000000e+00 : f32
      %18 = vector.broadcast %cst_10 : f32 to vector<128x128xf32>
      %c0_11 = arith.constant 0 : index
      %c0_12 = arith.constant 0 : index
      %19 = vector.load %arg3[%c0_11, %c0_12] : memref<128x128xf32, #tpu.memory_space<vmem>>, vector<128x128xf32>
      tpu.vector_store %arg3[%c0_11, %c0_12], %18 {strides = array<i32>} : memref<128x128xf32, #tpu.memory_space<vmem>>, vector<128x128xf32>,
    } else {
    }
    %c0_5 = arith.constant 0 : index
    %c0_6 = arith.constant 0 : index
    %14 = vector.load %arg3[%c0_5, %c0_6] : memref<128x128xf32, #tpu.memory_space<vmem>>, vector<128x128xf32>
    %cst_7 = arith.constant dense<0.000000e+00> : vector<128x128xf32>
    %15 = tpu.matmul %9, %9, %cst_7 {dimension_numbers = #tpu.dot_dimension_numbers<[0], [0], [1], [1], [0, 1, 1, 1], [], []>} : vector<256x128xbf16>, vector<256x128xbf16>, vector<128x128xf32> -> vector<128x128xf32>
    %16 = arith.addf %14, %15 : vector<128x128xf32>
    %c0_8 = arith.constant 0 : index
    %c0_9 = arith.constant 0 : index
    %17 = vector.load %arg3[%c0_8, %c0_9] : memref<128x128xf32, #tpu.memory_space<vmem>>, vector<128x128xf32>
    tpu.vector_store %arg3[%c0_8, %c0_9], %16 {strides = array<i32>} : memref<128x128xf32, #tpu.memory_space<vmem>>, vector<128x128xf32>,
    return
  }
  func.func @transform_0(%arg0: i32) -> (i32, i32) {
    %c0_i32 = arith.constant 0 : i32
    %c0_i32_0 = arith.constant 0 : i32
    return %arg0, %c0_i32 : i32, i32
  }
  func.func @transform_1(%arg0: i32) -> (i32, i32) {
    %c0_i32 = arith.constant 0 : i32
    %c0_i32_0 = arith.constant 0 : i32
    return %arg0, %c0_i32 : i32, i32
  }
  func.func @transform_2(%arg0: i32) -> (i32, i32) {
    %c0_i32 = arith.constant 0 : i32
    %c0_i32_0 = arith.constant 0 : i32
    %c0_i32_1 = arith.constant 0 : i32
    return %c0_i32, %c0_i32_0 : i32, i32
  }
}

module attributes {stable_mosaic.version = 11 : i64} {
  func.func @_w_scale_kernel(%arg0: i32, %arg1: memref<256x128xbf16, #tpu.memory_space<vmem>>, %arg2: memref<128x128xf32, #tpu.memory_space<vmem>>, %arg3: memref<256x128xbf16, #tpu.memory_space<vmem>>, %arg4: memref<256x128xbf16, #tpu.memory_space<vmem>>) attributes {dimension_semantics = [#tpu.dimension_semantics<parallel>], iteration_bounds = array<i64: 1>, scalar_prefetch = 0 : i64, scratch_operands = 0 : i64, tpu.core_type = #tpu.core_type<tc>, window_params = [{transform_indices = @transform_0, window_bounds = array<i64: 256, 128>}, {pipeline_mode = #tpu.pipeline_mode<synchronous>, transform_indices = @transform_1, window_bounds = array<i64: 128, 128>}, {transform_indices = @transform_2, window_bounds = array<i64: 256, 128>}, {transform_indices = @transform_3, window_bounds = array<i64: 256, 128>}]} {
    %c0 = arith.constant 0 : index
    %c0_0 = arith.constant 0 : index
    %0 = vector.load %arg1[%c0, %c0_0] : memref<256x128xbf16, #tpu.memory_space<vmem>>, vector<256x128xbf16>
    %1 = arith.extf %0 : vector<256x128xbf16> to vector<256x128xf32>
    %c0_1 = arith.constant 0 : index
    %c0_2 = arith.constant 0 : index
    %2 = vector.load %arg2[%c0_1, %c0_2] : memref<128x128xf32, #tpu.memory_space<vmem>>, vector<128x128xf32>
    %cst = arith.constant dense<0.000000e+00> : vector<256x128xf32>
    %3 = tpu.matmul %1, %2, %cst {dimension_numbers = #tpu.dot_dimension_numbers<[1], [0], [0], [1], [0, 0, 1, 1], [], []>} : vector<256x128xf32>, vector<128x128xf32>, vector<256x128xf32> -> vector<256x128xf32>
    %4 = arith.mulf %3, %1 : vector<256x128xf32>
    %cst_3 = arith.constant dense<0.000000e+00> : vector<256xf32>
    %5 = vector.multi_reduction <add>, %4, %cst_3 [1] : vector<256x128xf32> to vector<256xf32>
    %6 = vector.shape_cast %5 : vector<256xf32> to vector<256x1xf32>
    %cst_4 = arith.constant 1.000000e-24 : f32
    %7 = vector.broadcast %cst_4 : f32 to vector<256x1xf32>
    %8 = arith.maximumf %6, %7 : vector<256x1xf32>
    %9 = math.rsqrt %8 : vector<256x1xf32>
    %cst_5 = arith.constant 14.2857141 : f32
    %10 = vector.broadcast %cst_5 : f32 to vector<256x1xf32>
    %11 = arith.mulf %9, %10 : vector<256x1xf32>
    %12 = vector.broadcast %11 : vector<256x1xf32> to vector<256x128xf32>
    %13 = arith.mulf %3, %12 : vector<256x128xf32>
    %14 = arith.truncf %13 : vector<256x128xf32> to vector<256x128xbf16>
    %c0_6 = arith.constant 0 : index
    %c0_7 = arith.constant 0 : index
    %15 = vector.load %arg3[%c0_6, %c0_7] : memref<256x128xbf16, #tpu.memory_space<vmem>>, vector<256x128xbf16>
    tpu.vector_store %arg3[%c0_6, %c0_7], %14 {strides = array<i32>} : memref<256x128xbf16, #tpu.memory_space<vmem>>, vector<256x128xbf16>,
    %16 = vector.broadcast %9 : vector<256x1xf32> to vector<256x128xf32>
    %17 = arith.mulf %1, %16 : vector<256x128xf32>
    %18 = arith.truncf %17 : vector<256x128xf32> to vector<256x128xbf16>
    %c0_8 = arith.constant 0 : index
    %c0_9 = arith.constant 0 : index
    %19 = vector.load %arg4[%c0_8, %c0_9] : memref<256x128xbf16, #tpu.memory_space<vmem>>, vector<256x128xbf16>
    tpu.vector_store %arg4[%c0_8, %c0_9], %18 {strides = array<i32>} : memref<256x128xbf16, #tpu.memory_space<vmem>>, vector<256x128xbf16>,
    return
  }
  func.func @transform_0(%arg0: i32) -> (i32, i32) {
    %c0_i32 = arith.constant 0 : i32
    %c0_i32_0 = arith.constant 0 : i32
    return %arg0, %c0_i32 : i32, i32
  }
  func.func @transform_1(%arg0: i32) -> (i32, i32) {
    %c0_i32 = arith.constant 0 : i32
    %c0_i32_0 = arith.constant 0 : i32
    %c0_i32_1 = arith.constant 0 : i32
    return %c0_i32, %c0_i32_0 : i32, i32
  }
  func.func @transform_2(%arg0: i32) -> (i32, i32) {
    %c0_i32 = arith.constant 0 : i32
    %c0_i32_0 = arith.constant 0 : i32
    return %arg0, %c0_i32 : i32, i32
  }
  func.func @transform_3(%arg0: i32) -> (i32, i32) {
    %c0_i32 = arith.constant 0 : i32
    %c0_i32_0 = arith.constant 0 : i32
    return %arg0, %c0_i32 : i32, i32
  }
}

module attributes {stable_mosaic.version = 11 : i64} {
  func.func @_fused_loss_kernel(%arg0: i32, %arg1: i32, %arg2: memref<256x128xbf16, #tpu.memory_space<vmem>>, %arg3: memref<256x128xbf16, #tpu.memory_space<vmem>>, %arg4: memref<256x1xi32, #tpu.memory_space<vmem>>, %arg5: memref<1x256xi32, #tpu.memory_space<vmem>>, %arg6: memref<256x1xf32, #tpu.memory_space<vmem>>, %arg7: memref<256x1xf32, #tpu.memory_space<vmem>>, %arg8: memref<256x1xf32, #tpu.memory_space<vmem>>, %arg9: memref<256x256xf32, #tpu.memory_space<vmem>>) attributes {dimension_semantics = [#tpu.dimension_semantics<parallel>, #tpu.dimension_semantics<arbitrary>], iteration_bounds = array<i64: 1, 1>, scalar_prefetch = 0 : i64, scratch_operands = 3 : i64, tpu.core_type = #tpu.core_type<tc>, window_params = [{transform_indices = @transform_0, window_bounds = array<i64: 256, 128>}, {transform_indices = @transform_1, window_bounds = array<i64: 256, 128>}, {transform_indices = @transform_2, window_bounds = array<i64: 256, 1>}, {pipeline_mode = #tpu.pipeline_mode<synchronous>, transform_indices = @transform_3, window_bounds = array<i64: 1, 256>}, {transform_indices = @transform_4, window_bounds = array<i64: 256, 1>}]} {
    %c0_i32 = arith.constant 0 : i32
    %0 = arith.cmpi eq, %arg1, %c0_i32 : i32
    %1 = arith.extui %0 : i1 to i32
    %c0_i32_0 = arith.constant 0 : i32
    %2 = arith.cmpi ne, %1, %c0_i32_0 : i32
    scf.if %2 {
      %cst_22 = arith.constant -1.000000e+30 : f32
      %45 = vector.broadcast %cst_22 : f32 to vector<256x1xf32>
      %c0_23 = arith.constant 0 : index
      %c0_24 = arith.constant 0 : index
      %46 = vector.load %arg7[%c0_23, %c0_24] : memref<256x1xf32, #tpu.memory_space<vmem>>, vector<256x1xf32>
      tpu.vector_store %arg7[%c0_23, %c0_24], %45 {strides = array<i32>} : memref<256x1xf32, #tpu.memory_space<vmem>>, vector<256x1xf32>,
      %cst_25 = arith.constant 0.000000e+00 : f32
      %47 = vector.broadcast %cst_25 : f32 to vector<256x1xf32>
      %c0_26 = arith.constant 0 : index
      %c0_27 = arith.constant 0 : index
      %48 = vector.load %arg8[%c0_26, %c0_27] : memref<256x1xf32, #tpu.memory_space<vmem>>, vector<256x1xf32>
      tpu.vector_store %arg8[%c0_26, %c0_27], %47 {strides = array<i32>} : memref<256x1xf32, #tpu.memory_space<vmem>>, vector<256x1xf32>,
    } else {
    }
    %c0 = arith.constant 0 : index
    %c0_1 = arith.constant 0 : index
    %3 = vector.load %arg2[%c0, %c0_1] : memref<256x128xbf16, #tpu.memory_space<vmem>>, vector<256x128xbf16>
    %c0_2 = arith.constant 0 : index
    %c0_3 = arith.constant 0 : index
    %4 = vector.load %arg3[%c0_2, %c0_3] : memref<256x128xbf16, #tpu.memory_space<vmem>>, vector<256x128xbf16>
    %cst = arith.constant dense<0.000000e+00> : vector<256x256xf32>
    %5 = tpu.matmul %3, %4, %cst {dimension_numbers = #tpu.dot_dimension_numbers<[1], [1], [0], [0], [0, 0, 1, 0], [], []>} : vector<256x128xbf16>, vector<256x128xbf16>, vector<256x256xf32> -> vector<256x256xf32>
    %c256_i32 = arith.constant 256 : i32
    %6 = arith.muli %arg1, %c256_i32 : i32
    %7 = tpu.assume_multiple %6, 256 : i32
    %c0_4 = arith.constant 0 : index
    %8 = arith.index_cast %7 : i32 to index
    %9 = vector.load %arg9[%c0_4, %8] : memref<256x256xf32, #tpu.memory_space<vmem>>, vector<256x256xf32>
    tpu.vector_store %arg9[%c0_4, %8], %5 {strides = array<i32>} : memref<256x256xf32, #tpu.memory_space<vmem>>, vector<256x256xf32>,
    %c0_5 = arith.constant 0 : index
    %c0_6 = arith.constant 0 : index
    %10 = vector.load %arg4[%c0_5, %c0_6] : memref<256x1xi32, #tpu.memory_space<vmem>>, vector<256x1xi32>
    %c0_7 = arith.constant 0 : index
    %11 = arith.index_cast %7 : i32 to index
    %12 = vector.load %arg5[%c0_7, %11] : memref<1x256xi32, #tpu.memory_space<vmem>>, vector<1x256xi32>
    %13 = tpu.iota {dimensions = array<i32: 1>} : vector<256x256xi32>
    %14 = vector.broadcast %7 : i32 to vector<256x256xi32>
    %15 = arith.addi %14, %13 : vector<256x256xi32>
    %16 = vector.broadcast %10 : vector<256x1xi32> to vector<256x256xi32>
    %17 = vector.broadcast %12 : vector<1x256xi32> to vector<256x256xi32>
    %18 = arith.cmpi ne, %16, %17 : vector<256x256xi32>
    %c8_i32 = arith.constant 8 : i32
    %19 = vector.broadcast %c8_i32 : i32 to vector<256x256xi32>
    %20 = arith.cmpi slt, %15, %19 : vector<256x256xi32>
    %21 = arith.andi %18, %20 : vector<256x256xi1>
    %cst_8 = arith.constant -1.000000e+30 : f32
    %22 = vector.broadcast %cst_8 : f32 to vector<256x256xf32>
    %23 = arith.select %21, %5, %22 : vector<256x256xi1>, vector<256x256xf32>
    %c0_9 = arith.constant 0 : index
    %c0_10 = arith.constant 0 : index
    %24 = vector.load %arg7[%c0_9, %c0_10] : memref<256x1xf32, #tpu.memory_space<vmem>>, vector<256x1xf32>
    %cst_11 = arith.constant dense<0xFF800000> : vector<256xf32>
    %25 = vector.multi_reduction <maximumf>, %23, %cst_11 [1] : vector<256x256xf32> to vector<256xf32>
    %26 = vector.shape_cast %25 : vector<256xf32> to vector<256x1xf32>
    %27 = arith.maximumf %24, %26 : vector<256x1xf32>
    %c0_12 = arith.constant 0 : index
    %c0_13 = arith.constant 0 : index
    %28 = vector.load %arg8[%c0_12, %c0_13] : memref<256x1xf32, #tpu.memory_space<vmem>>, vector<256x1xf32>
    %29 = arith.subf %24, %27 : vector<256x1xf32>
    %30 = math.exp %29 : vector<256x1xf32>
    %31 = arith.mulf %28, %30 : vector<256x1xf32>
    %32 = vector.broadcast %27 : vector<256x1xf32> to vector<256x256xf32>
    %33 = arith.subf %23, %32 : vector<256x256xf32>
    %34 = math.exp %33 : vector<256x256xf32>
    %cst_14 = arith.constant 0.000000e+00 : f32
    %35 = vector.broadcast %cst_14 : f32 to vector<256x256xf32>
    %36 = arith.select %21, %34, %35 : vector<256x256xi1>, vector<256x256xf32>
    %cst_15 = arith.constant dense<0.000000e+00> : vector<256xf32>
    %37 = vector.multi_reduction <add>, %36, %cst_15 [1] : vector<256x256xf32> to vector<256xf32>
    %38 = vector.shape_cast %37 : vector<256xf32> to vector<256x1xf32>
    %39 = arith.addf %31, %38 : vector<256x1xf32>
    %c0_16 = arith.constant 0 : index
    %c0_17 = arith.constant 0 : index
    %40 = vector.load %arg8[%c0_16, %c0_17] : memref<256x1xf32, #tpu.memory_space<vmem>>, vector<256x1xf32>
    tpu.vector_store %arg8[%c0_16, %c0_17], %39 {strides = array<i32>} : memref<256x1xf32, #tpu.memory_space<vmem>>, vector<256x1xf32>,
    %c0_18 = arith.constant 0 : index
    %c0_19 = arith.constant 0 : index
    %41 = vector.load %arg7[%c0_18, %c0_19] : memref<256x1xf32, #tpu.memory_space<vmem>>, vector<256x1xf32>
    tpu.vector_store %arg7[%c0_18, %c0_19], %27 {strides = array<i32>} : memref<256x1xf32, #tpu.memory_space<vmem>>, vector<256x1xf32>,
    %c0_i32_20 = arith.constant 0 : i32
    %42 = arith.cmpi eq, %arg1, %c0_i32_20 : i32
    %43 = arith.extui %42 : i1 to i32
    %c0_i32_21 = arith.constant 0 : i32
    %44 = arith.cmpi ne, %43, %c0_i32_21 : i32
    scf.if %44 {
      %c0_22 = arith.constant 0 : index
      %c0_23 = arith.constant 0 : index
      %45 = vector.load %arg8[%c0_22, %c0_23] : memref<256x1xf32, #tpu.memory_space<vmem>>, vector<256x1xf32>
      %cst_24 = arith.constant 0.000000e+00 : f32
      %46 = vector.broadcast %cst_24 : f32 to vector<256x1xf32>
      %47 = arith.cmpf ogt, %45, %46 : vector<256x1xf32>
      %c0_25 = arith.constant 0 : index
      %c0_26 = arith.constant 0 : index
      %48 = vector.load %arg7[%c0_25, %c0_26] : memref<256x1xf32, #tpu.memory_space<vmem>>, vector<256x1xf32>
      %49 = math.log %45 : vector<256x1xf32>
      %50 = arith.addf %48, %49 : vector<256x1xf32>
      %cst_27 = arith.constant 0xFF800000 : f32
      %51 = vector.broadcast %cst_27 : f32 to vector<256x1xf32>
      %52 = arith.select %47, %50, %51 : vector<256x1xi1>, vector<256x1xf32>
      %c0_28 = arith.constant 0 : index
      %c0_29 = arith.constant 0 : index
      %53 = vector.load %arg9[%c0_28, %c0_29] : memref<256x256xf32, #tpu.memory_space<vmem>>, vector<256x256xf32>
      %c256_i32_30 = arith.constant 256 : i32
      %54 = arith.muli %arg0, %c256_i32_30 : i32
      %55 = tpu.iota {dimensions = array<i32: 0>} : vector<256x256xi32>
      %56 = vector.broadcast %54 : i32 to vector<256x256xi32>
      %57 = arith.addi %56, %55 : vector<256x256xi32>
      %58 = tpu.iota {dimensions = array<i32: 1>} : vector<256x256xi32>
      %c0_31 = arith.constant 0 : index
      %c0_32 = arith.constant 0 : index
      %59 = vector.load %arg5[%c0_31, %c0_32] : memref<1x256xi32, #tpu.memory_space<vmem>>, vector<1x256xi32>
      %60 = vector.broadcast %10 : vector<256x1xi32> to vector<256x256xi32>
      %61 = vector.broadcast %59 : vector<1x256xi32> to vector<256x256xi32>
      %62 = arith.cmpi eq, %60, %61 : vector<256x256xi32>
      %63 = arith.cmpi ne, %57, %58 : vector<256x256xi32>
      %64 = arith.andi %62, %63 : vector<256x256xi1>
      %c8_i32_33 = arith.constant 8 : i32
      %65 = vector.broadcast %c8_i32_33 : i32 to vector<256x256xi32>
      %66 = arith.cmpi slt, %57, %65 : vector<256x256xi32>
      %67 = arith.andi %64, %66 : vector<256x256xi1>
      %c8_i32_34 = arith.constant 8 : i32
      %68 = vector.broadcast %c8_i32_34 : i32 to vector<256x256xi32>
      %69 = arith.cmpi slt, %58, %68 : vector<256x256xi32>
      %70 = arith.andi %67, %69 : vector<256x256xi1>
      %71 = vector.broadcast %52 : vector<256x1xf32> to vector<256x256xf32>
      %72 = arith.subf %71, %53 : vector<256x256xf32>
      %cst_35 = arith.constant 0.000000e+00 : f32
      %73 = vector.broadcast %cst_35 : f32 to vector<256x256xf32>
      %74 = arith.maximumf %72, %73 : vector<256x256xf32>
      %75 = math.absf %72 : vector<256x256xf32>
      %cst_36 = arith.constant 0.000000e+00 : f32
      %76 = vector.broadcast %cst_36 : f32 to vector<256x256xf32>
      %77 = arith.subf %76, %75 : vector<256x256xf32>
      %78 = math.exp %77 : vector<256x256xf32>
      %cst_37 = arith.constant 1.000000e+00 : f32
      %79 = vector.broadcast %cst_37 : f32 to vector<256x256xf32>
      %80 = arith.addf %79, %78 : vector<256x256xf32>
      %81 = math.log %80 : vector<256x256xf32>
      %82 = arith.addf %74, %81 : vector<256x256xf32>
      %cst_38 = arith.constant 0.000000e+00 : f32
      %83 = vector.broadcast %cst_38 : f32 to vector<256x256xf32>
      %84 = arith.select %70, %82, %83 : vector<256x256xi1>, vector<256x256xf32>
      %cst_39 = arith.constant dense<0.000000e+00> : vector<256xf32>
      %85 = vector.multi_reduction <add>, %84, %cst_39 [1] : vector<256x256xf32> to vector<256xf32>
      %86 = vector.shape_cast %85 : vector<256xf32> to vector<256x1xf32>
      %c0_40 = arith.constant 0 : index
      %c0_41 = arith.constant 0 : index
      %87 = vector.load %arg6[%c0_40, %c0_41] : memref<256x1xf32, #tpu.memory_space<vmem>>, vector<256x1xf32>
      tpu.vector_store %arg6[%c0_40, %c0_41], %86 {strides = array<i32>} : memref<256x1xf32, #tpu.memory_space<vmem>>, vector<256x1xf32>,
    } else {
    }
    return
  }
  func.func @transform_0(%arg0: i32, %arg1: i32) -> (i32, i32) {
    %c0_i32 = arith.constant 0 : i32
    %c0_i32_0 = arith.constant 0 : i32
    return %arg0, %c0_i32 : i32, i32
  }
  func.func @transform_1(%arg0: i32, %arg1: i32) -> (i32, i32) {
    %c0_i32 = arith.constant 0 : i32
    %c0_i32_0 = arith.constant 0 : i32
    return %arg1, %c0_i32 : i32, i32
  }
  func.func @transform_2(%arg0: i32, %arg1: i32) -> (i32, i32) {
    %c0_i32 = arith.constant 0 : i32
    %c0_i32_0 = arith.constant 0 : i32
    return %arg0, %c0_i32 : i32, i32
  }
  func.func @transform_3(%arg0: i32, %arg1: i32) -> (i32, i32) {
    %c0_i32 = arith.constant 0 : i32
    %c0_i32_0 = arith.constant 0 : i32
    %c0_i32_1 = arith.constant 0 : i32
    return %c0_i32, %c0_i32_0 : i32, i32
  }
  func.func @transform_4(%arg0: i32, %arg1: i32) -> (i32, i32) {
    %c0_i32 = arith.constant 0 : i32
    %c0_i32_0 = arith.constant 0 : i32
    return %arg0, %c0_i32 : i32, i32
  }
}

</mosaic_0001>

<llo_original>
// kernel: supervised_contrastive_loss.3
$region0: #{supervised_contrastive_loss.3}
  #allocation0 [shape = 'u32[]', space=smem, size = 0x4, offset = 0x4, fixed_abs, tag = 'smem constant byte address 0x4 - core index']
  #allocation1 [shape = 'u32[144,128]{1,0:T(1,128)}', space=vmem, size = 0x12000, scoped, tag = 'internal scratch']
  %s0 = inlined_call_operand.vmem [shape: f32[256,128], index: 0, kind: input, shape index: {}]
  %s1 = inlined_call_operand.vmem [shape: bf16[256,128], index: 1, kind: output, shape index: {0}]
  %s2 = inlined_call_operand.vmem [shape: f32[128,128], index: 2, kind: output, shape index: {1}]
  %3 = xla_tuple %s1, %s2
  %s4 = sld [smem:[#allocation0]]
  $region26: #{supervised_contrastive_loss.3} parent=0
    _
  %s6 = ssub.s32 1, %s4
  %s7 = scalar_select 0, %s6, %s4
  // Predicated region
  $region2: #{supervised_contrastive_loss.3} parent=0 // pred_check
    _
  $region3: #{supervised_contrastive_loss.3} parent=0 // pred_check_branch
    %9 = sbr.rel (0) target = $region5
  $region4: #{supervised_contrastive_loss.3} parent=0 // pred_region
    _
  $region5: #{supervised_contrastive_loss.3} parent=0 // pred_fallthru
    _
  %v11 = vld [vmem:[%s0] sm:$0xff]
  %v12 = vld [vmem:[%s0 + $0x8] sm:$0xff]
  %v13 = vld [vmem:[%s0 + $0x10] sm:$0xff]
  %v14 = vld [vmem:[%s0 + $0x18] sm:$0xff]
  %v15 = vld [vmem:[%s0 + $0x20] sm:$0xff]
  %v16 = vld [vmem:[%s0 + $0x28] sm:$0xff]
  %v17 = vld [vmem:[%s0 + $0x30] sm:$0xff]
  %v18 = vld [vmem:[%s0 + $0x38] sm:$0xff]
  %v19 = vld [vmem:[%s0 + $0x40] sm:$0xff]
  %v20 = vld [vmem:[%s0 + $0x48] sm:$0xff]
  %v21 = vld [vmem:[%s0 + $0x50] sm:$0xff]
  %v22 = vld [vmem:[%s0 + $0x58] sm:$0xff]
  %v23 = vld [vmem:[%s0 + $0x60] sm:$0xff]
  %v24 = vld [vmem:[%s0 + $0x68] sm:$0xff]
  %v25 = vld [vmem:[%s0 + $0x70] sm:$0xff]
  %v26 = vld [vmem:[%s0 + $0x78] sm:$0xff]
  %v27 = vld [vmem:[%s0 + $0x80] sm:$0xff]
  %v28 = vld [vmem:[%s0 + $0x88] sm:$0xff]
  %v29 = vld [vmem:[%s0 + $0x90] sm:$0xff]
  %v30 = vld [vmem:[%s0 + $0x98] sm:$0xff]
  %v31 = vld [vmem:[%s0 + $0xa0] sm:$0xff]
  %v32 = vld [vmem:[%s0 + $0xa8] sm:$0xff]
  %v33 = vld [vmem:[%s0 + $0xb0] sm:$0xff]
  %v34 = vld [vmem:[%s0 + $0xb8] sm:$0xff]
  %v35 = vld [vmem:[%s0 + $0xc0] sm:$0xff]
  %v36 = vld [vmem:[%s0 + $0xc8] sm:$0xff]
  %v37 = vld [vmem:[%s0 + $0xd0] sm:$0xff]
  %v38 = vld [vmem:[%s0 + $0xd8] sm:$0xff]
  %v39 = vld [vmem:[%s0 + $0xe0] sm:$0xff]
  %v40 = vld [vmem:[%s0 + $0xe8] sm:$0xff]
  %v41 = vld [vmem:[%s0 + $0xf0] sm:$0xff]
  %v42 = vld [vmem:[%s0 + $0xf8] sm:$0xff]
  %v43 = vmul.f32 %v11, %v11
  %v44 = vmul.f32 %v12, %v12
  %v45 = vmul.f32 %v13, %v13
  %v46 = vmul.f32 %v14, %v14
  %v47 = vmul.f32 %v15, %v15
  %v48 = vmul.f32 %v16, %v16
  %v49 = vmul.f32 %v17, %v17
  %v50 = vmul.f32 %v18, %v18
  %v51 = vmul.f32 %v19, %v19
  %v52 = vmul.f32 %v20, %v20
  %v53 = vmul.f32 %v21, %v21
  %v54 = vmul.f32 %v22, %v22
  %v55 = vmul.f32 %v23, %v23
  %v56 = vmul.f32 %v24, %v24
  %v57 = vmul.f32 %v25, %v25
  %v58 = vmul.f32 %v26, %v26
  %v59 = vmul.f32 %v27, %v27
  %v60 = vmul.f32 %v28, %v28
  %v61 = vmul.f32 %v29, %v29
  %v62 = vmul.f32 %v30, %v30
  %v63 = vmul.f32 %v31, %v31
  %v64 = vmul.f32 %v32, %v32
  %v65 = vmul.f32 %v33, %v33
  %v66 = vmul.f32 %v34, %v34
  %v67 = vmul.f32 %v35, %v35
  %v68 = vmul.f32 %v36, %v36
  %v69 = vmul.f32 %v37, %v37
  %v70 = vmul.f32 %v38, %v38
  %v71 = vmul.f32 %v39, %v39
  %v72 = vmul.f32 %v40, %v40
  %v73 = vmul.f32 %v41, %v41
  %v74 = vmul.f32 %v42, %v42
  %75 = vadd.xlane.f32.xlu0 %v43
  %v76 = vpop.xlane.xlu0 %75
  %77 = vadd.xlane.f32.xlu0 %v44
  %v78 = vpop.xlane.xlu0 %77
  %79 = vadd.xlane.f32.xlu0 %v45
  %v80 = vpop.xlane.xlu0 %79
  %81 = vadd.xlane.f32.xlu0 %v46
  %v82 = vpop.xlane.xlu0 %81
  %83 = vadd.xlane.f32.xlu0 %v47
  %v84 = vpop.xlane.xlu0 %83
  %85 = vadd.xlane.f32.xlu0 %v48
  %v86 = vpop.xlane.xlu0 %85
  %87 = vadd.xlane.f32.xlu0 %v49
  %v88 = vpop.xlane.xlu0 %87
  %89 = vadd.xlane.f32.xlu0 %v50
  %v90 = vpop.xlane.xlu0 %89
  %91 = vadd.xlane.f32.xlu0 %v51
  %v92 = vpop.xlane.xlu0 %91
  %93 = vadd.xlane.f32.xlu0 %v52
  %v94 = vpop.xlane.xlu0 %93
  %95 = vadd.xlane.f32.xlu0 %v53
  %v96 = vpop.xlane.xlu0 %95
  %97 = vadd.xlane.f32.xlu0 %v54
  %v98 = vpop.xlane.xlu0 %97
  %99 = vadd.xlane.f32.xlu0 %v55
  %v100 = vpop.xlane.xlu0 %99
  %101 = vadd.xlane.f32.xlu0 %v56
  %v102 = vpop.xlane.xlu0 %101
  %103 = vadd.xlane.f32.xlu0 %v57
  %v104 = vpop.xlane.xlu0 %103
  %105 = vadd.xlane.f32.xlu0 %v58
  %v106 = vpop.xlane.xlu0 %105
  %107 = vadd.xlane.f32.xlu0 %v59
  %v108 = vpop.xlane.xlu0 %107
  %109 = vadd.xlane.f32.xlu0 %v60
  %v110 = vpop.xlane.xlu0 %109
  %111 = vadd.xlane.f32.xlu0 %v61
  %v112 = vpop.xlane.xlu0 %111
  %113 = vadd.xlane.f32.xlu0 %v62
  %v114 = vpop.xlane.xlu0 %113
  %115 = vadd.xlane.f32.xlu0 %v63
  %v116 = vpop.xlane.xlu0 %115
  %117 = vadd.xlane.f32.xlu0 %v64
  %v118 = vpop.xlane.xlu0 %117
  %119 = vadd.xlane.f32.xlu0 %v65
  %v120 = vpop.xlane.xlu0 %119
  %121 = vadd.xlane.f32.xlu0 %v66
  %v122 = vpop.xlane.xlu0 %121
  %123 = vadd.xlane.f32.xlu0 %v67
  %v124 = vpop.xlane.xlu0 %123
  %125 = vadd.xlane.f32.xlu0 %v68
  %v126 = vpop.xlane.xlu0 %125
  %127 = vadd.xlane.f32.xlu0 %v69
  %v128 = vpop.xlane.xlu0 %127
  %129 = vadd.xlane.f32.xlu0 %v70
  %v130 = vpop.xlane.xlu0 %129
  %131 = vadd.xlane.f32.xlu0 %v71
  %v132 = vpop.xlane.xlu0 %131
  %133 = vadd.xlane.f32.xlu0 %v72
  %v134 = vpop.xlane.xlu0 %133
  %135 = vadd.xlane.f32.xlu0 %v73
  %v136 = vpop.xlane.xlu0 %135
  %137 = vadd.xlane.f32.xlu0 %v74
  %v138 = vpop.xlane.xlu0 %137
  %v139 = vmax.f32 %v76, 1e-24
  %v140 = vmax.f32 %v78, 1e-24
  %v141 = vmax.f32 %v80, 1e-24
  %v142 = vmax.f32 %v82, 1e-24
  %v143 = vmax.f32 %v84, 1e-24
  %v144 = vmax.f32 %v86, 1e-24
  %v145 = vmax.f32 %v88, 1e-24
  %v146 = vmax.f32 %v90, 1e-24
  %v147 = vmax.f32 %v92, 1e-24
  %v148 = vmax.f32 %v94, 1e-24
  %v149 = vmax.f32 %v96, 1e-24
  %v150 = vmax.f32 %v98, 1e-24
  %v151 = vmax.f32 %v100, 1e-24
  %v152 = vmax.f32 %v102, 1e-24
  %v153 = vmax.f32 %v104, 1e-24
  %v154 = vmax.f32 %v106, 1e-24
  %v155 = vmax.f32 %v108, 1e-24
  %v156 = vmax.f32 %v110, 1e-24
  %v157 = vmax.f32 %v112, 1e-24
  %v158 = vmax.f32 %v114, 1e-24
  %v159 = vmax.f32 %v116, 1e-24
  %v160 = vmax.f32 %v118, 1e-24
  %v161 = vmax.f32 %v120, 1e-24
  %v162 = vmax.f32 %v122, 1e-24
  %v163 = vmax.f32 %v124, 1e-24
  %v164 = vmax.f32 %v126, 1e-24
  %v165 = vmax.f32 %v128, 1e-24
  %v166 = vmax.f32 %v130, 1e-24
  %v167 = vmax.f32 %v132, 1e-24
  %v168 = vmax.f32 %v134, 1e-24
  %v169 = vmax.f32 %v136, 1e-24
  %v170 = vmax.f32 %v138, 1e-24
  %v171 = vrsqrt.pop %v139
  %v172 = vrsqrt.pop %v140
  %v173 = vrsqrt.pop %v141
  %v174 = vrsqrt.pop %v142
  %v175 = vrsqrt.pop %v143
  %v176 = vrsqrt.pop %v144
  %v177 = vrsqrt.pop %v145
  %v178 = vrsqrt.pop %v146
  %v179 = vrsqrt.pop %v147
  %v180 = vrsqrt.pop %v148
  %v181 = vrsqrt.pop %v149
  %v182 = vrsqrt.pop %v150
  %v183 = vrsqrt.pop %v151
  %v184 = vrsqrt.pop %v152
  %v185 = vrsqrt.pop %v153
  %v186 = vrsqrt.pop %v154
  %v187 = vrsqrt.pop %v155
  %v188 = vrsqrt.pop %v156
  %v189 = vrsqrt.pop %v157
  %v190 = vrsqrt.pop %v158
  %v191 = vrsqrt.pop %v159
  %v192 = vrsqrt.pop %v160
  %v193 = vrsqrt.pop %v161
  %v194 = vrsqrt.pop %v162
  %v195 = vrsqrt.pop %v163
  %v196 = vrsqrt.pop %v164
  %v197 = vrsqrt.pop %v165
  %v198 = vrsqrt.pop %v166
  %v199 = vrsqrt.pop %v167
  %v200 = vrsqrt.pop %v168
  %v201 = vrsqrt.pop %v169
  %v202 = vrsqrt.pop %v170
  %v203 = vmul.f32 %v11, %v171
  %v204 = vmul.f32 %v12, %v172
  %v205 = vmul.f32 %v13, %v173
  %v206 = vmul.f32 %v14, %v174
  %v207 = vmul.f32 %v15, %v175
  %v208 = vmul.f32 %v16, %v176
  %v209 = vmul.f32 %v17, %v177
  %v210 = vmul.f32 %v18, %v178
  %v211 = vmul.f32 %v19, %v179
  %v212 = vmul.f32 %v20, %v180
  %v213 = vmul.f32 %v21, %v181
  %v214 = vmul.f32 %v22, %v182
  %v215 = vmul.f32 %v23, %v183
  %v216 = vmul.f32 %v24, %v184
  %v217 = vmul.f32 %v25, %v185
  %v218 = vmul.f32 %v26, %v186
  %v219 = vmul.f32 %v27, %v187
  %v220 = vmul.f32 %v28, %v188
  %v221 = vmul.f32 %v29, %v189
  %v222 = vmul.f32 %v30, %v190
  %v223 = vmul.f32 %v31, %v191
  %v224 = vmul.f32 %v32, %v192
  %v225 = vmul.f32 %v33, %v193
  %v226 = vmul.f32 %v34, %v194
  %v227 = vmul.f32 %v35, %v195
  %v228 = vmul.f32 %v36, %v196
  %v229 = vmul.f32 %v37, %v197
  %v230 = vmul.f32 %v38, %v198
  %v231 = vmul.f32 %v39, %v199
  %v232 = vmul.f32 %v40, %v200
  %v233 = vmul.f32 %v41, %v201
  %v234 = vmul.f32 %v42, %v202
  %v235 = vpack.c.bf16 %v204, %v203
  %v236 = vpack.c.bf16 %v206, %v205
  %v237 = vpack.c.bf16 %v208, %v207
  %v238 = vpack.c.bf16 %v210, %v209
  %v239 = vpack.c.bf16 %v212, %v211
  %v240 = vpack.c.bf16 %v214, %v213
  %v241 = vpack.c.bf16 %v216, %v215
  %v242 = vpack.c.bf16 %v218, %v217
  %v243 = vpack.c.bf16 %v220, %v219
  %v244 = vpack.c.bf16 %v222, %v221
  %v245 = vpack.c.bf16 %v224, %v223
  %v246 = vpack.c.bf16 %v226, %v225
  %v247 = vpack.c.bf16 %v228, %v227
  %v248 = vpack.c.bf16 %v230, %v229
  %v249 = vpack.c.bf16 %v232, %v231
  %v250 = vpack.c.bf16 %v234, %v233
  %v267 = vunpack.c.l.b16 %v235
  %v268 = vunpack.c.h.b16 %v235
  %v269 = vunpack.c.l.b16 %v236
  %v270 = vunpack.c.h.b16 %v236
  %v271 = vunpack.c.l.b16 %v237
  %v272 = vunpack.c.h.b16 %v237
  %v273 = vunpack.c.l.b16 %v238
  %v274 = vunpack.c.h.b16 %v238
  %v275 = vunpack.c.l.b16 %v239
  %v276 = vunpack.c.h.b16 %v239
  %v277 = vunpack.c.l.b16 %v240
  %v278 = vunpack.c.h.b16 %v240
  %v279 = vunpack.c.l.b16 %v241
  %v280 = vunpack.c.h.b16 %v241
  %v281 = vunpack.c.l.b16 %v242
  %v282 = vunpack.c.h.b16 %v242
  %v283 = vunpack.c.l.b16 %v243
  %v284 = vunpack.c.h.b16 %v243
  %v285 = vunpack.c.l.b16 %v244
  %v286 = vunpack.c.h.b16 %v244
  %v287 = vunpack.c.l.b16 %v245
  %v288 = vunpack.c.h.b16 %v245
  %v289 = vunpack.c.l.b16 %v246
  %v290 = vunpack.c.h.b16 %v246
  %v291 = vunpack.c.l.b16 %v247
  %v292 = vunpack.c.h.b16 %v247
  %v293 = vunpack.c.l.b16 %v248
  %v294 = vunpack.c.h.b16 %v248
  %v295 = vunpack.c.l.b16 %v249
  %v296 = vunpack.c.h.b16 %v249
  %v297 = vunpack.c.l.b16 %v250
  %v298 = vunpack.c.h.b16 %v250
  %v299 = vpack.c.b16 %v267, %v267
  %v300 = vpack.c.b16 %v268, %v268
  %v301 = vpack.c.b16 %v269, %v269
  %v302 = vpack.c.b16 %v270, %v270
  %v303 = vpack.c.b16 %v271, %v271
  %v304 = vpack.c.b16 %v272, %v272
  %v305 = vpack.c.b16 %v273, %v273
  %v306 = vpack.c.b16 %v274, %v274
  %v307 = vpack.c.b16 %v275, %v275
  %v308 = vpack.c.b16 %v276, %v276
  %v309 = vpack.c.b16 %v277, %v277
  %v310 = vpack.c.b16 %v278, %v278
  %v311 = vpack.c.b16 %v279, %v279
  %v312 = vpack.c.b16 %v280, %v280
  %v313 = vpack.c.b16 %v281, %v281
  %v314 = vpack.c.b16 %v282, %v282
  %v315 = vpack.c.b16 %v283, %v283
  %v316 = vpack.c.b16 %v284, %v284
  %v317 = vpack.c.b16 %v285, %v285
  %v318 = vpack.c.b16 %v286, %v286
  %v319 = vpack.c.b16 %v287, %v287
  %v320 = vpack.c.b16 %v288, %v288
  %v321 = vpack.c.b16 %v289, %v289
  %v322 = vpack.c.b16 %v290, %v290
  %v323 = vpack.c.b16 %v291, %v291
  %v324 = vpack.c.b16 %v292, %v292
  %v325 = vpack.c.b16 %v293, %v293
  %v326 = vpack.c.b16 %v294, %v294
  %v327 = vpack.c.b16 %v295, %v295
  %v328 = vpack.c.b16 %v296, %v296
  %v329 = vpack.c.b16 %v297, %v297
  %v330 = vpack.c.b16 %v298, %v298
  %363 = vst [vmem:[%s1] sm:$0xf] %v299
  %364 = vst [vmem:[%s1 + $0x4] sm:$0xf] %v300
  %365 = vst [vmem:[%s1 + $0x8] sm:$0xf] %v301
  %366 = vst [vmem:[%s1 + $0xc] sm:$0xf] %v302
  %367 = vst [vmem:[%s1 + $0x10] sm:$0xf] %v303
  %368 = vst [vmem:[%s1 + $0x14] sm:$0xf] %v304
  %369 = vst [vmem:[%s1 + $0x18] sm:$0xf] %v305
  %370 = vst [vmem:[%s1 + $0x1c] sm:$0xf] %v306
  %371 = vst [vmem:[%s1 + $0x20] sm:$0xf] %v307
  %372 = vst [vmem:[%s1 + $0x24] sm:$0xf] %v308
  %373 = vst [vmem:[%s1 + $0x28] sm:$0xf] %v309
  %374 = vst [vmem:[%s1 + $0x2c] sm:$0xf] %v310
  %375 = vst [vmem:[%s1 + $0x30] sm:$0xf] %v311
  %376 = vst [vmem:[%s1 + $0x34] sm:$0xf] %v312
  %377 = vst [vmem:[%s1 + $0x38] sm:$0xf] %v313
  %378 = vst [vmem:[%s1 + $0x3c] sm:$0xf] %v314
  %379 = vst [vmem:[%s1 + $0x40] sm:$0xf] %v315
  %380 = vst [vmem:[%s1 + $0x44] sm:$0xf] %v316
  %381 = vst [vmem:[%s1 + $0x48] sm:$0xf] %v317
  %382 = vst [vmem:[%s1 + $0x4c] sm:$0xf] %v318
  %383 = vst [vmem:[%s1 + $0x50] sm:$0xf] %v319
  %384 = vst [vmem:[%s1 + $0x54] sm:$0xf] %v320
  %385 = vst [vmem:[%s1 + $0x58] sm:$0xf] %v321
  %386 = vst [vmem:[%s1 + $0x5c] sm:$0xf] %v322
  %387 = vst [vmem:[%s1 + $0x60] sm:$0xf] %v323
  %388 = vst [vmem:[%s1 + $0x64] sm:$0xf] %v324
  %389 = vst [vmem:[%s1 + $0x68] sm:$0xf] %v325
  %390 = vst [vmem:[%s1 + $0x6c] sm:$0xf] %v326
  %391 = vst [vmem:[%s1 + $0x70] sm:$0xf] %v327
  %392 = vst [vmem:[%s1 + $0x74] sm:$0xf] %v328
  %393 = vst [vmem:[%s1 + $0x78] sm:$0xf] %v329
  %394 = vst [vmem:[%s1 + $0x7c] sm:$0xf] %v330
  %p395 = scmp.eq.s32.totalorder 0, 0
  // Predicated region
  $region6: #{supervised_contrastive_loss.3} parent=0 // pred_check
    %p396 = pneg %p395
  $region7: #{supervised_contrastive_loss.3} parent=0 // pred_check_branch
    %398 = sbr.rel (%p396) target = $region9
  $region8: #{supervised_contrastive_loss.3} parent=0 // pred_region
    %399 = vst [vmem:[%s2] sm:$0xff] 0.0
    %400 = vst [vmem:[%s2 + $0x8] sm:$0xff] 0.0
    %401 = vst [vmem:[%s2 + $0x10] sm:$0xff] 0.0
    %402 = vst [vmem:[%s2 + $0x18] sm:$0xff] 0.0
    %403 = vst [vmem:[%s2 + $0x20] sm:$0xff] 0.0
    %404 = vst [vmem:[%s2 + $0x28] sm:$0xff] 0.0
    %405 = vst [vmem:[%s2 + $0x30] sm:$0xff] 0.0
    %406 = vst [vmem:[%s2 + $0x38] sm:$0xff] 0.0
    %407 = vst [vmem:[%s2 + $0x40] sm:$0xff] 0.0
    %408 = vst [vmem:[%s2 + $0x48] sm:$0xff] 0.0
    %409 = vst [vmem:[%s2 + $0x50] sm:$0xff] 0.0
    %410 = vst [vmem:[%s2 + $0x58] sm:$0xff] 0.0
    %411 = vst [vmem:[%s2 + $0x60] sm:$0xff] 0.0
    %412 = vst [vmem:[%s2 + $0x68] sm:$0xff] 0.0
    %413 = vst [vmem:[%s2 + $0x70] sm:$0xff] 0.0
    %414 = vst [vmem:[%s2 + $0x78] sm:$0xff] 0.0
  $region9: #{supervised_contrastive_loss.3} parent=0 // pred_fallthru
    _
  %v415 = vld [vmem:[%s2] sm:$0xff]
  %v416 = vld [vmem:[%s2 + $0x8] sm:$0xff]
  %v417 = vld [vmem:[%s2 + $0x10] sm:$0xff]
  %v418 = vld [vmem:[%s2 + $0x18] sm:$0xff]
  %v419 = vld [vmem:[%s2 + $0x20] sm:$0xff]
  %v420 = vld [vmem:[%s2 + $0x28] sm:$0xff]
  %v421 = vld [vmem:[%s2 + $0x30] sm:$0xff]
  %v422 = vld [vmem:[%s2 + $0x38] sm:$0xff]
  %v423 = vld [vmem:[%s2 + $0x40] sm:$0xff]
  %v424 = vld [vmem:[%s2 + $0x48] sm:$0xff]
  %v425 = vld [vmem:[%s2 + $0x50] sm:$0xff]
  %v426 = vld [vmem:[%s2 + $0x58] sm:$0xff]
  %v427 = vld [vmem:[%s2 + $0x60] sm:$0xff]
  %v428 = vld [vmem:[%s2 + $0x68] sm:$0xff]
  %v429 = vld [vmem:[%s2 + $0x70] sm:$0xff]
  %v430 = vld [vmem:[%s2 + $0x78] sm:$0xff]
  %431 = vxpose.xlu0.c.b16.start [1/8] %v235, 128
  %432 = vxpose.xlu0.c.b16.cont [2/8] %v236, 128
  %433 = vxpose.xlu0.c.b16.cont [3/8] %v237, 128
  %434 = vxpose.xlu0.c.b16.cont [4/8] %v238, 128
  %435 = vxpose.xlu0.c.b16.cont [5/8] %v239, 128
  %436 = vxpose.xlu0.c.b16.cont [6/8] %v240, 128
  %437 = vxpose.xlu0.c.b16.cont [7/8] %v241, 128
  %438 = vxpose.xlu0.c.b16.end [8/8] %v242, 128
  %v439 = vpop.trf.xlu0
  %v440 = vpop.trf.xlu0
  %v441 = vpop.trf.xlu0
  %v442 = vpop.trf.xlu0
  %v443 = vpop.trf.xlu0
  %v444 = vpop.trf.xlu0
  %v445 = vpop.trf.xlu0
  %v446 = vpop.trf.xlu0
  %447 = vxpose.xlu0.c.b16.start [1/8] %v243, 128
  %448 = vxpose.xlu0.c.b16.cont [2/8] %v244, 128
  %449 = vxpose.xlu0.c.b16.cont [3/8] %v245, 128
  %450 = vxpose.xlu0.c.b16.cont [4/8] %v246, 128
  %451 = vxpose.xlu0.c.b16.cont [5/8] %v247, 128
  %452 = vxpose.xlu0.c.b16.cont [6/8] %v248, 128
  %453 = vxpose.xlu0.c.b16.cont [7/8] %v249, 128
  %454 = vxpose.xlu0.c.b16.end [8/8] %v250, 128
  %v455 = vpop.trf.xlu0
  %v456 = vpop.trf.xlu0
  %v457 = vpop.trf.xlu0
  %v458 = vpop.trf.xlu0
  %v459 = vpop.trf.xlu0
  %v460 = vpop.trf.xlu0
  %v461 = vpop.trf.xlu0
  %v462 = vpop.trf.xlu0
  %463 = vmatprep.subr.bf16.mxu0 0
  %464 = vmatpush1.bf16.msra.mxu0 %v242
  %465 = vmatprep.subr.bf16.mxu0 0
  %466 = vmatpush1.bf16.msra.mxu0 %v241
  %467 = vmatprep.subr.bf16.mxu0 0
  %468 = vmatpush1.bf16.msra.mxu0 %v240
  %469 = vmatprep.subr.bf16.mxu0 0
  %470 = vmatpush1.bf16.msra.mxu0 %v239
  %471 = vmatprep.subr.bf16.mxu0 0
  %472 = vmatpush1.bf16.msra.mxu0 %v238
  %473 = vmatprep.subr.bf16.mxu0 0
  %474 = vmatpush1.bf16.msra.mxu0 %v237
  %475 = vmatprep.subr.bf16.mxu0 0
  %476 = vmatpush1.bf16.msra.mxu0 %v236
  %477 = vmatprep.subr.bf16.mxu0 0
  %478 = vmatpush1.bf16.msra.mxu0 %v235
  %479 = vmatprep.subr.bf16.mxu0 0
  %480 = vmatpush2.bf16.msra.mxu0 %v250
  %481 = vmatprep.subr.bf16.mxu0 0
  %482 = vmatpush2.bf16.msra.mxu0 %v249
  %483 = vmatprep.subr.bf16.mxu0 0
  %484 = vmatpush2.bf16.msra.mxu0 %v248
  %485 = vmatprep.subr.bf16.mxu0 0
  %486 = vmatpush2.bf16.msra.mxu0 %v247
  %487 = vmatprep.subr.bf16.mxu0 0
  %488 = vmatpush2.bf16.msra.mxu0 %v246
  %489 = vmatprep.subr.bf16.mxu0 0
  %490 = vmatpush2.bf16.msra.mxu0 %v245
  %491 = vmatprep.subr.bf16.mxu0 0
  %492 = vmatpush2.bf16.msra.mxu0 %v244
  %493 = vmatprep.subr.bf16.mxu0 0
  %494 = vmatpush2.bf16.msra.mxu0 %v243
  %495 = vmatprep.mubr.bf16.mxu0 %v455
  %496 = vmatmul.mubr.bf16.gmra.mxu0 %v439
  %v497 = vpop.f32.mrf.mxu0
  %v498 = vadd.f32 0.0, %v497
  %v499 = vpop.f32.mrf.mxu0
  %v500 = vpop.f32.mrf.mxu0
  %v501 = vadd.f32 0.0, %v500
  %v502 = vpop.f32.mrf.mxu0
  %503 = vmatprep.mubr.bf16.mxu0 %v456
  %504 = vmatmul.mubr.bf16.gmra.mxu0 %v440
  %v505 = vpop.f32.mrf.mxu0
  %v506 = vadd.f32 0.0, %v505
  %v507 = vpop.f32.mrf.mxu0
  %v508 = vpop.f32.mrf.mxu0
  %v509 = vadd.f32 0.0, %v508
  %v510 = vpop.f32.mrf.mxu0
  %511 = vmatprep.mubr.bf16.mxu0 %v457
  %512 = vmatmul.mubr.bf16.gmra.mxu0 %v441
  %v513 = vpop.f32.mrf.mxu0
  %v514 = vadd.f32 0.0, %v513
  %v515 = vpop.f32.mrf.mxu0
  %v516 = vpop.f32.mrf.mxu0
  %v517 = vadd.f32 0.0, %v516
  %v518 = vpop.f32.mrf.mxu0
  %519 = vmatprep.mubr.bf16.mxu0 %v458
  %520 = vmatmul.mubr.bf16.gmra.mxu0 %v442
  %v521 = vpop.f32.mrf.mxu0
  %v522 = vadd.f32 0.0, %v521
  %v523 = vpop.f32.mrf.mxu0
  %v524 = vpop.f32.mrf.mxu0
  %v525 = vadd.f32 0.0, %v524
  %v526 = vpop.f32.mrf.mxu0
  %527 = vmatprep.mubr.bf16.mxu0 %v459
  %528 = vmatmul.mubr.bf16.gmra.mxu0 %v443
  %v529 = vpop.f32.mrf.mxu0
  %v530 = vadd.f32 0.0, %v529
  %v531 = vpop.f32.mrf.mxu0
  %v532 = vpop.f32.mrf.mxu0
  %v533 = vadd.f32 0.0, %v532
  %v534 = vpop.f32.mrf.mxu0
  %535 = vmatprep.mubr.bf16.mxu0 %v460
  %536 = vmatmul.mubr.bf16.gmra.mxu0 %v444
  %v537 = vpop.f32.mrf.mxu0
  %v538 = vadd.f32 0.0, %v537
  %v539 = vpop.f32.mrf.mxu0
  %v540 = vpop.f32.mrf.mxu0
  %v541 = vadd.f32 0.0, %v540
  %v542 = vpop.f32.mrf.mxu0
  %543 = vmatprep.mubr.bf16.mxu0 %v461
  %544 = vmatmul.mubr.bf16.gmra.mxu0 %v445
  %v545 = vpop.f32.mrf.mxu0
  %v546 = vadd.f32 0.0, %v545
  %v547 = vpop.f32.mrf.mxu0
  %v548 = vpop.f32.mrf.mxu0
  %v549 = vadd.f32 0.0, %v548
  %v550 = vpop.f32.mrf.mxu0
  %551 = vmatprep.mubr.bf16.mxu0 %v462
  %552 = vmatmul.mubr.bf16.gmra.mxu0 %v446
  %v553 = vpop.f32.mrf.mxu0
  %v554 = vadd.f32 0.0, %v553
  %v555 = vpop.f32.mrf.mxu0
  %v556 = vpop.f32.mrf.mxu0
  %v557 = vadd.f32 0.0, %v556
  %v558 = vpop.f32.mrf.mxu0
  %559 = vdwg.mxu0
  %v560 = vadd.f32 %v415, %v498
  %v561 = vadd.f32 %v416, %v501
  %v562 = vadd.f32 %v417, %v506
  %v563 = vadd.f32 %v418, %v509
  %v564 = vadd.f32 %v419, %v514
  %v565 = vadd.f32 %v420, %v517
  %v566 = vadd.f32 %v421, %v522
  %v567 = vadd.f32 %v422, %v525
  %v568 = vadd.f32 %v423, %v530
  %v569 = vadd.f32 %v424, %v533
  %v570 = vadd.f32 %v425, %v538
  %v571 = vadd.f32 %v426, %v541
  %v572 = vadd.f32 %v427, %v546
  %v573 = vadd.f32 %v428, %v549
  %v574 = vadd.f32 %v429, %v554
  %v575 = vadd.f32 %v430, %v557
  %576 = vst [vmem:[%s2] sm:$0xff] %v560
  %577 = vst [vmem:[%s2 + $0x8] sm:$0xff] %v561
  %578 = vst [vmem:[%s2 + $0x10] sm:$0xff] %v562
  %579 = vst [vmem:[%s2 + $0x18] sm:$0xff] %v563
  %580 = vst [vmem:[%s2 + $0x20] sm:$0xff] %v564
  %581 = vst [vmem:[%s2 + $0x28] sm:$0xff] %v565
  %582 = vst [vmem:[%s2 + $0x30] sm:$0xff] %v566
  %583 = vst [vmem:[%s2 + $0x38] sm:$0xff] %v567
  %584 = vst [vmem:[%s2 + $0x40] sm:$0xff] %v568
  %585 = vst [vmem:[%s2 + $0x48] sm:$0xff] %v569
  %586 = vst [vmem:[%s2 + $0x50] sm:$0xff] %v570
  %587 = vst [vmem:[%s2 + $0x58] sm:$0xff] %v571
  %588 = vst [vmem:[%s2 + $0x60] sm:$0xff] %v572
  %589 = vst [vmem:[%s2 + $0x68] sm:$0xff] %v573
  %590 = vst [vmem:[%s2 + $0x70] sm:$0xff] %v574
  %591 = vst [vmem:[%s2 + $0x78] sm:$0xff] %v575
  // Predicated region
  $region10: #{supervised_contrastive_loss.3} parent=0 // pred_check
    _
  $region11: #{supervised_contrastive_loss.3} parent=0 // pred_check_branch
    %593 = sbr.rel (0) target = $region13
  $region12: #{supervised_contrastive_loss.3} parent=0 // pred_region
    _
  $region13: #{supervised_contrastive_loss.3} parent=0 // pred_fallthru
    _
  // Predicated region
  $region14: #{supervised_contrastive_loss.3} parent=0 // pred_check
    _
  $region15: #{supervised_contrastive_loss.3} parent=0 // pred_check_branch
    %595 = sbr.rel (0) target = $region17
  $region16: #{supervised_contrastive_loss.3} parent=0 // pred_region
    _
  $region17: #{supervised_contrastive_loss.3} parent=0 // pred_fallthru
    _
  // Predicated region
  $region18: #{supervised_contrastive_loss.3} parent=0 // pred_check
    _
  $region19: #{supervised_contrastive_loss.3} parent=0 // pred_check_branch
    %597 = sbr.rel (0) target = $region21
  $region20: #{supervised_contrastive_loss.3} parent=0 // pred_region
    _
  $region21: #{supervised_contrastive_loss.3} parent=0 // pred_fallthru
    _
  // Predicated region
  $region22: #{supervised_contrastive_loss.3} parent=0 // pred_check
    _
  $region23: #{supervised_contrastive_loss.3} parent=0 // pred_check_branch
    %599 = sbr.rel (0) target = $region25
  $region24: #{supervised_contrastive_loss.3} parent=0 // pred_region
    _
  $region25: #{supervised_contrastive_loss.3} parent=0 // pred_fallthru
    _

// kernel: supervised_contrastive_loss.4
$region0: #{supervised_contrastive_loss.4}
  #allocation0 [shape = 'u32[]', space=smem, size = 0x4, offset = 0x4, fixed_abs, tag = 'smem constant byte address 0x4 - core index']
  #allocation1 [shape = 'u32[144,128]{1,0:T(1,128)}', space=vmem, size = 0x12000, scoped, tag = 'internal scratch']
  %s0 = inlined_call_operand.vmem [shape: bf16[256,128], index: 0, kind: input, shape index: {}]
  %s1 = inlined_call_operand.vmem [shape: f32[128,128], index: 1, kind: input, shape index: {}]
  %s2 = inlined_call_operand.vmem [shape: bf16[256,128], index: 2, kind: output, shape index: {0}]
  %s3 = inlined_call_operand.vmem [shape: bf16[256,128], index: 3, kind: output, shape index: {1}]
  %4 = xla_tuple %s2, %s3
  %s5 = sld [smem:[#allocation0]]
  $region26: #{supervised_contrastive_loss.4} parent=0
    _
  %s7 = ssub.s32 1, %s5
  %s8 = scalar_select 0, %s7, %s5
  // Predicated region
  $region2: #{supervised_contrastive_loss.4} parent=0 // pred_check
    _
  $region3: #{supervised_contrastive_loss.4} parent=0 // pred_check_branch
    %10 = sbr.rel (0) target = $region5
  $region4: #{supervised_contrastive_loss.4} parent=0 // pred_region
    _
  $region5: #{supervised_contrastive_loss.4} parent=0 // pred_fallthru
    _
  // Predicated region
  $region6: #{supervised_contrastive_loss.4} parent=0 // pred_check
    _
  $region7: #{supervised_contrastive_loss.4} parent=0 // pred_check_branch
    %12 = sbr.rel (0) target = $region9
  $region8: #{supervised_contrastive_loss.4} parent=0 // pred_region
    _
  $region9: #{supervised_contrastive_loss.4} parent=0 // pred_fallthru
    _
  %v13 = vld [vmem:[%s0] sm:$0xf]
  %v14 = vld [vmem:[%s0 + $0x4] sm:$0xf]
  %v15 = vld [vmem:[%s0 + $0x8] sm:$0xf]
  %v16 = vld [vmem:[%s0 + $0xc] sm:$0xf]
  %v17 = vld [vmem:[%s0 + $0x10] sm:$0xf]
  %v18 = vld [vmem:[%s0 + $0x14] sm:$0xf]
  %v19 = vld [vmem:[%s0 + $0x18] sm:$0xf]
  %v20 = vld [vmem:[%s0 + $0x1c] sm:$0xf]
  %v21 = vld [vmem:[%s0 + $0x20] sm:$0xf]
  %v22 = vld [vmem:[%s0 + $0x24] sm:$0xf]
  %v23 = vld [vmem:[%s0 + $0x28] sm:$0xf]
  %v24 = vld [vmem:[%s0 + $0x2c] sm:$0xf]
  %v25 = vld [vmem:[%s0 + $0x30] sm:$0xf]
  %v26 = vld [vmem:[%s0 + $0x34] sm:$0xf]
  %v27 = vld [vmem:[%s0 + $0x38] sm:$0xf]
  %v28 = vld [vmem:[%s0 + $0x3c] sm:$0xf]
  %v29 = vld [vmem:[%s0 + $0x40] sm:$0xf]
  %v30 = vld [vmem:[%s0 + $0x44] sm:$0xf]
  %v31 = vld [vmem:[%s0 + $0x48] sm:$0xf]
  %v32 = vld [vmem:[%s0 + $0x4c] sm:$0xf]
  %v33 = vld [vmem:[%s0 + $0x50] sm:$0xf]
  %v34 = vld [vmem:[%s0 + $0x54] sm:$0xf]
  %v35 = vld [vmem:[%s0 + $0x58] sm:$0xf]
  %v36 = vld [vmem:[%s0 + $0x5c] sm:$0xf]
  %v37 = vld [vmem:[%s0 + $0x60] sm:$0xf]
  %v38 = vld [vmem:[%s0 + $0x64] sm:$0xf]
  %v39 = vld [vmem:[%s0 + $0x68] sm:$0xf]
  %v40 = vld [vmem:[%s0 + $0x6c] sm:$0xf]
  %v41 = vld [vmem:[%s0 + $0x70] sm:$0xf]
  %v42 = vld [vmem:[%s0 + $0x74] sm:$0xf]
  %v43 = vld [vmem:[%s0 + $0x78] sm:$0xf]
  %v44 = vld [vmem:[%s0 + $0x7c] sm:$0xf]
  %v45 = vunpack.c.l.bf16 %v13
  %v46 = vunpack.c.l.bf16 %v14
  %v47 = vunpack.c.l.bf16 %v15
  %v48 = vunpack.c.l.bf16 %v16
  %v49 = vunpack.c.l.bf16 %v17
  %v50 = vunpack.c.l.bf16 %v18
  %v51 = vunpack.c.l.bf16 %v19
  %v52 = vunpack.c.l.bf16 %v20
  %v53 = vunpack.c.l.bf16 %v21
  %v54 = vunpack.c.l.bf16 %v22
  %v55 = vunpack.c.l.bf16 %v23
  %v56 = vunpack.c.l.bf16 %v24
  %v57 = vunpack.c.l.bf16 %v25
  %v58 = vunpack.c.l.bf16 %v26
  %v59 = vunpack.c.l.bf16 %v27
  %v60 = vunpack.c.l.bf16 %v28
  %v61 = vunpack.c.l.bf16 %v29
  %v62 = vunpack.c.l.bf16 %v30
  %v63 = vunpack.c.l.bf16 %v31
  %v64 = vunpack.c.l.bf16 %v32
  %v65 = vunpack.c.l.bf16 %v33
  %v66 = vunpack.c.l.bf16 %v34
  %v67 = vunpack.c.l.bf16 %v35
  %v68 = vunpack.c.l.bf16 %v36
  %v69 = vunpack.c.l.bf16 %v37
  %v70 = vunpack.c.l.bf16 %v38
  %v71 = vunpack.c.l.bf16 %v39
  %v72 = vunpack.c.l.bf16 %v40
  %v73 = vunpack.c.l.bf16 %v41
  %v74 = vunpack.c.l.bf16 %v42
  %v75 = vunpack.c.l.bf16 %v43
  %v76 = vunpack.c.l.bf16 %v44
  %v77 = vld [vmem:[%s1] sm:$0xff]
  %v78 = vld [vmem:[%s1 + $0x8] sm:$0xff]
  %v79 = vld [vmem:[%s1 + $0x10] sm:$0xff]
  %v80 = vld [vmem:[%s1 + $0x18] sm:$0xff]
  %v81 = vld [vmem:[%s1 + $0x20] sm:$0xff]
  %v82 = vld [vmem:[%s1 + $0x28] sm:$0xff]
  %v83 = vld [vmem:[%s1 + $0x30] sm:$0xff]
  %v84 = vld [vmem:[%s1 + $0x38] sm:$0xff]
  %v85 = vld [vmem:[%s1 + $0x40] sm:$0xff]
  %v86 = vld [vmem:[%s1 + $0x48] sm:$0xff]
  %v87 = vld [vmem:[%s1 + $0x50] sm:$0xff]
  %v88 = vld [vmem:[%s1 + $0x58] sm:$0xff]
  %v89 = vld [vmem:[%s1 + $0x60] sm:$0xff]
  %v90 = vld [vmem:[%s1 + $0x68] sm:$0xff]
  %v91 = vld [vmem:[%s1 + $0x70] sm:$0xff]
  %v92 = vld [vmem:[%s1 + $0x78] sm:$0xff]
  %93 = vmatprep.subr.mxu0 0.0
  %94 = vmatpush1.msra.mxu0 %v92
  %95 = vmatprep.subr.mxu0 0.0
  %96 = vmatpush1.msra.mxu0 %v91
  %97 = vmatprep.subr.mxu0 0.0
  %98 = vmatpush1.msra.mxu0 %v90
  %99 = vmatprep.subr.mxu0 0.0
  %100 = vmatpush1.msra.mxu0 %v89
  %101 = vmatprep.subr.mxu0 0.0
  %102 = vmatpush1.msra.mxu0 %v88
  %103 = vmatprep.subr.mxu0 0.0
  %104 = vmatpush1.msra.mxu0 %v87
  %105 = vmatprep.subr.mxu0 0.0
  %106 = vmatpush1.msra.mxu0 %v86
  %107 = vmatprep.subr.mxu0 0.0
  %108 = vmatpush1.msra.mxu0 %v85
  %109 = vmatprep.subr.mxu0 0.0
  %110 = vmatpush1.msra.mxu0 %v84
  %111 = vmatprep.subr.mxu0 0.0
  %112 = vmatpush1.msra.mxu0 %v83
  %113 = vmatprep.subr.mxu0 0.0
  %114 = vmatpush1.msra.mxu0 %v82
  %115 = vmatprep.subr.mxu0 0.0
  %116 = vmatpush1.msra.mxu0 %v81
  %117 = vmatprep.subr.mxu0 0.0
  %118 = vmatpush1.msra.mxu0 %v80
  %119 = vmatprep.subr.mxu0 0.0
  %120 = vmatpush1.msra.mxu0 %v79
  %121 = vmatprep.subr.mxu0 0.0
  %122 = vmatpush1.msra.mxu0 %v78
  %123 = vmatprep.subr.mxu0 0.0
  %124 = vmatpush1.msra.mxu0 %v77
  %125 = vmatprep.subr.mxu0 0.0
  %126 = vmatpush2.msra.mxu0 0.0
  %127 = vmatprep.subr.mxu0 0.0
  %128 = vmatpush2.msra.mxu0 0.0
  %129 = vmatprep.subr.mxu0 0.0
  %130 = vmatpush2.msra.mxu0 0.0
  %131 = vmatprep.subr.mxu0 0.0
  %132 = vmatpush2.msra.mxu0 0.0
  %133 = vmatprep.subr.mxu0 0.0
  %134 = vmatpush2.msra.mxu0 0.0
  %135 = vmatprep.subr.mxu0 0.0
  %136 = vmatpush2.msra.mxu0 0.0
  %137 = vmatprep.subr.mxu0 0.0
  %138 = vmatpush2.msra.mxu0 0.0
  %139 = vmatprep.subr.mxu0 0.0
  %140 = vmatpush2.msra.mxu0 0.0
  %141 = vmatprep.subr.mxu0 0.0
  %142 = vmatpush2.msra.mxu0 0.0
  %143 = vmatprep.subr.mxu0 0.0
  %144 = vmatpush2.msra.mxu0 0.0
  %145 = vmatprep.subr.mxu0 0.0
  %146 = vmatpush2.msra.mxu0 0.0
  %147 = vmatprep.subr.mxu0 0.0
  %148 = vmatpush2.msra.mxu0 0.0
  %149 = vmatprep.subr.mxu0 0.0
  %150 = vmatpush2.msra.mxu0 0.0
  %151 = vmatprep.subr.mxu0 0.0
  %152 = vmatpush2.msra.mxu0 0.0
  %153 = vmatprep.subr.mxu0 0.0
  %154 = vmatpush2.msra.mxu0 0.0
  %155 = vmatprep.subr.mxu0 0.0
  %156 = vmatpush2.msra.mxu0 0.0
  %157 = vmatprep.mubr.f32.mxu0 0.0
  %158 = vmatmul.mubr.f32.gmra.mxu0 %v45
  %v159 = vpop.f32.mrf.mxu0
  %v160 = vadd.f32 0.0, %v159
  %v161 = vpop.f32.mrf.mxu0
  %162 = vmatprep.mubr.f32.mxu0 0.0
  %163 = vmatmul.mubr.f32.gmra.mxu0 %v46
  %v164 = vpop.f32.mrf.mxu0
  %v165 = vadd.f32 0.0, %v164
  %v166 = vpop.f32.mrf.mxu0
  %167 = vmatprep.mubr.f32.mxu0 0.0
  %168 = vmatmul.mubr.f32.gmra.mxu0 %v47
  %v169 = vpop.f32.mrf.mxu0
  %v170 = vadd.f32 0.0, %v169
  %v171 = vpop.f32.mrf.mxu0
  %172 = vmatprep.mubr.f32.mxu0 0.0
  %173 = vmatmul.mubr.f32.gmra.mxu0 %v48
  %v174 = vpop.f32.mrf.mxu0
  %v175 = vadd.f32 0.0, %v174
  %v176 = vpop.f32.mrf.mxu0
  %177 = vmatprep.mubr.f32.mxu0 0.0
  %178 = vmatmul.mubr.f32.gmra.mxu0 %v49
  %v179 = vpop.f32.mrf.mxu0
  %v180 = vadd.f32 0.0, %v179
  %v181 = vpop.f32.mrf.mxu0
  %182 = vmatprep.mubr.f32.mxu0 0.0
  %183 = vmatmul.mubr.f32.gmra.mxu0 %v50
  %v184 = vpop.f32.mrf.mxu0
  %v185 = vadd.f32 0.0, %v184
  %v186 = vpop.f32.mrf.mxu0
  %187 = vmatprep.mubr.f32.mxu0 0.0
  %188 = vmatmul.mubr.f32.gmra.mxu0 %v51
  %v189 = vpop.f32.mrf.mxu0
  %v190 = vadd.f32 0.0, %v189
  %v191 = vpop.f32.mrf.mxu0
  %192 = vmatprep.mubr.f32.mxu0 0.0
  %193 = vmatmul.mubr.f32.gmra.mxu0 %v52
  %v194 = vpop.f32.mrf.mxu0
  %v195 = vadd.f32 0.0, %v194
  %v196 = vpop.f32.mrf.mxu0
  %197 = vmatprep.mubr.f32.mxu0 0.0
  %198 = vmatmul.mubr.f32.gmra.mxu0 %v53
  %v199 = vpop.f32.mrf.mxu0
  %v200 = vadd.f32 0.0, %v199
  %v201 = vpop.f32.mrf.mxu0
  %202 = vmatprep.mubr.f32.mxu0 0.0
  %203 = vmatmul.mubr.f32.gmra.mxu0 %v54
  %v204 = vpop.f32.mrf.mxu0
  %v205 = vadd.f32 0.0, %v204
  %v206 = vpop.f32.mrf.mxu0
  %207 = vmatprep.mubr.f32.mxu0 0.0
  %208 = vmatmul.mubr.f32.gmra.mxu0 %v55
  %v209 = vpop.f32.mrf.mxu0
  %v210 = vadd.f32 0.0, %v209
  %v211 = vpop.f32.mrf.mxu0
  %212 = vmatprep.mubr.f32.mxu0 0.0
  %213 = vmatmul.mubr.f32.gmra.mxu0 %v56
  %v214 = vpop.f32.mrf.mxu0
  %v215 = vadd.f32 0.0, %v214
  %v216 = vpop.f32.mrf.mxu0
  %217 = vmatprep.mubr.f32.mxu0 0.0
  %218 = vmatmul.mubr.f32.gmra.mxu0 %v57
  %v219 = vpop.f32.mrf.mxu0
  %v220 = vadd.f32 0.0, %v219
  %v221 = vpop.f32.mrf.mxu0
  %222 = vmatprep.mubr.f32.mxu0 0.0
  %223 = vmatmul.mubr.f32.gmra.mxu0 %v58
  %v224 = vpop.f32.mrf.mxu0
  %v225 = vadd.f32 0.0, %v224
  %v226 = vpop.f32.mrf.mxu0
  %227 = vmatprep.mubr.f32.mxu0 0.0
  %228 = vmatmul.mubr.f32.gmra.mxu0 %v59
  %v229 = vpop.f32.mrf.mxu0
  %v230 = vadd.f32 0.0, %v229
  %v231 = vpop.f32.mrf.mxu0
  %232 = vmatprep.mubr.f32.mxu0 0.0
  %233 = vmatmul.mubr.f32.gmra.mxu0 %v60
  %v234 = vpop.f32.mrf.mxu0
  %v235 = vadd.f32 0.0, %v234
  %v236 = vpop.f32.mrf.mxu0
  %237 = vmatprep.mubr.f32.mxu0 0.0
  %238 = vmatmul.mubr.f32.gmra.mxu0 %v61
  %v239 = vpop.f32.mrf.mxu0
  %v240 = vadd.f32 0.0, %v239
  %v241 = vpop.f32.mrf.mxu0
  %242 = vmatprep.mubr.f32.mxu0 0.0
  %243 = vmatmul.mubr.f32.gmra.mxu0 %v62
  %v244 = vpop.f32.mrf.mxu0
  %v245 = vadd.f32 0.0, %v244
  %v246 = vpop.f32.mrf.mxu0
  %247 = vmatprep.mubr.f32.mxu0 0.0
  %248 = vmatmul.mubr.f32.gmra.mxu0 %v63
  %v249 = vpop.f32.mrf.mxu0
  %v250 = vadd.f32 0.0, %v249
  %v251 = vpop.f32.mrf.mxu0
  %252 = vmatprep.mubr.f32.mxu0 0.0
  %253 = vmatmul.mubr.f32.gmra.mxu0 %v64
  %v254 = vpop.f32.mrf.mxu0
  %v255 = vadd.f32 0.0, %v254
  %v256 = vpop.f32.mrf.mxu0
  %257 = vmatprep.mubr.f32.mxu0 0.0
  %258 = vmatmul.mubr.f32.gmra.mxu0 %v65
  %v259 = vpop.f32.mrf.mxu0
  %v260 = vadd.f32 0.0, %v259
  %v261 = vpop.f32.mrf.mxu0
  %262 = vmatprep.mubr.f32.mxu0 0.0
  %263 = vmatmul.mubr.f32.gmra.mxu0 %v66
  %v264 = vpop.f32.mrf.mxu0
  %v265 = vadd.f32 0.0, %v264
  %v266 = vpop.f32.mrf.mxu0
  %267 = vmatprep.mubr.f32.mxu0 0.0
  %268 = vmatmul.mubr.f32.gmra.mxu0 %v67
  %v269 = vpop.f32.mrf.mxu0
  %v270 = vadd.f32 0.0, %v269
  %v271 = vpop.f32.mrf.mxu0
  %272 = vmatprep.mubr.f32.mxu0 0.0
  %273 = vmatmul.mubr.f32.gmra.mxu0 %v68
  %v274 = vpop.f32.mrf.mxu0
  %v275 = vadd.f32 0.0, %v274
  %v276 = vpop.f32.mrf.mxu0
  %277 = vmatprep.mubr.f32.mxu0 0.0
  %278 = vmatmul.mubr.f32.gmra.mxu0 %v69
  %v279 = vpop.f32.mrf.mxu0
  %v280 = vadd.f32 0.0, %v279
  %v281 = vpop.f32.mrf.mxu0
  %282 = vmatprep.mubr.f32.mxu0 0.0
  %283 = vmatmul.mubr.f32.gmra.mxu0 %v70
  %v284 = vpop.f32.mrf.mxu0
  %v285 = vadd.f32 0.0, %v284
  %v286 = vpop.f32.mrf.mxu0
  %287 = vmatprep.mubr.f32.mxu0 0.0
  %288 = vmatmul.mubr.f32.gmra.mxu0 %v71
  %v289 = vpop.f32.mrf.mxu0
  %v290 = vadd.f32 0.0, %v289
  %v291 = vpop.f32.mrf.mxu0
  %292 = vmatprep.mubr.f32.mxu0 0.0
  %293 = vmatmul.mubr.f32.gmra.mxu0 %v72
  %v294 = vpop.f32.mrf.mxu0
  %v295 = vadd.f32 0.0, %v294
  %v296 = vpop.f32.mrf.mxu0
  %297 = vmatprep.mubr.f32.mxu0 0.0
  %298 = vmatmul.mubr.f32.gmra.mxu0 %v73
  %v299 = vpop.f32.mrf.mxu0
  %v300 = vadd.f32 0.0, %v299
  %v301 = vpop.f32.mrf.mxu0
  %302 = vmatprep.mubr.f32.mxu0 0.0
  %303 = vmatmul.mubr.f32.gmra.mxu0 %v74
  %v304 = vpop.f32.mrf.mxu0
  %v305 = vadd.f32 0.0, %v304
  %v306 = vpop.f32.mrf.mxu0
  %307 = vmatprep.mubr.f32.mxu0 0.0
  %308 = vmatmul.mubr.f32.gmra.mxu0 %v75
  %v309 = vpop.f32.mrf.mxu0
  %v310 = vadd.f32 0.0, %v309
  %v311 = vpop.f32.mrf.mxu0
  %312 = vmatprep.mubr.f32.mxu0 0.0
  %313 = vmatmul.mubr.f32.gmra.mxu0 %v76
  %v314 = vpop.f32.mrf.mxu0
  %v315 = vadd.f32 0.0, %v314
  %v316 = vpop.f32.mrf.mxu0
  %317 = vdwg.mxu0
  %v318 = vmul.f32 %v160, %v45
  %v319 = vmul.f32 %v165, %v46
  %v320 = vmul.f32 %v170, %v47
  %v321 = vmul.f32 %v175, %v48
  %v322 = vmul.f32 %v180, %v49
  %v323 = vmul.f32 %v185, %v50
  %v324 = vmul.f32 %v190, %v51
  %v325 = vmul.f32 %v195, %v52
  %v326 = vmul.f32 %v200, %v53
  %v327 = vmul.f32 %v205, %v54
  %v328 = vmul.f32 %v210, %v55
  %v329 = vmul.f32 %v215, %v56
  %v330 = vmul.f32 %v220, %v57
  %v331 = vmul.f32 %v225, %v58
  %v332 = vmul.f32 %v230, %v59
  %v333 = vmul.f32 %v235, %v60
  %v334 = vmul.f32 %v240, %v61
  %v335 = vmul.f32 %v245, %v62
  %v336 = vmul.f32 %v250, %v63
  %v337 = vmul.f32 %v255, %v64
  %v338 = vmul.f32 %v260, %v65
  %v339 = vmul.f32 %v265, %v66
  %v340 = vmul.f32 %v270, %v67
  %v341 = vmul.f32 %v275, %v68
  %v342 = vmul.f32 %v280, %v69
  %v343 = vmul.f32 %v285, %v70
  %v344 = vmul.f32 %v290, %v71
  %v345 = vmul.f32 %v295, %v72
  %v346 = vmul.f32 %v300, %v73
  %v347 = vmul.f32 %v305, %v74
  %v348 = vmul.f32 %v310, %v75
  %v349 = vmul.f32 %v315, %v76
  %350 = vadd.xlane.f32.xlu0 %v318
  %v351 = vpop.xlane.xlu0 %350
  %352 = vadd.xlane.f32.xlu0 %v319
  %v353 = vpop.xlane.xlu0 %352
  %354 = vadd.xlane.f32.xlu0 %v320
  %v355 = vpop.xlane.xlu0 %354
  %356 = vadd.xlane.f32.xlu0 %v321
  %v357 = vpop.xlane.xlu0 %356
  %358 = vadd.xlane.f32.xlu0 %v322
  %v359 = vpop.xlane.xlu0 %358
  %360 = vadd.xlane.f32.xlu0 %v323
  %v361 = vpop.xlane.xlu0 %360
  %362 = vadd.xlane.f32.xlu0 %v324
  %v363 = vpop.xlane.xlu0 %362
  %364 = vadd.xlane.f32.xlu0 %v325
  %v365 = vpop.xlane.xlu0 %364
  %366 = vadd.xlane.f32.xlu0 %v326
  %v367 = vpop.xlane.xlu0 %366
  %368 = vadd.xlane.f32.xlu0 %v327
  %v369 = vpop.xlane.xlu0 %368
  %370 = vadd.xlane.f32.xlu0 %v328
  %v371 = vpop.xlane.xlu0 %370
  %372 = vadd.xlane.f32.xlu0 %v329
  %v373 = vpop.xlane.xlu0 %372
  %374 = vadd.xlane.f32.xlu0 %v330
  %v375 = vpop.xlane.xlu0 %374
  %376 = vadd.xlane.f32.xlu0 %v331
  %v377 = vpop.xlane.xlu0 %376
  %378 = vadd.xlane.f32.xlu0 %v332
  %v379 = vpop.xlane.xlu0 %378
  %380 = vadd.xlane.f32.xlu0 %v333
  %v381 = vpop.xlane.xlu0 %380
  %382 = vadd.xlane.f32.xlu0 %v334
  %v383 = vpop.xlane.xlu0 %382
  %384 = vadd.xlane.f32.xlu0 %v335
  %v385 = vpop.xlane.xlu0 %384
  %386 = vadd.xlane.f32.xlu0 %v336
  %v387 = vpop.xlane.xlu0 %386
  %388 = vadd.xlane.f32.xlu0 %v337
  %v389 = vpop.xlane.xlu0 %388
  %390 = vadd.xlane.f32.xlu0 %v338
  %v391 = vpop.xlane.xlu0 %390
  %392 = vadd.xlane.f32.xlu0 %v339
  %v393 = vpop.xlane.xlu0 %392
  %394 = vadd.xlane.f32.xlu0 %v340
  %v395 = vpop.xlane.xlu0 %394
  %396 = vadd.xlane.f32.xlu0 %v341
  %v397 = vpop.xlane.xlu0 %396
  %398 = vadd.xlane.f32.xlu0 %v342
  %v399 = vpop.xlane.xlu0 %398
  %400 = vadd.xlane.f32.xlu0 %v343
  %v401 = vpop.xlane.xlu0 %400
  %402 = vadd.xlane.f32.xlu0 %v344
  %v403 = vpop.xlane.xlu0 %402
  %404 = vadd.xlane.f32.xlu0 %v345
  %v405 = vpop.xlane.xlu0 %404
  %406 = vadd.xlane.f32.xlu0 %v346
  %v407 = vpop.xlane.xlu0 %406
  %408 = vadd.xlane.f32.xlu0 %v347
  %v409 = vpop.xlane.xlu0 %408
  %410 = vadd.xlane.f32.xlu0 %v348
  %v411 = vpop.xlane.xlu0 %410
  %412 = vadd.xlane.f32.xlu0 %v349
  %v413 = vpop.xlane.xlu0 %412
  %v414 = vmax.f32 %v351, 1e-24
  %v415 = vmax.f32 %v353, 1e-24
  %v416 = vmax.f32 %v355, 1e-24
  %v417 = vmax.f32 %v357, 1e-24
  %v418 = vmax.f32 %v359, 1e-24
  %v419 = vmax.f32 %v361, 1e-24
  %v420 = vmax.f32 %v363, 1e-24
  %v421 = vmax.f32 %v365, 1e-24
  %v422 = vmax.f32 %v367, 1e-24
  %v423 = vmax.f32 %v369, 1e-24
  %v424 = vmax.f32 %v371, 1e-24
  %v425 = vmax.f32 %v373, 1e-24
  %v426 = vmax.f32 %v375, 1e-24
  %v427 = vmax.f32 %v377, 1e-24
  %v428 = vmax.f32 %v379, 1e-24
  %v429 = vmax.f32 %v381, 1e-24
  %v430 = vmax.f32 %v383, 1e-24
  %v431 = vmax.f32 %v385, 1e-24
  %v432 = vmax.f32 %v387, 1e-24
  %v433 = vmax.f32 %v389, 1e-24
  %v434 = vmax.f32 %v391, 1e-24
  %v435 = vmax.f32 %v393, 1e-24
  %v436 = vmax.f32 %v395, 1e-24
  %v437 = vmax.f32 %v397, 1e-24
  %v438 = vmax.f32 %v399, 1e-24
  %v439 = vmax.f32 %v401, 1e-24
  %v440 = vmax.f32 %v403, 1e-24
  %v441 = vmax.f32 %v405, 1e-24
  %v442 = vmax.f32 %v407, 1e-24
  %v443 = vmax.f32 %v409, 1e-24
  %v444 = vmax.f32 %v411, 1e-24
  %v445 = vmax.f32 %v413, 1e-24
  %v446 = vrsqrt.pop %v414
  %v447 = vrsqrt.pop %v415
  %v448 = vrsqrt.pop %v416
  %v449 = vrsqrt.pop %v417
  %v450 = vrsqrt.pop %v418
  %v451 = vrsqrt.pop %v419
  %v452 = vrsqrt.pop %v420
  %v453 = vrsqrt.pop %v421
  %v454 = vrsqrt.pop %v422
  %v455 = vrsqrt.pop %v423
  %v456 = vrsqrt.pop %v424
  %v457 = vrsqrt.pop %v425
  %v458 = vrsqrt.pop %v426
  %v459 = vrsqrt.pop %v427
  %v460 = vrsqrt.pop %v428
  %v461 = vrsqrt.pop %v429
  %v462 = vrsqrt.pop %v430
  %v463 = vrsqrt.pop %v431
  %v464 = vrsqrt.pop %v432
  %v465 = vrsqrt.pop %v433
  %v466 = vrsqrt.pop %v434
  %v467 = vrsqrt.pop %v435
  %v468 = vrsqrt.pop %v436
  %v469 = vrsqrt.pop %v437
  %v470 = vrsqrt.pop %v438
  %v471 = vrsqrt.pop %v439
  %v472 = vrsqrt.pop %v440
  %v473 = vrsqrt.pop %v441
  %v474 = vrsqrt.pop %v442
  %v475 = vrsqrt.pop %v443
  %v476 = vrsqrt.pop %v444
  %v477 = vrsqrt.pop %v445
  %v478 = vmul.f32 %v446, 14.285714
  %v479 = vmul.f32 %v447, 14.285714
  %v480 = vmul.f32 %v448, 14.285714
  %v481 = vmul.f32 %v449, 14.285714
  %v482 = vmul.f32 %v450, 14.285714
  %v483 = vmul.f32 %v451, 14.285714
  %v484 = vmul.f32 %v452, 14.285714
  %v485 = vmul.f32 %v453, 14.285714
  %v486 = vmul.f32 %v454, 14.285714
  %v487 = vmul.f32 %v455, 14.285714
  %v488 = vmul.f32 %v456, 14.285714
  %v489 = vmul.f32 %v457, 14.285714
  %v490 = vmul.f32 %v458, 14.285714
  %v491 = vmul.f32 %v459, 14.285714
  %v492 = vmul.f32 %v460, 14.285714
  %v493 = vmul.f32 %v461, 14.285714
  %v494 = vmul.f32 %v462, 14.285714
  %v495 = vmul.f32 %v463, 14.285714
  %v496 = vmul.f32 %v464, 14.285714
  %v497 = vmul.f32 %v465, 14.285714
  %v498 = vmul.f32 %v466, 14.285714
  %v499 = vmul.f32 %v467, 14.285714
  %v500 = vmul.f32 %v468, 14.285714
  %v501 = vmul.f32 %v469, 14.285714
  %v502 = vmul.f32 %v470, 14.285714
  %v503 = vmul.f32 %v471, 14.285714
  %v504 = vmul.f32 %v472, 14.285714
  %v505 = vmul.f32 %v473, 14.285714
  %v506 = vmul.f32 %v474, 14.285714
  %v507 = vmul.f32 %v475, 14.285714
  %v508 = vmul.f32 %v476, 14.285714
  %v509 = vmul.f32 %v477, 14.285714
  %v510 = vmul.f32 %v160, %v478
  %v511 = vmul.f32 %v165, %v479
  %v512 = vmul.f32 %v170, %v480
  %v513 = vmul.f32 %v175, %v481
  %v514 = vmul.f32 %v180, %v482
  %v515 = vmul.f32 %v185, %v483
  %v516 = vmul.f32 %v190, %v484
  %v517 = vmul.f32 %v195, %v485
  %v518 = vmul.f32 %v200, %v486
  %v519 = vmul.f32 %v205, %v487
  %v520 = vmul.f32 %v210, %v488
  %v521 = vmul.f32 %v215, %v489
  %v522 = vmul.f32 %v220, %v490
  %v523 = vmul.f32 %v225, %v491
  %v524 = vmul.f32 %v230, %v492
  %v525 = vmul.f32 %v235, %v493
  %v526 = vmul.f32 %v240, %v494
  %v527 = vmul.f32 %v245, %v495
  %v528 = vmul.f32 %v250, %v496
  %v529 = vmul.f32 %v255, %v497
  %v530 = vmul.f32 %v260, %v498
  %v531 = vmul.f32 %v265, %v499
  %v532 = vmul.f32 %v270, %v500
  %v533 = vmul.f32 %v275, %v501
  %v534 = vmul.f32 %v280, %v502
  %v535 = vmul.f32 %v285, %v503
  %v536 = vmul.f32 %v290, %v504
  %v537 = vmul.f32 %v295, %v505
  %v538 = vmul.f32 %v300, %v506
  %v539 = vmul.f32 %v305, %v507
  %v540 = vmul.f32 %v310, %v508
  %v541 = vmul.f32 %v315, %v509
  %v542 = vpack.c.bf16 %v511, %v510
  %v543 = vpack.c.bf16 %v513, %v512
  %v544 = vpack.c.bf16 %v515, %v514
  %v545 = vpack.c.bf16 %v517, %v516
  %v546 = vpack.c.bf16 %v519, %v518
  %v547 = vpack.c.bf16 %v521, %v520
  %v548 = vpack.c.bf16 %v523, %v522
  %v549 = vpack.c.bf16 %v525, %v524
  %v550 = vpack.c.bf16 %v527, %v526
  %v551 = vpack.c.bf16 %v529, %v528
  %v552 = vpack.c.bf16 %v531, %v530
  %v553 = vpack.c.bf16 %v533, %v532
  %v554 = vpack.c.bf16 %v535, %v534
  %v555 = vpack.c.bf16 %v537, %v536
  %v556 = vpack.c.bf16 %v539, %v538
  %v557 = vpack.c.bf16 %v541, %v540
  %v574 = vunpack.c.l.b16 %v542
  %v575 = vunpack.c.h.b16 %v542
  %v576 = vunpack.c.l.b16 %v543
  %v577 = vunpack.c.h.b16 %v543
  %v578 = vunpack.c.l.b16 %v544
  %v579 = vunpack.c.h.b16 %v544
  %v580 = vunpack.c.l.b16 %v545
  %v581 = vunpack.c.h.b16 %v545
  %v582 = vunpack.c.l.b16 %v546
  %v583 = vunpack.c.h.b16 %v546
  %v584 = vunpack.c.l.b16 %v547
  %v585 = vunpack.c.h.b16 %v547
  %v586 = vunpack.c.l.b16 %v548
  %v587 = vunpack.c.h.b16 %v548
  %v588 = vunpack.c.l.b16 %v549
  %v589 = vunpack.c.h.b16 %v549
  %v590 = vunpack.c.l.b16 %v550
  %v591 = vunpack.c.h.b16 %v550
  %v592 = vunpack.c.l.b16 %v551
  %v593 = vunpack.c.h.b16 %v551
  %v594 = vunpack.c.l.b16 %v552
  %v595 = vunpack.c.h.b16 %v552
  %v596 = vunpack.c.l.b16 %v553
  %v597 = vunpack.c.h.b16 %v553
  %v598 = vunpack.c.l.b16 %v554
  %v599 = vunpack.c.h.b16 %v554
  %v600 = vunpack.c.l.b16 %v555
  %v601 = vunpack.c.h.b16 %v555
  %v602 = vunpack.c.l.b16 %v556
  %v603 = vunpack.c.h.b16 %v556
  %v604 = vunpack.c.l.b16 %v557
  %v605 = vunpack.c.h.b16 %v557
  %v606 = vpack.c.b16 %v574, %v574
  %v607 = vpack.c.b16 %v575, %v575
  %v608 = vpack.c.b16 %v576, %v576
  %v609 = vpack.c.b16 %v577, %v577
  %v610 = vpack.c.b16 %v578, %v578
  %v611 = vpack.c.b16 %v579, %v579
  %v612 = vpack.c.b16 %v580, %v580
  %v613 = vpack.c.b16 %v581, %v581
  %v614 = vpack.c.b16 %v582, %v582
  %v615 = vpack.c.b16 %v583, %v583
  %v616 = vpack.c.b16 %v584, %v584
  %v617 = vpack.c.b16 %v585, %v585
  %v618 = vpack.c.b16 %v586, %v586
  %v619 = vpack.c.b16 %v587, %v587
  %v620 = vpack.c.b16 %v588, %v588
  %v621 = vpack.c.b16 %v589, %v589
  %v622 = vpack.c.b16 %v590, %v590
  %v623 = vpack.c.b16 %v591, %v591
  %v624 = vpack.c.b16 %v592, %v592
  %v625 = vpack.c.b16 %v593, %v593
  %v626 = vpack.c.b16 %v594, %v594
  %v627 = vpack.c.b16 %v595, %v595
  %v628 = vpack.c.b16 %v596, %v596
  %v629 = vpack.c.b16 %v597, %v597
  %v630 = vpack.c.b16 %v598, %v598
  %v631 = vpack.c.b16 %v599, %v599
  %v632 = vpack.c.b16 %v600, %v600
  %v633 = vpack.c.b16 %v601, %v601
  %v634 = vpack.c.b16 %v602, %v602
  %v635 = vpack.c.b16 %v603, %v603
  %v636 = vpack.c.b16 %v604, %v604
  %v637 = vpack.c.b16 %v605, %v605
  %670 = vst [vmem:[%s2] sm:$0xf] %v606
  %671 = vst [vmem:[%s2 + $0x4] sm:$0xf] %v607
  %672 = vst [vmem:[%s2 + $0x8] sm:$0xf] %v608
  %673 = vst [vmem:[%s2 + $0xc] sm:$0xf] %v609
  %674 = vst [vmem:[%s2 + $0x10] sm:$0xf] %v610
  %675 = vst [vmem:[%s2 + $0x14] sm:$0xf] %v611
  %676 = vst [vmem:[%s2 + $0x18] sm:$0xf] %v612
  %677 = vst [vmem:[%s2 + $0x1c] sm:$0xf] %v613
  %678 = vst [vmem:[%s2 + $0x20] sm:$0xf] %v614
  %679 = vst [vmem:[%s2 + $0x24] sm:$0xf] %v615
  %680 = vst [vmem:[%s2 + $0x28] sm:$0xf] %v616
  %681 = vst [vmem:[%s2 + $0x2c] sm:$0xf] %v617
  %682 = vst [vmem:[%s2 + $0x30] sm:$0xf] %v618
  %683 = vst [vmem:[%s2 + $0x34] sm:$0xf] %v619
  %684 = vst [vmem:[%s2 + $0x38] sm:$0xf] %v620
  %685 = vst [vmem:[%s2 + $0x3c] sm:$0xf] %v621
  %686 = vst [vmem:[%s2 + $0x40] sm:$0xf] %v622
  %687 = vst [vmem:[%s2 + $0x44] sm:$0xf] %v623
  %688 = vst [vmem:[%s2 + $0x48] sm:$0xf] %v624
  %689 = vst [vmem:[%s2 + $0x4c] sm:$0xf] %v625
  %690 = vst [vmem:[%s2 + $0x50] sm:$0xf] %v626
  %691 = vst [vmem:[%s2 + $0x54] sm:$0xf] %v627
  %692 = vst [vmem:[%s2 + $0x58] sm:$0xf] %v628
  %693 = vst [vmem:[%s2 + $0x5c] sm:$0xf] %v629
  %694 = vst [vmem:[%s2 + $0x60] sm:$0xf] %v630
  %695 = vst [vmem:[%s2 + $0x64] sm:$0xf] %v631
  %696 = vst [vmem:[%s2 + $0x68] sm:$0xf] %v632
  %697 = vst [vmem:[%s2 + $0x6c] sm:$0xf] %v633
  %698 = vst [vmem:[%s2 + $0x70] sm:$0xf] %v634
  %699 = vst [vmem:[%s2 + $0x74] sm:$0xf] %v635
  %700 = vst [vmem:[%s2 + $0x78] sm:$0xf] %v636
  %701 = vst [vmem:[%s2 + $0x7c] sm:$0xf] %v637
  %v702 = vmul.f32 %v45, %v446
  %v703 = vmul.f32 %v46, %v447
  %v704 = vmul.f32 %v47, %v448
  %v705 = vmul.f32 %v48, %v449
  %v706 = vmul.f32 %v49, %v450
  %v707 = vmul.f32 %v50, %v451
  %v708 = vmul.f32 %v51, %v452
  %v709 = vmul.f32 %v52, %v453
  %v710 = vmul.f32 %v53, %v454
  %v711 = vmul.f32 %v54, %v455
  %v712 = vmul.f32 %v55, %v456
  %v713 = vmul.f32 %v56, %v457
  %v714 = vmul.f32 %v57, %v458
  %v715 = vmul.f32 %v58, %v459
  %v716 = vmul.f32 %v59, %v460
  %v717 = vmul.f32 %v60, %v461
  %v718 = vmul.f32 %v61, %v462
  %v719 = vmul.f32 %v62, %v463
  %v720 = vmul.f32 %v63, %v464
  %v721 = vmul.f32 %v64, %v465
  %v722 = vmul.f32 %v65, %v466
  %v723 = vmul.f32 %v66, %v467
  %v724 = vmul.f32 %v67, %v468
  %v725 = vmul.f32 %v68, %v469
  %v726 = vmul.f32 %v69, %v470
  %v727 = vmul.f32 %v70, %v471
  %v728 = vmul.f32 %v71, %v472
  %v729 = vmul.f32 %v72, %v473
  %v730 = vmul.f32 %v73, %v474
  %v731 = vmul.f32 %v74, %v475
  %v732 = vmul.f32 %v75, %v476
  %v733 = vmul.f32 %v76, %v477
  %v734 = vpack.c.bf16 %v703, %v702
  %v735 = vpack.c.bf16 %v705, %v704
  %v736 = vpack.c.bf16 %v707, %v706
  %v737 = vpack.c.bf16 %v709, %v708
  %v738 = vpack.c.bf16 %v711, %v710
  %v739 = vpack.c.bf16 %v713, %v712
  %v740 = vpack.c.bf16 %v715, %v714
  %v741 = vpack.c.bf16 %v717, %v716
  %v742 = vpack.c.bf16 %v719, %v718
  %v743 = vpack.c.bf16 %v721, %v720
  %v744 = vpack.c.bf16 %v723, %v722
  %v745 = vpack.c.bf16 %v725, %v724
  %v746 = vpack.c.bf16 %v727, %v726
  %v747 = vpack.c.bf16 %v729, %v728
  %v748 = vpack.c.bf16 %v731, %v730
  %v749 = vpack.c.bf16 %v733, %v732
  %v766 = vunpack.c.l.b16 %v734
  %v767 = vunpack.c.h.b16 %v734
  %v768 = vunpack.c.l.b16 %v735
  %v769 = vunpack.c.h.b16 %v735
  %v770 = vunpack.c.l.b16 %v736
  %v771 = vunpack.c.h.b16 %v736
  %v772 = vunpack.c.l.b16 %v737
  %v773 = vunpack.c.h.b16 %v737
  %v774 = vunpack.c.l.b16 %v738
  %v775 = vunpack.c.h.b16 %v738
  %v776 = vunpack.c.l.b16 %v739
  %v777 = vunpack.c.h.b16 %v739
  %v778 = vunpack.c.l.b16 %v740
  %v779 = vunpack.c.h.b16 %v740
  %v780 = vunpack.c.l.b16 %v741
  %v781 = vunpack.c.h.b16 %v741
  %v782 = vunpack.c.l.b16 %v742
  %v783 = vunpack.c.h.b16 %v742
  %v784 = vunpack.c.l.b16 %v743
  %v785 = vunpack.c.h.b16 %v743
  %v786 = vunpack.c.l.b16 %v744
  %v787 = vunpack.c.h.b16 %v744
  %v788 = vunpack.c.l.b16 %v745
  %v789 = vunpack.c.h.b16 %v745
  %v790 = vunpack.c.l.b16 %v746
  %v791 = vunpack.c.h.b16 %v746
  %v792 = vunpack.c.l.b16 %v747
  %v793 = vunpack.c.h.b16 %v747
  %v794 = vunpack.c.l.b16 %v748
  %v795 = vunpack.c.h.b16 %v748
  %v796 = vunpack.c.l.b16 %v749
  %v797 = vunpack.c.h.b16 %v749
  %v798 = vpack.c.b16 %v766, %v766
  %v799 = vpack.c.b16 %v767, %v767
  %v800 = vpack.c.b16 %v768, %v768
  %v801 = vpack.c.b16 %v769, %v769
  %v802 = vpack.c.b16 %v770, %v770
  %v803 = vpack.c.b16 %v771, %v771
  %v804 = vpack.c.b16 %v772, %v772
  %v805 = vpack.c.b16 %v773, %v773
  %v806 = vpack.c.b16 %v774, %v774
  %v807 = vpack.c.b16 %v775, %v775
  %v808 = vpack.c.b16 %v776, %v776
  %v809 = vpack.c.b16 %v777, %v777
  %v810 = vpack.c.b16 %v778, %v778
  %v811 = vpack.c.b16 %v779, %v779
  %v812 = vpack.c.b16 %v780, %v780
  %v813 = vpack.c.b16 %v781, %v781
  %v814 = vpack.c.b16 %v782, %v782
  %v815 = vpack.c.b16 %v783, %v783
  %v816 = vpack.c.b16 %v784, %v784
  %v817 = vpack.c.b16 %v785, %v785
  %v818 = vpack.c.b16 %v786, %v786
  %v819 = vpack.c.b16 %v787, %v787
  %v820 = vpack.c.b16 %v788, %v788
  %v821 = vpack.c.b16 %v789, %v789
  %v822 = vpack.c.b16 %v790, %v790
  %v823 = vpack.c.b16 %v791, %v791
  %v824 = vpack.c.b16 %v792, %v792
  %v825 = vpack.c.b16 %v793, %v793
  %v826 = vpack.c.b16 %v794, %v794
  %v827 = vpack.c.b16 %v795, %v795
  %v828 = vpack.c.b16 %v796, %v796
  %v829 = vpack.c.b16 %v797, %v797
  %862 = vst [vmem:[%s3] sm:$0xf] %v798
  %863 = vst [vmem:[%s3 + $0x4] sm:$0xf] %v799
  %864 = vst [vmem:[%s3 + $0x8] sm:$0xf] %v800
  %865 = vst [vmem:[%s3 + $0xc] sm:$0xf] %v801
  %866 = vst [vmem:[%s3 + $0x10] sm:$0xf] %v802
  %867 = vst [vmem:[%s3 + $0x14] sm:$0xf] %v803
  %868 = vst [vmem:[%s3 + $0x18] sm:$0xf] %v804
  %869 = vst [vmem:[%s3 + $0x1c] sm:$0xf] %v805
  %870 = vst [vmem:[%s3 + $0x20] sm:$0xf] %v806
  %871 = vst [vmem:[%s3 + $0x24] sm:$0xf] %v807
  %872 = vst [vmem:[%s3 + $0x28] sm:$0xf] %v808
  %873 = vst [vmem:[%s3 + $0x2c] sm:$0xf] %v809
  %874 = vst [vmem:[%s3 + $0x30] sm:$0xf] %v810
  %875 = vst [vmem:[%s3 + $0x34] sm:$0xf] %v811
  %876 = vst [vmem:[%s3 + $0x38] sm:$0xf] %v812
  %877 = vst [vmem:[%s3 + $0x3c] sm:$0xf] %v813
  %878 = vst [vmem:[%s3 + $0x40] sm:$0xf] %v814
  %879 = vst [vmem:[%s3 + $0x44] sm:$0xf] %v815
  %880 = vst [vmem:[%s3 + $0x48] sm:$0xf] %v816
  %881 = vst [vmem:[%s3 + $0x4c] sm:$0xf] %v817
  %882 = vst [vmem:[%s3 + $0x50] sm:$0xf] %v818
  %883 = vst [vmem:[%s3 + $0x54] sm:$0xf] %v819
  %884 = vst [vmem:[%s3 + $0x58] sm:$0xf] %v820
  %885 = vst [vmem:[%s3 + $0x5c] sm:$0xf] %v821
  %886 = vst [vmem:[%s3 + $0x60] sm:$0xf] %v822
  %887 = vst [vmem:[%s3 + $0x64] sm:$0xf] %v823
  %888 = vst [vmem:[%s3 + $0x68] sm:$0xf] %v824
  %889 = vst [vmem:[%s3 + $0x6c] sm:$0xf] %v825
  %890 = vst [vmem:[%s3 + $0x70] sm:$0xf] %v826
  %891 = vst [vmem:[%s3 + $0x74] sm:$0xf] %v827
  %892 = vst [vmem:[%s3 + $0x78] sm:$0xf] %v828
  %893 = vst [vmem:[%s3 + $0x7c] sm:$0xf] %v829
  // Predicated region
  $region10: #{supervised_contrastive_loss.4} parent=0 // pred_check
    _
  $region11: #{supervised_contrastive_loss.4} parent=0 // pred_check_branch
    %895 = sbr.rel (0) target = $region13
  $region12: #{supervised_contrastive_loss.4} parent=0 // pred_region
    _
  $region13: #{supervised_contrastive_loss.4} parent=0 // pred_fallthru
    _
  // Predicated region
  $region14: #{supervised_contrastive_loss.4} parent=0 // pred_check
    _
  $region15: #{supervised_contrastive_loss.4} parent=0 // pred_check_branch
    %897 = sbr.rel (0) target = $region17
  $region16: #{supervised_contrastive_loss.4} parent=0 // pred_region
    _
  $region17: #{supervised_contrastive_loss.4} parent=0 // pred_fallthru
    _
  // Predicated region
  $region18: #{supervised_contrastive_loss.4} parent=0 // pred_check
    _
  $region19: #{supervised_contrastive_loss.4} parent=0 // pred_check_branch
    %899 = sbr.rel (0) target = $region21
  $region20: #{supervised_contrastive_loss.4} parent=0 // pred_region
    _
  $region21: #{supervised_contrastive_loss.4} parent=0 // pred_fallthru
    _
  // Predicated region
  $region22: #{supervised_contrastive_loss.4} parent=0 // pred_check
    _
  $region23: #{supervised_contrastive_loss.4} parent=0 // pred_check_branch
    %901 = sbr.rel (0) target = $region25
  $region24: #{supervised_contrastive_loss.4} parent=0 // pred_region
    _
  $region25: #{supervised_contrastive_loss.4} parent=0 // pred_fallthru
    _

// kernel: supervised_contrastive_loss.5
$region0: #{supervised_contrastive_loss.5}
  #allocation0 [shape = 'u32[]', space=smem, size = 0x4, offset = 0x4, fixed_abs, tag = 'smem constant byte address 0x4 - core index']
  #allocation1 [shape = 'u32[144,128]{1,0:T(1,128)}', space=vmem, size = 0x12000, scoped, tag = 'internal scratch']
  #allocation2 [shape = 'f32[256,1]{1,0:T(8,128)}', space=vmem, size = 0x20000, scoped, tag = 'scratch operand']
  #allocation3 [shape = 'f32[256,1]{1,0:T(8,128)}', space=vmem, size = 0x20000, scoped, tag = 'scratch operand']
  #allocation4 [shape = 'f32[256,256]{1,0:T(8,128)}', space=vmem, size = 0x40000, scoped, tag = 'scratch operand']
  %s0 = inlined_call_operand.vmem [shape: bf16[256,128], index: 0, kind: input, shape index: {}]
  %s1 = inlined_call_operand.vmem [shape: bf16[256,128], index: 1, kind: input, shape index: {}]
  %s2 = inlined_call_operand.vmem [shape: s32[256,1], index: 2, kind: input, shape index: {}]
  %s3 = inlined_call_operand.vmem [shape: s32[1,256], index: 3, kind: input, shape index: {}]
  %s4 = inlined_call_operand.vmem [shape: f32[256,1], index: 4, kind: output, shape index: {}]
  %s5 = sld [smem:[#allocation0]]
  $region34: #{supervised_contrastive_loss.5} parent=0
    _
  %s7 = ssub.s32 1, %s5
  %s8 = scalar_select 0, %s7, %s5
  // Predicated region
  $region2: #{supervised_contrastive_loss.5} parent=0 // pred_check
    _
  $region3: #{supervised_contrastive_loss.5} parent=0 // pred_check_branch
    %10 = sbr.rel (0) target = $region5
  $region4: #{supervised_contrastive_loss.5} parent=0 // pred_region
    _
  $region5: #{supervised_contrastive_loss.5} parent=0 // pred_fallthru
    _
  // Predicated region
  $region6: #{supervised_contrastive_loss.5} parent=0 // pred_check
    _
  $region7: #{supervised_contrastive_loss.5} parent=0 // pred_check_branch
    %12 = sbr.rel (0) target = $region9
  $region8: #{supervised_contrastive_loss.5} parent=0 // pred_region
    _
  $region9: #{supervised_contrastive_loss.5} parent=0 // pred_fallthru
    _
  // Predicated region
  $region10: #{supervised_contrastive_loss.5} parent=0 // pred_check
    _
  $region11: #{supervised_contrastive_loss.5} parent=0 // pred_check_branch
    %14 = sbr.rel (0) target = $region13
  $region12: #{supervised_contrastive_loss.5} parent=0 // pred_region
    _
  $region13: #{supervised_contrastive_loss.5} parent=0 // pred_fallthru
    _
  // Predicated region
  $region14: #{supervised_contrastive_loss.5} parent=0 // pred_check
    _
  $region15: #{supervised_contrastive_loss.5} parent=0 // pred_check_branch
    %16 = sbr.rel (0) target = $region17
  $region16: #{supervised_contrastive_loss.5} parent=0 // pred_region
    _
  $region17: #{supervised_contrastive_loss.5} parent=0 // pred_fallthru
    _
  %p18 = scmp.eq.s32.totalorder 0, 0
  // Predicated region
  $region18: #{supervised_contrastive_loss.5} parent=0 // pred_check
    %p19 = pneg %p18
  $region19: #{supervised_contrastive_loss.5} parent=0 // pred_check_branch
    %21 = sbr.rel (%p19) target = $region21
  $region20: #{supervised_contrastive_loss.5} parent=0 // pred_region
    %vm22 = vcmask 7168
    %23 = vst.msk [vmem:[#allocation2] sm:$0xff] %vm22, -1e+30
    %24 = vst.msk [vmem:[#allocation2 + $0x8] sm:$0xff] %vm22, -1e+30
    %25 = vst.msk [vmem:[#allocation2 + $0x10] sm:$0xff] %vm22, -1e+30
    %26 = vst.msk [vmem:[#allocation2 + $0x18] sm:$0xff] %vm22, -1e+30
    %27 = vst.msk [vmem:[#allocation2 + $0x20] sm:$0xff] %vm22, -1e+30
    %28 = vst.msk [vmem:[#allocation2 + $0x28] sm:$0xff] %vm22, -1e+30
    %29 = vst.msk [vmem:[#allocation2 + $0x30] sm:$0xff] %vm22, -1e+30
    %30 = vst.msk [vmem:[#allocation2 + $0x38] sm:$0xff] %vm22, -1e+30
    %31 = vst.msk [vmem:[#allocation2 + $0x40] sm:$0xff] %vm22, -1e+30
    %32 = vst.msk [vmem:[#allocation2 + $0x48] sm:$0xff] %vm22, -1e+30
    %33 = vst.msk [vmem:[#allocation2 + $0x50] sm:$0xff] %vm22, -1e+30
    %34 = vst.msk [vmem:[#allocation2 + $0x58] sm:$0xff] %vm22, -1e+30
    %35 = vst.msk [vmem:[#allocation2 + $0x60] sm:$0xff] %vm22, -1e+30
    %36 = vst.msk [vmem:[#allocation2 + $0x68] sm:$0xff] %vm22, -1e+30
    %37 = vst.msk [vmem:[#allocation2 + $0x70] sm:$0xff] %vm22, -1e+30
    %38 = vst.msk [vmem:[#allocation2 + $0x78] sm:$0xff] %vm22, -1e+30
    %39 = vst.msk [vmem:[#allocation2 + $0x80] sm:$0xff] %vm22, -1e+30
    %40 = vst.msk [vmem:[#allocation2 + $0x88] sm:$0xff] %vm22, -1e+30
    %41 = vst.msk [vmem:[#allocation2 + $0x90] sm:$0xff] %vm22, -1e+30
    %42 = vst.msk [vmem:[#allocation2 + $0x98] sm:$0xff] %vm22, -1e+30
    %43 = vst.msk [vmem:[#allocation2 + $0xa0] sm:$0xff] %vm22, -1e+30
    %44 = vst.msk [vmem:[#allocation2 + $0xa8] sm:$0xff] %vm22, -1e+30
    %45 = vst.msk [vmem:[#allocation2 + $0xb0] sm:$0xff] %vm22, -1e+30
    %46 = vst.msk [vmem:[#allocation2 + $0xb8] sm:$0xff] %vm22, -1e+30
    %47 = vst.msk [vmem:[#allocation2 + $0xc0] sm:$0xff] %vm22, -1e+30
    %48 = vst.msk [vmem:[#allocation2 + $0xc8] sm:$0xff] %vm22, -1e+30
    %49 = vst.msk [vmem:[#allocation2 + $0xd0] sm:$0xff] %vm22, -1e+30
    %50 = vst.msk [vmem:[#allocation2 + $0xd8] sm:$0xff] %vm22, -1e+30
    %51 = vst.msk [vmem:[#allocation2 + $0xe0] sm:$0xff] %vm22, -1e+30
    %52 = vst.msk [vmem:[#allocation2 + $0xe8] sm:$0xff] %vm22, -1e+30
    %53 = vst.msk [vmem:[#allocation2 + $0xf0] sm:$0xff] %vm22, -1e+30
    %54 = vst.msk [vmem:[#allocation2 + $0xf8] sm:$0xff] %vm22, -1e+30
    %55 = vst.msk [vmem:[#allocation3] sm:$0xff] %vm22, 0.0
    %56 = vst.msk [vmem:[#allocation3 + $0x8] sm:$0xff] %vm22, 0.0
    %57 = vst.msk [vmem:[#allocation3 + $0x10] sm:$0xff] %vm22, 0.0
    %58 = vst.msk [vmem:[#allocation3 + $0x18] sm:$0xff] %vm22, 0.0
    %59 = vst.msk [vmem:[#allocation3 + $0x20] sm:$0xff] %vm22, 0.0
    %60 = vst.msk [vmem:[#allocation3 + $0x28] sm:$0xff] %vm22, 0.0
    %61 = vst.msk [vmem:[#allocation3 + $0x30] sm:$0xff] %vm22, 0.0
    %62 = vst.msk [vmem:[#allocation3 + $0x38] sm:$0xff] %vm22, 0.0
    %63 = vst.msk [vmem:[#allocation3 + $0x40] sm:$0xff] %vm22, 0.0
    %64 = vst.msk [vmem:[#allocation3 + $0x48] sm:$0xff] %vm22, 0.0
    %65 = vst.msk [vmem:[#allocation3 + $0x50] sm:$0xff] %vm22, 0.0
    %66 = vst.msk [vmem:[#allocation3 + $0x58] sm:$0xff] %vm22, 0.0
    %67 = vst.msk [vmem:[#allocation3 + $0x60] sm:$0xff] %vm22, 0.0
    %68 = vst.msk [vmem:[#allocation3 + $0x68] sm:$0xff] %vm22, 0.0
    %69 = vst.msk [vmem:[#allocation3 + $0x70] sm:$0xff] %vm22, 0.0
    %70 = vst.msk [vmem:[#allocation3 + $0x78] sm:$0xff] %vm22, 0.0
    %71 = vst.msk [vmem:[#allocation3 + $0x80] sm:$0xff] %vm22, 0.0
    %72 = vst.msk [vmem:[#allocation3 + $0x88] sm:$0xff] %vm22, 0.0
    %73 = vst.msk [vmem:[#allocation3 + $0x90] sm:$0xff] %vm22, 0.0
    %74 = vst.msk [vmem:[#allocation3 + $0x98] sm:$0xff] %vm22, 0.0
    %75 = vst.msk [vmem:[#allocation3 + $0xa0] sm:$0xff] %vm22, 0.0
    %76 = vst.msk [vmem:[#allocation3 + $0xa8] sm:$0xff] %vm22, 0.0
    %77 = vst.msk [vmem:[#allocation3 + $0xb0] sm:$0xff] %vm22, 0.0
    %78 = vst.msk [vmem:[#allocation3 + $0xb8] sm:$0xff] %vm22, 0.0
    %79 = vst.msk [vmem:[#allocation3 + $0xc0] sm:$0xff] %vm22, 0.0
    %80 = vst.msk [vmem:[#allocation3 + $0xc8] sm:$0xff] %vm22, 0.0
    %81 = vst.msk [vmem:[#allocation3 + $0xd0] sm:$0xff] %vm22, 0.0
    %82 = vst.msk [vmem:[#allocation3 + $0xd8] sm:$0xff] %vm22, 0.0
    %83 = vst.msk [vmem:[#allocation3 + $0xe0] sm:$0xff] %vm22, 0.0
    %84 = vst.msk [vmem:[#allocation3 + $0xe8] sm:$0xff] %vm22, 0.0
    %85 = vst.msk [vmem:[#allocation3 + $0xf0] sm:$0xff] %vm22, 0.0
    %86 = vst.msk [vmem:[#allocation3 + $0xf8] sm:$0xff] %vm22, 0.0
  $region21: #{supervised_contrastive_loss.5} parent=0 // pred_fallthru
    _
  %v87 = vld [vmem:[%s0] sm:$0xf]
  %v88 = vld [vmem:[%s0 + $0x4] sm:$0xf]
  %v89 = vld [vmem:[%s0 + $0x8] sm:$0xf]
  %v90 = vld [vmem:[%s0 + $0xc] sm:$0xf]
  %v91 = vld [vmem:[%s0 + $0x10] sm:$0xf]
  %v92 = vld [vmem:[%s0 + $0x14] sm:$0xf]
  %v93 = vld [vmem:[%s0 + $0x18] sm:$0xf]
  %v94 = vld [vmem:[%s0 + $0x1c] sm:$0xf]
  %v95 = vld [vmem:[%s0 + $0x20] sm:$0xf]
  %v96 = vld [vmem:[%s0 + $0x24] sm:$0xf]
  %v97 = vld [vmem:[%s0 + $0x28] sm:$0xf]
  %v98 = vld [vmem:[%s0 + $0x2c] sm:$0xf]
  %v99 = vld [vmem:[%s0 + $0x30] sm:$0xf]
  %v100 = vld [vmem:[%s0 + $0x34] sm:$0xf]
  %v101 = vld [vmem:[%s0 + $0x38] sm:$0xf]
  %v102 = vld [vmem:[%s0 + $0x3c] sm:$0xf]
  %v103 = vld [vmem:[%s0 + $0x40] sm:$0xf]
  %v104 = vld [vmem:[%s0 + $0x44] sm:$0xf]
  %v105 = vld [vmem:[%s0 + $0x48] sm:$0xf]
  %v106 = vld [vmem:[%s0 + $0x4c] sm:$0xf]
  %v107 = vld [vmem:[%s0 + $0x50] sm:$0xf]
  %v108 = vld [vmem:[%s0 + $0x54] sm:$0xf]
  %v109 = vld [vmem:[%s0 + $0x58] sm:$0xf]
  %v110 = vld [vmem:[%s0 + $0x5c] sm:$0xf]
  %v111 = vld [vmem:[%s0 + $0x60] sm:$0xf]
  %v112 = vld [vmem:[%s0 + $0x64] sm:$0xf]
  %v113 = vld [vmem:[%s0 + $0x68] sm:$0xf]
  %v114 = vld [vmem:[%s0 + $0x6c] sm:$0xf]
  %v115 = vld [vmem:[%s0 + $0x70] sm:$0xf]
  %v116 = vld [vmem:[%s0 + $0x74] sm:$0xf]
  %v117 = vld [vmem:[%s0 + $0x78] sm:$0xf]
  %v118 = vld [vmem:[%s0 + $0x7c] sm:$0xf]
  %v119 = vld [vmem:[%s1] sm:$0xf]
  %v120 = vld [vmem:[%s1 + $0x4] sm:$0xf]
  %v121 = vld [vmem:[%s1 + $0x8] sm:$0xf]
  %v122 = vld [vmem:[%s1 + $0xc] sm:$0xf]
  %v123 = vld [vmem:[%s1 + $0x10] sm:$0xf]
  %v124 = vld [vmem:[%s1 + $0x14] sm:$0xf]
  %v125 = vld [vmem:[%s1 + $0x18] sm:$0xf]
  %v126 = vld [vmem:[%s1 + $0x1c] sm:$0xf]
  %v127 = vld [vmem:[%s1 + $0x20] sm:$0xf]
  %v128 = vld [vmem:[%s1 + $0x24] sm:$0xf]
  %v129 = vld [vmem:[%s1 + $0x28] sm:$0xf]
  %v130 = vld [vmem:[%s1 + $0x2c] sm:$0xf]
  %v131 = vld [vmem:[%s1 + $0x30] sm:$0xf]
  %v132 = vld [vmem:[%s1 + $0x34] sm:$0xf]
  %v133 = vld [vmem:[%s1 + $0x38] sm:$0xf]
  %v134 = vld [vmem:[%s1 + $0x3c] sm:$0xf]
  %v135 = vld [vmem:[%s1 + $0x40] sm:$0xf]
  %v136 = vld [vmem:[%s1 + $0x44] sm:$0xf]
  %v137 = vld [vmem:[%s1 + $0x48] sm:$0xf]
  %v138 = vld [vmem:[%s1 + $0x4c] sm:$0xf]
  %v139 = vld [vmem:[%s1 + $0x50] sm:$0xf]
  %v140 = vld [vmem:[%s1 + $0x54] sm:$0xf]
  %v141 = vld [vmem:[%s1 + $0x58] sm:$0xf]
  %v142 = vld [vmem:[%s1 + $0x5c] sm:$0xf]
  %v143 = vld [vmem:[%s1 + $0x60] sm:$0xf]
  %v144 = vld [vmem:[%s1 + $0x64] sm:$0xf]
  %v145 = vld [vmem:[%s1 + $0x68] sm:$0xf]
  %v146 = vld [vmem:[%s1 + $0x6c] sm:$0xf]
  %v147 = vld [vmem:[%s1 + $0x70] sm:$0xf]
  %v148 = vld [vmem:[%s1 + $0x74] sm:$0xf]
  %v149 = vld [vmem:[%s1 + $0x78] sm:$0xf]
  %v150 = vld [vmem:[%s1 + $0x7c] sm:$0xf]
  %v183 = vunpack.c.l.b16 %v87
  %v184 = vunpack.c.l.b16 %v88
  %v185 = vunpack.c.l.b16 %v89
  %v186 = vunpack.c.l.b16 %v90
  %v187 = vunpack.c.l.b16 %v91
  %v188 = vunpack.c.l.b16 %v92
  %v189 = vunpack.c.l.b16 %v93
  %v190 = vunpack.c.l.b16 %v94
  %v191 = vunpack.c.l.b16 %v95
  %v192 = vunpack.c.l.b16 %v96
  %v193 = vunpack.c.l.b16 %v97
  %v194 = vunpack.c.l.b16 %v98
  %v195 = vunpack.c.l.b16 %v99
  %v196 = vunpack.c.l.b16 %v100
  %v197 = vunpack.c.l.b16 %v101
  %v198 = vunpack.c.l.b16 %v102
  %v199 = vunpack.c.l.b16 %v103
  %v200 = vunpack.c.l.b16 %v104
  %v201 = vunpack.c.l.b16 %v105
  %v202 = vunpack.c.l.b16 %v106
  %v203 = vunpack.c.l.b16 %v107
  %v204 = vunpack.c.l.b16 %v108
  %v205 = vunpack.c.l.b16 %v109
  %v206 = vunpack.c.l.b16 %v110
  %v207 = vunpack.c.l.b16 %v111
  %v208 = vunpack.c.l.b16 %v112
  %v209 = vunpack.c.l.b16 %v113
  %v210 = vunpack.c.l.b16 %v114
  %v211 = vunpack.c.l.b16 %v115
  %v212 = vunpack.c.l.b16 %v116
  %v213 = vunpack.c.l.b16 %v117
  %v214 = vunpack.c.l.b16 %v118
  %v215 = vpack.c.b16 %v184, %v183
  %v216 = vpack.c.b16 %v186, %v185
  %v217 = vpack.c.b16 %v188, %v187
  %v218 = vpack.c.b16 %v190, %v189
  %v219 = vpack.c.b16 %v192, %v191
  %v220 = vpack.c.b16 %v194, %v193
  %v221 = vpack.c.b16 %v196, %v195
  %v222 = vpack.c.b16 %v198, %v197
  %v223 = vpack.c.b16 %v200, %v199
  %v224 = vpack.c.b16 %v202, %v201
  %v225 = vpack.c.b16 %v204, %v203
  %v226 = vpack.c.b16 %v206, %v205
  %v227 = vpack.c.b16 %v208, %v207
  %v228 = vpack.c.b16 %v210, %v209
  %v229 = vpack.c.b16 %v212, %v211
  %v230 = vpack.c.b16 %v214, %v213
  %v279 = vunpack.c.l.b16 %v119
  %v280 = vunpack.c.l.b16 %v120
  %v281 = vunpack.c.l.b16 %v121
  %v282 = vunpack.c.l.b16 %v122
  %v283 = vunpack.c.l.b16 %v123
  %v284 = vunpack.c.l.b16 %v124
  %v285 = vunpack.c.l.b16 %v125
  %v286 = vunpack.c.l.b16 %v126
  %v287 = vunpack.c.l.b16 %v127
  %v288 = vunpack.c.l.b16 %v128
  %v289 = vunpack.c.l.b16 %v129
  %v290 = vunpack.c.l.b16 %v130
  %v291 = vunpack.c.l.b16 %v131
  %v292 = vunpack.c.l.b16 %v132
  %v293 = vunpack.c.l.b16 %v133
  %v294 = vunpack.c.l.b16 %v134
  %v295 = vunpack.c.l.b16 %v135
  %v296 = vunpack.c.l.b16 %v136
  %v297 = vunpack.c.l.b16 %v137
  %v298 = vunpack.c.l.b16 %v138
  %v299 = vunpack.c.l.b16 %v139
  %v300 = vunpack.c.l.b16 %v140
  %v301 = vunpack.c.l.b16 %v141
  %v302 = vunpack.c.l.b16 %v142
  %v303 = vunpack.c.l.b16 %v143
  %v304 = vunpack.c.l.b16 %v144
  %v305 = vunpack.c.l.b16 %v145
  %v306 = vunpack.c.l.b16 %v146
  %v307 = vunpack.c.l.b16 %v147
  %v308 = vunpack.c.l.b16 %v148
  %v309 = vunpack.c.l.b16 %v149
  %v310 = vunpack.c.l.b16 %v150
  %v311 = vpack.c.b16 %v280, %v279
  %v312 = vpack.c.b16 %v282, %v281
  %v313 = vpack.c.b16 %v284, %v283
  %v314 = vpack.c.b16 %v286, %v285
  %v315 = vpack.c.b16 %v288, %v287
  %v316 = vpack.c.b16 %v290, %v289
  %v317 = vpack.c.b16 %v292, %v291
  %v318 = vpack.c.b16 %v294, %v293
  %v319 = vpack.c.b16 %v296, %v295
  %v320 = vpack.c.b16 %v298, %v297
  %v321 = vpack.c.b16 %v300, %v299
  %v322 = vpack.c.b16 %v302, %v301
  %v323 = vpack.c.b16 %v304, %v303
  %v324 = vpack.c.b16 %v306, %v305
  %v325 = vpack.c.b16 %v308, %v307
  %v326 = vpack.c.b16 %v310, %v309
  %343 = vmatprep.subr.bf16.mxu0 0
  %344 = vmatpush1.bf16.xpose.msra.mxu0 %v318
  %345 = vmatprep.subr.bf16.mxu0 0
  %346 = vmatpush1.bf16.xpose.msra.mxu0 %v317
  %347 = vmatprep.subr.bf16.mxu0 0
  %348 = vmatpush1.bf16.xpose.msra.mxu0 %v316
  %349 = vmatprep.subr.bf16.mxu0 0
  %350 = vmatpush1.bf16.xpose.msra.mxu0 %v315
  %351 = vmatprep.subr.bf16.mxu0 0
  %352 = vmatpush1.bf16.xpose.msra.mxu0 %v314
  %353 = vmatprep.subr.bf16.mxu0 0
  %354 = vmatpush1.bf16.xpose.msra.mxu0 %v313
  %355 = vmatprep.subr.bf16.mxu0 0
  %356 = vmatpush1.bf16.xpose.msra.mxu0 %v312
  %357 = vmatprep.subr.bf16.mxu0 0
  %358 = vmatpush1.bf16.xpose.msra.mxu0 %v311
  %359 = vmatprep.subr.bf16.mxu0 0
  %360 = vmatpush2.bf16.xpose.msra.mxu0 %v326
  %361 = vmatprep.subr.bf16.mxu0 0
  %362 = vmatpush2.bf16.xpose.msra.mxu0 %v325
  %363 = vmatprep.subr.bf16.mxu0 0
  %364 = vmatpush2.bf16.xpose.msra.mxu0 %v324
  %365 = vmatprep.subr.bf16.mxu0 0
  %366 = vmatpush2.bf16.xpose.msra.mxu0 %v323
  %367 = vmatprep.subr.bf16.mxu0 0
  %368 = vmatpush2.bf16.xpose.msra.mxu0 %v322
  %369 = vmatprep.subr.bf16.mxu0 0
  %370 = vmatpush2.bf16.xpose.msra.mxu0 %v321
  %371 = vmatprep.subr.bf16.mxu0 0
  %372 = vmatpush2.bf16.xpose.msra.mxu0 %v320
  %373 = vmatprep.subr.bf16.mxu0 0
  %374 = vmatpush2.bf16.xpose.msra.mxu0 %v319
  %375 = vmatprep.mubr.bf16.mxu0 0
  %376 = vmatmul.mubr.bf16.gmra.mxu0 %v215
  %v377 = vpop.f32.mrf.mxu0
  %v378 = vadd.f32 0.0, %v377
  %v379 = vpop.f32.mrf.mxu0
  %v380 = vadd.f32 0.0, %v379
  %v381 = vpop.f32.mrf.mxu0
  %v382 = vadd.f32 0.0, %v381
  %v383 = vpop.f32.mrf.mxu0
  %v384 = vadd.f32 0.0, %v383
  %385 = vmatprep.mubr.bf16.mxu0 0
  %386 = vmatmul.mubr.bf16.gmra.mxu0 %v216
  %v387 = vpop.f32.mrf.mxu0
  %v388 = vadd.f32 0.0, %v387
  %v389 = vpop.f32.mrf.mxu0
  %v390 = vadd.f32 0.0, %v389
  %v391 = vpop.f32.mrf.mxu0
  %v392 = vadd.f32 0.0, %v391
  %v393 = vpop.f32.mrf.mxu0
  %v394 = vadd.f32 0.0, %v393
  %395 = vmatprep.mubr.bf16.mxu0 0
  %396 = vmatmul.mubr.bf16.gmra.mxu0 %v217
  %v397 = vpop.f32.mrf.mxu0
  %v398 = vadd.f32 0.0, %v397
  %v399 = vpop.f32.mrf.mxu0
  %v400 = vadd.f32 0.0, %v399
  %v401 = vpop.f32.mrf.mxu0
  %v402 = vadd.f32 0.0, %v401
  %v403 = vpop.f32.mrf.mxu0
  %v404 = vadd.f32 0.0, %v403
  %405 = vmatprep.mubr.bf16.mxu0 0
  %406 = vmatmul.mubr.bf16.gmra.mxu0 %v218
  %v407 = vpop.f32.mrf.mxu0
  %v408 = vadd.f32 0.0, %v407
  %v409 = vpop.f32.mrf.mxu0
  %v410 = vadd.f32 0.0, %v409
  %v411 = vpop.f32.mrf.mxu0
  %v412 = vadd.f32 0.0, %v411
  %v413 = vpop.f32.mrf.mxu0
  %v414 = vadd.f32 0.0, %v413
  %415 = vmatprep.mubr.bf16.mxu0 0
  %416 = vmatmul.mubr.bf16.gmra.mxu0 %v219
  %v417 = vpop.f32.mrf.mxu0
  %v418 = vadd.f32 0.0, %v417
  %v419 = vpop.f32.mrf.mxu0
  %v420 = vadd.f32 0.0, %v419
  %v421 = vpop.f32.mrf.mxu0
  %v422 = vadd.f32 0.0, %v421
  %v423 = vpop.f32.mrf.mxu0
  %v424 = vadd.f32 0.0, %v423
  %425 = vmatprep.mubr.bf16.mxu0 0
  %426 = vmatmul.mubr.bf16.gmra.mxu0 %v220
  %v427 = vpop.f32.mrf.mxu0
  %v428 = vadd.f32 0.0, %v427
  %v429 = vpop.f32.mrf.mxu0
  %v430 = vadd.f32 0.0, %v429
  %v431 = vpop.f32.mrf.mxu0
  %v432 = vadd.f32 0.0, %v431
  %v433 = vpop.f32.mrf.mxu0
  %v434 = vadd.f32 0.0, %v433
  %435 = vmatprep.mubr.bf16.mxu0 0
  %436 = vmatmul.mubr.bf16.gmra.mxu0 %v221
  %v437 = vpop.f32.mrf.mxu0
  %v438 = vadd.f32 0.0, %v437
  %v439 = vpop.f32.mrf.mxu0
  %v440 = vadd.f32 0.0, %v439
  %v441 = vpop.f32.mrf.mxu0
  %v442 = vadd.f32 0.0, %v441
  %v443 = vpop.f32.mrf.mxu0
  %v444 = vadd.f32 0.0, %v443
  %445 = vmatprep.mubr.bf16.mxu0 0
  %446 = vmatmul.mubr.bf16.gmra.mxu0 %v222
  %v447 = vpop.f32.mrf.mxu0
  %v448 = vadd.f32 0.0, %v447
  %v449 = vpop.f32.mrf.mxu0
  %v450 = vadd.f32 0.0, %v449
  %v451 = vpop.f32.mrf.mxu0
  %v452 = vadd.f32 0.0, %v451
  %v453 = vpop.f32.mrf.mxu0
  %v454 = vadd.f32 0.0, %v453
  %455 = vmatprep.mubr.bf16.mxu0 0
  %456 = vmatmul.mubr.bf16.gmra.mxu0 %v223
  %v457 = vpop.f32.mrf.mxu0
  %v458 = vadd.f32 0.0, %v457
  %v459 = vpop.f32.mrf.mxu0
  %v460 = vadd.f32 0.0, %v459
  %v461 = vpop.f32.mrf.mxu0
  %v462 = vadd.f32 0.0, %v461
  %v463 = vpop.f32.mrf.mxu0
  %v464 = vadd.f32 0.0, %v463
  %465 = vmatprep.mubr.bf16.mxu0 0
  %466 = vmatmul.mubr.bf16.gmra.mxu0 %v224
  %v467 = vpop.f32.mrf.mxu0
  %v468 = vadd.f32 0.0, %v467
  %v469 = vpop.f32.mrf.mxu0
  %v470 = vadd.f32 0.0, %v469
  %v471 = vpop.f32.mrf.mxu0
  %v472 = vadd.f32 0.0, %v471
  %v473 = vpop.f32.mrf.mxu0
  %v474 = vadd.f32 0.0, %v473
  %475 = vmatprep.mubr.bf16.mxu0 0
  %476 = vmatmul.mubr.bf16.gmra.mxu0 %v225
  %v477 = vpop.f32.mrf.mxu0
  %v478 = vadd.f32 0.0, %v477
  %v479 = vpop.f32.mrf.mxu0
  %v480 = vadd.f32 0.0, %v479
  %v481 = vpop.f32.mrf.mxu0
  %v482 = vadd.f32 0.0, %v481
  %v483 = vpop.f32.mrf.mxu0
  %v484 = vadd.f32 0.0, %v483
  %485 = vmatprep.mubr.bf16.mxu0 0
  %486 = vmatmul.mubr.bf16.gmra.mxu0 %v226
  %v487 = vpop.f32.mrf.mxu0
  %v488 = vadd.f32 0.0, %v487
  %v489 = vpop.f32.mrf.mxu0
  %v490 = vadd.f32 0.0, %v489
  %v491 = vpop.f32.mrf.mxu0
  %v492 = vadd.f32 0.0, %v491
  %v493 = vpop.f32.mrf.mxu0
  %v494 = vadd.f32 0.0, %v493
  %495 = vmatprep.mubr.bf16.mxu0 0
  %496 = vmatmul.mubr.bf16.gmra.mxu0 %v227
  %v497 = vpop.f32.mrf.mxu0
  %v498 = vadd.f32 0.0, %v497
  %v499 = vpop.f32.mrf.mxu0
  %v500 = vadd.f32 0.0, %v499
  %v501 = vpop.f32.mrf.mxu0
  %v502 = vadd.f32 0.0, %v501
  %v503 = vpop.f32.mrf.mxu0
  %v504 = vadd.f32 0.0, %v503
  %505 = vmatprep.mubr.bf16.mxu0 0
  %506 = vmatmul.mubr.bf16.gmra.mxu0 %v228
  %v507 = vpop.f32.mrf.mxu0
  %v508 = vadd.f32 0.0, %v507
  %v509 = vpop.f32.mrf.mxu0
  %v510 = vadd.f32 0.0, %v509
  %v511 = vpop.f32.mrf.mxu0
  %v512 = vadd.f32 0.0, %v511
  %v513 = vpop.f32.mrf.mxu0
  %v514 = vadd.f32 0.0, %v513
  %515 = vmatprep.mubr.bf16.mxu0 0
  %516 = vmatmul.mubr.bf16.gmra.mxu0 %v229
  %v517 = vpop.f32.mrf.mxu0
  %v518 = vadd.f32 0.0, %v517
  %v519 = vpop.f32.mrf.mxu0
  %v520 = vadd.f32 0.0, %v519
  %v521 = vpop.f32.mrf.mxu0
  %v522 = vadd.f32 0.0, %v521
  %v523 = vpop.f32.mrf.mxu0
  %v524 = vadd.f32 0.0, %v523
  %525 = vmatprep.mubr.bf16.mxu0 0
  %526 = vmatmul.mubr.bf16.gmra.mxu0 %v230
  %v527 = vpop.f32.mrf.mxu0
  %v528 = vadd.f32 0.0, %v527
  %v529 = vpop.f32.mrf.mxu0
  %v530 = vadd.f32 0.0, %v529
  %v531 = vpop.f32.mrf.mxu0
  %v532 = vadd.f32 0.0, %v531
  %v533 = vpop.f32.mrf.mxu0
  %v534 = vadd.f32 0.0, %v533
  %535 = vdwg.mxu0
  %s536 = smul.u32 0, 256
  %s537 = sshra.s32 %s536, 7
  %s538 = sand.u32 %s536, 127
  %s539 = smul.addr %s537, 8
  %s540 = scalar_lea.vmem [#allocation4], %s539
  %541 = vst [vmem:[%s540] sm:$0xff] %v378
  %542 = vst [vmem:[%s540 + $0x8] sm:$0xff] %v380
  %543 = vst [vmem:[%s540 + $0x10] sm:$0xff] %v382
  %544 = vst [vmem:[%s540 + $0x18] sm:$0xff] %v384
  %545 = vst [vmem:[%s540 + $0x20] sm:$0xff] %v388
  %546 = vst [vmem:[%s540 + $0x28] sm:$0xff] %v390
  %547 = vst [vmem:[%s540 + $0x30] sm:$0xff] %v392
  %548 = vst [vmem:[%s540 + $0x38] sm:$0xff] %v394
  %549 = vst [vmem:[%s540 + $0x40] sm:$0xff] %v398
  %550 = vst [vmem:[%s540 + $0x48] sm:$0xff] %v400
  %551 = vst [vmem:[%s540 + $0x50] sm:$0xff] %v402
  %552 = vst [vmem:[%s540 + $0x58] sm:$0xff] %v404
  %553 = vst [vmem:[%s540 + $0x60] sm:$0xff] %v408
  %554 = vst [vmem:[%s540 + $0x68] sm:$0xff] %v410
  %555 = vst [vmem:[%s540 + $0x70] sm:$0xff] %v412
  %556 = vst [vmem:[%s540 + $0x78] sm:$0xff] %v414
  %557 = vst [vmem:[%s540 + $0x80] sm:$0xff] %v418
  %558 = vst [vmem:[%s540 + $0x88] sm:$0xff] %v420
  %559 = vst [vmem:[%s540 + $0x90] sm:$0xff] %v422
  %560 = vst [vmem:[%s540 + $0x98] sm:$0xff] %v424
  %561 = vst [vmem:[%s540 + $0xa0] sm:$0xff] %v428
  %562 = vst [vmem:[%s540 + $0xa8] sm:$0xff] %v430
  %563 = vst [vmem:[%s540 + $0xb0] sm:$0xff] %v432
  %564 = vst [vmem:[%s540 + $0xb8] sm:$0xff] %v434
  %565 = vst [vmem:[%s540 + $0xc0] sm:$0xff] %v438
  %566 = vst [vmem:[%s540 + $0xc8] sm:$0xff] %v440
  %567 = vst [vmem:[%s540 + $0xd0] sm:$0xff] %v442
  %568 = vst [vmem:[%s540 + $0xd8] sm:$0xff] %v444
  %569 = vst [vmem:[%s540 + $0xe0] sm:$0xff] %v448
  %570 = vst [vmem:[%s540 + $0xe8] sm:$0xff] %v450
  %571 = vst [vmem:[%s540 + $0xf0] sm:$0xff] %v452
  %572 = vst [vmem:[%s540 + $0xf8] sm:$0xff] %v454
  %573 = vst [vmem:[%s540 + $0x100] sm:$0xff] %v458
  %574 = vst [vmem:[%s540 + $0x108] sm:$0xff] %v460
  %575 = vst [vmem:[%s540 + $0x110] sm:$0xff] %v462
  %576 = vst [vmem:[%s540 + $0x118] sm:$0xff] %v464
  %577 = vst [vmem:[%s540 + $0x120] sm:$0xff] %v468
  %578 = vst [vmem:[%s540 + $0x128] sm:$0xff] %v470
  %579 = vst [vmem:[%s540 + $0x130] sm:$0xff] %v472
  %580 = vst [vmem:[%s540 + $0x138] sm:$0xff] %v474
  %581 = vst [vmem:[%s540 + $0x140] sm:$0xff] %v478
  %582 = vst [vmem:[%s540 + $0x148] sm:$0xff] %v480
  %583 = vst [vmem:[%s540 + $0x150] sm:$0xff] %v482
  %584 = vst [vmem:[%s540 + $0x158] sm:$0xff] %v484
  %585 = vst [vmem:[%s540 + $0x160] sm:$0xff] %v488
  %586 = vst [vmem:[%s540 + $0x168] sm:$0xff] %v490
  %587 = vst [vmem:[%s540 + $0x170] sm:$0xff] %v492
  %588 = vst [vmem:[%s540 + $0x178] sm:$0xff] %v494
  %589 = vst [vmem:[%s540 + $0x180] sm:$0xff] %v498
  %590 = vst [vmem:[%s540 + $0x188] sm:$0xff] %v500
  %591 = vst [vmem:[%s540 + $0x190] sm:$0xff] %v502
  %592 = vst [vmem:[%s540 + $0x198] sm:$0xff] %v504
  %593 = vst [vmem:[%s540 + $0x1a0] sm:$0xff] %v508
  %594 = vst [vmem:[%s540 + $0x1a8] sm:$0xff] %v510
  %595 = vst [vmem:[%s540 + $0x1b0] sm:$0xff] %v512
  %596 = vst [vmem:[%s540 + $0x1b8] sm:$0xff] %v514
  %597 = vst [vmem:[%s540 + $0x1c0] sm:$0xff] %v518
  %598 = vst [vmem:[%s540 + $0x1c8] sm:$0xff] %v520
  %599 = vst [vmem:[%s540 + $0x1d0] sm:$0xff] %v522
  %600 = vst [vmem:[%s540 + $0x1d8] sm:$0xff] %v524
  %601 = vst [vmem:[%s540 + $0x1e0] sm:$0xff] %v528
  %602 = vst [vmem:[%s540 + $0x1e8] sm:$0xff] %v530
  %603 = vst [vmem:[%s540 + $0x1f0] sm:$0xff] %v532
  %604 = vst [vmem:[%s540 + $0x1f8] sm:$0xff] %v534
  %v605 = vld [vmem:[%s2] sm:$0xff]
  %v606 = vld [vmem:[%s2 + $0x8] sm:$0xff]
  %v607 = vld [vmem:[%s2 + $0x10] sm:$0xff]
  %v608 = vld [vmem:[%s2 + $0x18] sm:$0xff]
  %v609 = vld [vmem:[%s2 + $0x20] sm:$0xff]
  %v610 = vld [vmem:[%s2 + $0x28] sm:$0xff]
  %v611 = vld [vmem:[%s2 + $0x30] sm:$0xff]
  %v612 = vld [vmem:[%s2 + $0x38] sm:$0xff]
  %v613 = vld [vmem:[%s2 + $0x40] sm:$0xff]
  %v614 = vld [vmem:[%s2 + $0x48] sm:$0xff]
  %v615 = vld [vmem:[%s2 + $0x50] sm:$0xff]
  %v616 = vld [vmem:[%s2 + $0x58] sm:$0xff]
  %v617 = vld [vmem:[%s2 + $0x60] sm:$0xff]
  %v618 = vld [vmem:[%s2 + $0x68] sm:$0xff]
  %v619 = vld [vmem:[%s2 + $0x70] sm:$0xff]
  %v620 = vld [vmem:[%s2 + $0x78] sm:$0xff]
  %v621 = vld [vmem:[%s2 + $0x80] sm:$0xff]
  %v622 = vld [vmem:[%s2 + $0x88] sm:$0xff]
  %v623 = vld [vmem:[%s2 + $0x90] sm:$0xff]
  %v624 = vld [vmem:[%s2 + $0x98] sm:$0xff]
  %v625 = vld [vmem:[%s2 + $0xa0] sm:$0xff]
  %v626 = vld [vmem:[%s2 + $0xa8] sm:$0xff]
  %v627 = vld [vmem:[%s2 + $0xb0] sm:$0xff]
  %v628 = vld [vmem:[%s2 + $0xb8] sm:$0xff]
  %v629 = vld [vmem:[%s2 + $0xc0] sm:$0xff]
  %v630 = vld [vmem:[%s2 + $0xc8] sm:$0xff]
  %v631 = vld [vmem:[%s2 + $0xd0] sm:$0xff]
  %v632 = vld [vmem:[%s2 + $0xd8] sm:$0xff]
  %v633 = vld [vmem:[%s2 + $0xe0] sm:$0xff]
  %v634 = vld [vmem:[%s2 + $0xe8] sm:$0xff]
  %v635 = vld [vmem:[%s2 + $0xf0] sm:$0xff]
  %v636 = vld [vmem:[%s2 + $0xf8] sm:$0xff]
  %s637 = scalar_lea.vmem %s3, %s537
  %v638 = vld [vmem:[%s637] sm:$0x3]
  %v639 = vlaneseq
  %v640 = vand.u32 %v639, 127
  %v641 = vadd.s32 %v640, 128
  %v642 = vstv %s536
  %v643 = vadd.s32 %v642, %v640
  %v644 = vadd.s32 %v642, %v641
  %645 = vset.pattern.permute.xlu0 0
  %646 = vperm.xlu0 %645, %v605
  %v647 = vpop.permute.xlu0 %646
  %648 = vset.pattern.permute.xlu0 0
  %649 = vperm.xlu0 %648, %v606
  %v650 = vpop.permute.xlu0 %649
  %651 = vset.pattern.permute.xlu0 0
  %652 = vperm.xlu0 %651, %v607
  %v653 = vpop.permute.xlu0 %652
  %654 = vset.pattern.permute.xlu0 0
  %655 = vperm.xlu0 %654, %v608
  %v656 = vpop.permute.xlu0 %655
  %657 = vset.pattern.permute.xlu0 0
  %658 = vperm.xlu0 %657, %v609
  %v659 = vpop.permute.xlu0 %658
  %660 = vset.pattern.permute.xlu0 0
  %661 = vperm.xlu0 %660, %v610
  %v662 = vpop.permute.xlu0 %661
  %663 = vset.pattern.permute.xlu0 0
  %664 = vperm.xlu0 %663, %v611
  %v665 = vpop.permute.xlu0 %664
  %666 = vset.pattern.permute.xlu0 0
  %667 = vperm.xlu0 %666, %v612
  %v668 = vpop.permute.xlu0 %667
  %669 = vset.pattern.permute.xlu0 0
  %670 = vperm.xlu0 %669, %v613
  %v671 = vpop.permute.xlu0 %670
  %672 = vset.pattern.permute.xlu0 0
  %673 = vperm.xlu0 %672, %v614
  %v674 = vpop.permute.xlu0 %673
  %675 = vset.pattern.permute.xlu0 0
  %676 = vperm.xlu0 %675, %v615
  %v677 = vpop.permute.xlu0 %676
  %678 = vset.pattern.permute.xlu0 0
  %679 = vperm.xlu0 %678, %v616
  %v680 = vpop.permute.xlu0 %679
  %681 = vset.pattern.permute.xlu0 0
  %682 = vperm.xlu0 %681, %v617
  %v683 = vpop.permute.xlu0 %682
  %684 = vset.pattern.permute.xlu0 0
  %685 = vperm.xlu0 %684, %v618
  %v686 = vpop.permute.xlu0 %685
  %687 = vset.pattern.permute.xlu0 0
  %688 = vperm.xlu0 %687, %v619
  %v689 = vpop.permute.xlu0 %688
  %690 = vset.pattern.permute.xlu0 0
  %691 = vperm.xlu0 %690, %v620
  %v692 = vpop.permute.xlu0 %691
  %693 = vset.pattern.permute.xlu0 0
  %694 = vperm.xlu0 %693, %v621
  %v695 = vpop.permute.xlu0 %694
  %696 = vset.pattern.permute.xlu0 0
  %697 = vperm.xlu0 %696, %v622
  %v698 = vpop.permute.xlu0 %697
  %699 = vset.pattern.permute.xlu0 0
  %700 = vperm.xlu0 %699, %v623
  %v701 = vpop.permute.xlu0 %700
  %702 = vset.pattern.permute.xlu0 0
  %703 = vperm.xlu0 %702, %v624
  %v704 = vpop.permute.xlu0 %703
  %705 = vset.pattern.permute.xlu0 0
  %706 = vperm.xlu0 %705, %v625
  %v707 = vpop.permute.xlu0 %706
  %708 = vset.pattern.permute.xlu0 0
  %709 = vperm.xlu0 %708, %v626
  %v710 = vpop.permute.xlu0 %709
  %711 = vset.pattern.permute.xlu0 0
  %712 = vperm.xlu0 %711, %v627
  %v713 = vpop.permute.xlu0 %712
  %714 = vset.pattern.permute.xlu0 0
  %715 = vperm.xlu0 %714, %v628
  %v716 = vpop.permute.xlu0 %715
  %717 = vset.pattern.permute.xlu0 0
  %718 = vperm.xlu0 %717, %v629
  %v719 = vpop.permute.xlu0 %718
  %720 = vset.pattern.permute.xlu0 0
  %721 = vperm.xlu0 %720, %v630
  %v722 = vpop.permute.xlu0 %721
  %723 = vset.pattern.permute.xlu0 0
  %724 = vperm.xlu0 %723, %v631
  %v725 = vpop.permute.xlu0 %724
  %726 = vset.pattern.permute.xlu0 0
  %727 = vperm.xlu0 %726, %v632
  %v728 = vpop.permute.xlu0 %727
  %729 = vset.pattern.permute.xlu0 0
  %730 = vperm.xlu0 %729, %v633
  %v731 = vpop.permute.xlu0 %730
  %732 = vset.pattern.permute.xlu0 0
  %733 = vperm.xlu0 %732, %v634
  %v734 = vpop.permute.xlu0 %733
  %735 = vset.pattern.permute.xlu0 0
  %736 = vperm.xlu0 %735, %v635
  %v737 = vpop.permute.xlu0 %736
  %738 = vset.pattern.permute.xlu0 0
  %739 = vperm.xlu0 %738, %v636
  %v740 = vpop.permute.xlu0 %739
  %v741 = vlaneseq
  %v742 = vshrl.u32 %v741, 7
  %v743 = vsub.s32 0, %v742
  %v744 = vrot.slane %v638, %v743
  %v745 = vlaneseq
  %v746 = vshrl.u32 %v745, 7
  %v747 = vsub.s32 1, %v746
  %v748 = vrot.slane %v638, %v747
  %vm749 = vcmp.ne.s32.totalorder %v647, %v744
  %vm750 = vcmp.ne.s32.totalorder %v647, %v748
  %vm751 = vcmp.ne.s32.totalorder %v650, %v744
  %vm752 = vcmp.ne.s32.totalorder %v650, %v748
  %vm753 = vcmp.ne.s32.totalorder %v653, %v744
  %vm754 = vcmp.ne.s32.totalorder %v653, %v748
  %vm755 = vcmp.ne.s32.totalorder %v656, %v744
  %vm756 = vcmp.ne.s32.totalorder %v656, %v748
  %vm757 = vcmp.ne.s32.totalorder %v659, %v744
  %vm758 = vcmp.ne.s32.totalorder %v659, %v748
  %vm759 = vcmp.ne.s32.totalorder %v662, %v744
  %vm760 = vcmp.ne.s32.totalorder %v662, %v748
  %vm761 = vcmp.ne.s32.totalorder %v665, %v744
  %vm762 = vcmp.ne.s32.totalorder %v665, %v748
  %vm763 = vcmp.ne.s32.totalorder %v668, %v744
  %vm764 = vcmp.ne.s32.totalorder %v668, %v748
  %vm765 = vcmp.ne.s32.totalorder %v671, %v744
  %vm766 = vcmp.ne.s32.totalorder %v671, %v748
  %vm767 = vcmp.ne.s32.totalorder %v674, %v744
  %vm768 = vcmp.ne.s32.totalorder %v674, %v748
  %vm769 = vcmp.ne.s32.totalorder %v677, %v744
  %vm770 = vcmp.ne.s32.totalorder %v677, %v748
  %vm771 = vcmp.ne.s32.totalorder %v680, %v744
  %vm772 = vcmp.ne.s32.totalorder %v680, %v748
  %vm773 = vcmp.ne.s32.totalorder %v683, %v744
  %vm774 = vcmp.ne.s32.totalorder %v683, %v748
  %vm775 = vcmp.ne.s32.totalorder %v686, %v744
  %vm776 = vcmp.ne.s32.totalorder %v686, %v748
  %vm777 = vcmp.ne.s32.totalorder %v689, %v744
  %vm778 = vcmp.ne.s32.totalorder %v689, %v748
  %vm779 = vcmp.ne.s32.totalorder %v692, %v744
  %vm780 = vcmp.ne.s32.totalorder %v692, %v748
  %vm781 = vcmp.ne.s32.totalorder %v695, %v744
  %vm782 = vcmp.ne.s32.totalorder %v695, %v748
  %vm783 = vcmp.ne.s32.totalorder %v698, %v744
  %vm784 = vcmp.ne.s32.totalorder %v698, %v748
  %vm785 = vcmp.ne.s32.totalorder %v701, %v744
  %vm786 = vcmp.ne.s32.totalorder %v701, %v748
  %vm787 = vcmp.ne.s32.totalorder %v704, %v744
  %vm788 = vcmp.ne.s32.totalorder %v704, %v748
  %vm789 = vcmp.ne.s32.totalorder %v707, %v744
  %vm790 = vcmp.ne.s32.totalorder %v707, %v748
  %vm791 = vcmp.ne.s32.totalorder %v710, %v744
  %vm792 = vcmp.ne.s32.totalorder %v710, %v748
  %vm793 = vcmp.ne.s32.totalorder %v713, %v744
  %vm794 = vcmp.ne.s32.totalorder %v713, %v748
  %vm795 = vcmp.ne.s32.totalorder %v716, %v744
  %vm796 = vcmp.ne.s32.totalorder %v716, %v748
  %vm797 = vcmp.ne.s32.totalorder %v719, %v744
  %vm798 = vcmp.ne.s32.totalorder %v719, %v748
  %vm799 = vcmp.ne.s32.totalorder %v722, %v744
  %vm800 = vcmp.ne.s32.totalorder %v722, %v748
  %vm801 = vcmp.ne.s32.totalorder %v725, %v744
  %vm802 = vcmp.ne.s32.totalorder %v725, %v748
  %vm803 = vcmp.ne.s32.totalorder %v728, %v744
  %vm804 = vcmp.ne.s32.totalorder %v728, %v748
  %vm805 = vcmp.ne.s32.totalorder %v731, %v744
  %vm806 = vcmp.ne.s32.totalorder %v731, %v748
  %vm807 = vcmp.ne.s32.totalorder %v734, %v744
  %vm808 = vcmp.ne.s32.totalorder %v734, %v748
  %vm809 = vcmp.ne.s32.totalorder %v737, %v744
  %vm810 = vcmp.ne.s32.totalorder %v737, %v748
  %vm811 = vcmp.ne.s32.totalorder %v740, %v744
  %vm812 = vcmp.ne.s32.totalorder %v740, %v748
  %vm813 = vcmp.lt.s32.totalorder %v643, 8
  %vm814 = vcmp.lt.s32.totalorder %v644, 8
  %vm815 = vmand %vm749, %vm813
  %vm816 = vmand %vm750, %vm814
  %vm817 = vmand %vm751, %vm813
  %vm818 = vmand %vm752, %vm814
  %vm819 = vmand %vm753, %vm813
  %vm820 = vmand %vm754, %vm814
  %vm821 = vmand %vm755, %vm813
  %vm822 = vmand %vm756, %vm814
  %vm823 = vmand %vm757, %vm813
  %vm824 = vmand %vm758, %vm814
  %vm825 = vmand %vm759, %vm813
  %vm826 = vmand %vm760, %vm814
  %vm827 = vmand %vm761, %vm813
  %vm828 = vmand %vm762, %vm814
  %vm829 = vmand %vm763, %vm813
  %vm830 = vmand %vm764, %vm814
  %vm831 = vmand %vm765, %vm813
  %vm832 = vmand %vm766, %vm814
  %vm833 = vmand %vm767, %vm813
  %vm834 = vmand %vm768, %vm814
  %vm835 = vmand %vm769, %vm813
  %vm836 = vmand %vm770, %vm814
  %vm837 = vmand %vm771, %vm813
  %vm838 = vmand %vm772, %vm814
  %vm839 = vmand %vm773, %vm813
  %vm840 = vmand %vm774, %vm814
  %vm841 = vmand %vm775, %vm813
  %vm842 = vmand %vm776, %vm814
  %vm843 = vmand %vm777, %vm813
  %vm844 = vmand %vm778, %vm814
  %vm845 = vmand %vm779, %vm813
  %vm846 = vmand %vm780, %vm814
  %vm847 = vmand %vm781, %vm813
  %vm848 = vmand %vm782, %vm814
  %vm849 = vmand %vm783, %vm813
  %vm850 = vmand %vm784, %vm814
  %vm851 = vmand %vm785, %vm813
  %vm852 = vmand %vm786, %vm814
  %vm853 = vmand %vm787, %vm813
  %vm854 = vmand %vm788, %vm814
  %vm855 = vmand %vm789, %vm813
  %vm856 = vmand %vm790, %vm814
  %vm857 = vmand %vm791, %vm813
  %vm858 = vmand %vm792, %vm814
  %vm859 = vmand %vm793, %vm813
  %vm860 = vmand %vm794, %vm814
  %vm861 = vmand %vm795, %vm813
  %vm862 = vmand %vm796, %vm814
  %vm863 = vmand %vm797, %vm813
  %vm864 = vmand %vm798, %vm814
  %vm865 = vmand %vm799, %vm813
  %vm866 = vmand %vm800, %vm814
  %vm867 = vmand %vm801, %vm813
  %vm868 = vmand %vm802, %vm814
  %vm869 = vmand %vm803, %vm813
  %vm870 = vmand %vm804, %vm814
  %vm871 = vmand %vm805, %vm813
  %vm872 = vmand %vm806, %vm814
  %vm873 = vmand %vm807, %vm813
  %vm874 = vmand %vm808, %vm814
  %vm875 = vmand %vm809, %vm813
  %vm876 = vmand %vm810, %vm814
  %vm877 = vmand %vm811, %vm813
  %vm878 = vmand %vm812, %vm814
  %v879 = vsel %vm815, %v378, -1e+30
  %v880 = vsel %vm816, %v380, -1e+30
  %v881 = vsel %vm817, %v382, -1e+30
  %v882 = vsel %vm818, %v384, -1e+30
  %v883 = vsel %vm819, %v388, -1e+30
  %v884 = vsel %vm820, %v390, -1e+30
  %v885 = vsel %vm821, %v392, -1e+30
  %v886 = vsel %vm822, %v394, -1e+30
  %v887 = vsel %vm823, %v398, -1e+30
  %v888 = vsel %vm824, %v400, -1e+30
  %v889 = vsel %vm825, %v402, -1e+30
  %v890 = vsel %vm826, %v404, -1e+30
  %v891 = vsel %vm827, %v408, -1e+30
  %v892 = vsel %vm828, %v410, -1e+30
  %v893 = vsel %vm829, %v412, -1e+30
  %v894 = vsel %vm830, %v414, -1e+30
  %v895 = vsel %vm831, %v418, -1e+30
  %v896 = vsel %vm832, %v420, -1e+30
  %v897 = vsel %vm833, %v422, -1e+30
  %v898 = vsel %vm834, %v424, -1e+30
  %v899 = vsel %vm835, %v428, -1e+30
  %v900 = vsel %vm836, %v430, -1e+30
  %v901 = vsel %vm837, %v432, -1e+30
  %v902 = vsel %vm838, %v434, -1e+30
  %v903 = vsel %vm839, %v438, -1e+30
  %v904 = vsel %vm840, %v440, -1e+30
  %v905 = vsel %vm841, %v442, -1e+30
  %v906 = vsel %vm842, %v444, -1e+30
  %v907 = vsel %vm843, %v448, -1e+30
  %v908 = vsel %vm844, %v450, -1e+30
  %v909 = vsel %vm845, %v452, -1e+30
  %v910 = vsel %vm846, %v454, -1e+30
  %v911 = vsel %vm847, %v458, -1e+30
  %v912 = vsel %vm848, %v460, -1e+30
  %v913 = vsel %vm849, %v462, -1e+30
  %v914 = vsel %vm850, %v464, -1e+30
  %v915 = vsel %vm851, %v468, -1e+30
  %v916 = vsel %vm852, %v470, -1e+30
  %v917 = vsel %vm853, %v472, -1e+30
  %v918 = vsel %vm854, %v474, -1e+30
  %v919 = vsel %vm855, %v478, -1e+30
  %v920 = vsel %vm856, %v480, -1e+30
  %v921 = vsel %vm857, %v482, -1e+30
  %v922 = vsel %vm858, %v484, -1e+30
  %v923 = vsel %vm859, %v488, -1e+30
  %v924 = vsel %vm860, %v490, -1e+30
  %v925 = vsel %vm861, %v492, -1e+30
  %v926 = vsel %vm862, %v494, -1e+30
  %v927 = vsel %vm863, %v498, -1e+30
  %v928 = vsel %vm864, %v500, -1e+30
  %v929 = vsel %vm865, %v502, -1e+30
  %v930 = vsel %vm866, %v504, -1e+30
  %v931 = vsel %vm867, %v508, -1e+30
  %v932 = vsel %vm868, %v510, -1e+30
  %v933 = vsel %vm869, %v512, -1e+30
  %v934 = vsel %vm870, %v514, -1e+30
  %v935 = vsel %vm871, %v518, -1e+30
  %v936 = vsel %vm872, %v520, -1e+30
  %v937 = vsel %vm873, %v522, -1e+30
  %v938 = vsel %vm874, %v524, -1e+30
  %v939 = vsel %vm875, %v528, -1e+30
  %v940 = vsel %vm876, %v530, -1e+30
  %v941 = vsel %vm877, %v532, -1e+30
  %v942 = vsel %vm878, %v534, -1e+30
  %v943 = vld [vmem:[#allocation2] sm:$0xff]
  %v944 = vld [vmem:[#allocation2 + $0x8] sm:$0xff]
  %v945 = vld [vmem:[#allocation2 + $0x10] sm:$0xff]
  %v946 = vld [vmem:[#allocation2 + $0x18] sm:$0xff]
  %v947 = vld [vmem:[#allocation2 + $0x20] sm:$0xff]
  %v948 = vld [vmem:[#allocation2 + $0x28] sm:$0xff]
  %v949 = vld [vmem:[#allocation2 + $0x30] sm:$0xff]
  %v950 = vld [vmem:[#allocation2 + $0x38] sm:$0xff]
  %v951 = vld [vmem:[#allocation2 + $0x40] sm:$0xff]
  %v952 = vld [vmem:[#allocation2 + $0x48] sm:$0xff]
  %v953 = vld [vmem:[#allocation2 + $0x50] sm:$0xff]
  %v954 = vld [vmem:[#allocation2 + $0x58] sm:$0xff]
  %v955 = vld [vmem:[#allocation2 + $0x60] sm:$0xff]
  %v956 = vld [vmem:[#allocation2 + $0x68] sm:$0xff]
  %v957 = vld [vmem:[#allocation2 + $0x70] sm:$0xff]
  %v958 = vld [vmem:[#allocation2 + $0x78] sm:$0xff]
  %v959 = vld [vmem:[#allocation2 + $0x80] sm:$0xff]
  %v960 = vld [vmem:[#allocation2 + $0x88] sm:$0xff]
  %v961 = vld [vmem:[#allocation2 + $0x90] sm:$0xff]
  %v962 = vld [vmem:[#allocation2 + $0x98] sm:$0xff]
  %v963 = vld [vmem:[#allocation2 + $0xa0] sm:$0xff]
  %v964 = vld [vmem:[#allocation2 + $0xa8] sm:$0xff]
  %v965 = vld [vmem:[#allocation2 + $0xb0] sm:$0xff]
  %v966 = vld [vmem:[#allocation2 + $0xb8] sm:$0xff]
  %v967 = vld [vmem:[#allocation2 + $0xc0] sm:$0xff]
  %v968 = vld [vmem:[#allocation2 + $0xc8] sm:$0xff]
  %v969 = vld [vmem:[#allocation2 + $0xd0] sm:$0xff]
  %v970 = vld [vmem:[#allocation2 + $0xd8] sm:$0xff]
  %v971 = vld [vmem:[#allocation2 + $0xe0] sm:$0xff]
  %v972 = vld [vmem:[#allocation2 + $0xe8] sm:$0xff]
  %v973 = vld [vmem:[#allocation2 + $0xf0] sm:$0xff]
  %v974 = vld [vmem:[#allocation2 + $0xf8] sm:$0xff]
  %v975 = vmax.f32 %v879, %v880
  %976 = vmax.xlane.f32.xlu0 %v975
  %v977 = vpop.xlane.xlu0 %976
  %v978 = vmax.f32 %v881, %v882
  %979 = vmax.xlane.f32.xlu0 %v978
  %v980 = vpop.xlane.xlu0 %979
  %v981 = vmax.f32 %v883, %v884
  %982 = vmax.xlane.f32.xlu0 %v981
  %v983 = vpop.xlane.xlu0 %982
  %v984 = vmax.f32 %v885, %v886
  %985 = vmax.xlane.f32.xlu0 %v984
  %v986 = vpop.xlane.xlu0 %985
  %v987 = vmax.f32 %v887, %v888
  %988 = vmax.xlane.f32.xlu0 %v987
  %v989 = vpop.xlane.xlu0 %988
  %v990 = vmax.f32 %v889, %v890
  %991 = vmax.xlane.f32.xlu0 %v990
  %v992 = vpop.xlane.xlu0 %991
  %v993 = vmax.f32 %v891, %v892
  %994 = vmax.xlane.f32.xlu0 %v993
  %v995 = vpop.xlane.xlu0 %994
  %v996 = vmax.f32 %v893, %v894
  %997 = vmax.xlane.f32.xlu0 %v996
  %v998 = vpop.xlane.xlu0 %997
  %v999 = vmax.f32 %v895, %v896
  %1000 = vmax.xlane.f32.xlu0 %v999
  %v1001 = vpop.xlane.xlu0 %1000
  %v1002 = vmax.f32 %v897, %v898
  %1003 = vmax.xlane.f32.xlu0 %v1002
  %v1004 = vpop.xlane.xlu0 %1003
  %v1005 = vmax.f32 %v899, %v900
  %1006 = vmax.xlane.f32.xlu0 %v1005
  %v1007 = vpop.xlane.xlu0 %1006
  %v1008 = vmax.f32 %v901, %v902
  %1009 = vmax.xlane.f32.xlu0 %v1008
  %v1010 = vpop.xlane.xlu0 %1009
  %v1011 = vmax.f32 %v903, %v904
  %1012 = vmax.xlane.f32.xlu0 %v1011
  %v1013 = vpop.xlane.xlu0 %1012
  %v1014 = vmax.f32 %v905, %v906
  %1015 = vmax.xlane.f32.xlu0 %v1014
  %v1016 = vpop.xlane.xlu0 %1015
  %v1017 = vmax.f32 %v907, %v908
  %1018 = vmax.xlane.f32.xlu0 %v1017
  %v1019 = vpop.xlane.xlu0 %1018
  %v1020 = vmax.f32 %v909, %v910
  %1021 = vmax.xlane.f32.xlu0 %v1020
  %v1022 = vpop.xlane.xlu0 %1021
  %v1023 = vmax.f32 %v911, %v912
  %1024 = vmax.xlane.f32.xlu0 %v1023
  %v1025 = vpop.xlane.xlu0 %1024
  %v1026 = vmax.f32 %v913, %v914
  %1027 = vmax.xlane.f32.xlu0 %v1026
  %v1028 = vpop.xlane.xlu0 %1027
  %v1029 = vmax.f32 %v915, %v916
  %1030 = vmax.xlane.f32.xlu0 %v1029
  %v1031 = vpop.xlane.xlu0 %1030
  %v1032 = vmax.f32 %v917, %v918
  %1033 = vmax.xlane.f32.xlu0 %v1032
  %v1034 = vpop.xlane.xlu0 %1033
  %v1035 = vmax.f32 %v919, %v920
  %1036 = vmax.xlane.f32.xlu0 %v1035
  %v1037 = vpop.xlane.xlu0 %1036
  %v1038 = vmax.f32 %v921, %v922
  %1039 = vmax.xlane.f32.xlu0 %v1038
  %v1040 = vpop.xlane.xlu0 %1039
  %v1041 = vmax.f32 %v923, %v924
  %1042 = vmax.xlane.f32.xlu0 %v1041
  %v1043 = vpop.xlane.xlu0 %1042
  %v1044 = vmax.f32 %v925, %v926
  %1045 = vmax.xlane.f32.xlu0 %v1044
  %v1046 = vpop.xlane.xlu0 %1045
  %v1047 = vmax.f32 %v927, %v928
  %1048 = vmax.xlane.f32.xlu0 %v1047
  %v1049 = vpop.xlane.xlu0 %1048
  %v1050 = vmax.f32 %v929, %v930
  %1051 = vmax.xlane.f32.xlu0 %v1050
  %v1052 = vpop.xlane.xlu0 %1051
  %v1053 = vmax.f32 %v931, %v932
  %1054 = vmax.xlane.f32.xlu0 %v1053
  %v1055 = vpop.xlane.xlu0 %1054
  %v1056 = vmax.f32 %v933, %v934
  %1057 = vmax.xlane.f32.xlu0 %v1056
  %v1058 = vpop.xlane.xlu0 %1057
  %v1059 = vmax.f32 %v935, %v936
  %1060 = vmax.xlane.f32.xlu0 %v1059
  %v1061 = vpop.xlane.xlu0 %1060
  %v1062 = vmax.f32 %v937, %v938
  %1063 = vmax.xlane.f32.xlu0 %v1062
  %v1064 = vpop.xlane.xlu0 %1063
  %v1065 = vmax.f32 %v939, %v940
  %1066 = vmax.xlane.f32.xlu0 %v1065
  %v1067 = vpop.xlane.xlu0 %1066
  %v1068 = vmax.f32 %v941, %v942
  %1069 = vmax.xlane.f32.xlu0 %v1068
  %v1070 = vpop.xlane.xlu0 %1069
  %v1071 = vmax.f32 %v943, %v977
  %v1072 = vmax.f32 %v944, %v980
  %v1073 = vmax.f32 %v945, %v983
  %v1074 = vmax.f32 %v946, %v986
  %v1075 = vmax.f32 %v947, %v989
  %v1076 = vmax.f32 %v948, %v992
  %v1077 = vmax.f32 %v949, %v995
  %v1078 = vmax.f32 %v950, %v998
  %v1079 = vmax.f32 %v951, %v1001
  %v1080 = vmax.f32 %v952, %v1004
  %v1081 = vmax.f32 %v953, %v1007
  %v1082 = vmax.f32 %v954, %v1010
  %v1083 = vmax.f32 %v955, %v1013
  %v1084 = vmax.f32 %v956, %v1016
  %v1085 = vmax.f32 %v957, %v1019
  %v1086 = vmax.f32 %v958, %v1022
  %v1087 = vmax.f32 %v959, %v1025
  %v1088 = vmax.f32 %v960, %v1028
  %v1089 = vmax.f32 %v961, %v1031
  %v1090 = vmax.f32 %v962, %v1034
  %v1091 = vmax.f32 %v963, %v1037
  %v1092 = vmax.f32 %v964, %v1040
  %v1093 = vmax.f32 %v965, %v1043
  %v1094 = vmax.f32 %v966, %v1046
  %v1095 = vmax.f32 %v967, %v1049
  %v1096 = vmax.f32 %v968, %v1052
  %v1097 = vmax.f32 %v969, %v1055
  %v1098 = vmax.f32 %v970, %v1058
  %v1099 = vmax.f32 %v971, %v1061
  %v1100 = vmax.f32 %v972, %v1064
  %v1101 = vmax.f32 %v973, %v1067
  %v1102 = vmax.f32 %v974, %v1070
  %v1103 = vld [vmem:[#allocation3] sm:$0xff]
  %v1104 = vld [vmem:[#allocation3 + $0x8] sm:$0xff]
  %v1105 = vld [vmem:[#allocation3 + $0x10] sm:$0xff]
  %v1106 = vld [vmem:[#allocation3 + $0x18] sm:$0xff]
  %v1107 = vld [vmem:[#allocation3 + $0x20] sm:$0xff]
  %v1108 = vld [vmem:[#allocation3 + $0x28] sm:$0xff]
  %v1109 = vld [vmem:[#allocation3 + $0x30] sm:$0xff]
  %v1110 = vld [vmem:[#allocation3 + $0x38] sm:$0xff]
  %v1111 = vld [vmem:[#allocation3 + $0x40] sm:$0xff]
  %v1112 = vld [vmem:[#allocation3 + $0x48] sm:$0xff]
  %v1113 = vld [vmem:[#allocation3 + $0x50] sm:$0xff]
  %v1114 = vld [vmem:[#allocation3 + $0x58] sm:$0xff]
  %v1115 = vld [vmem:[#allocation3 + $0x60] sm:$0xff]
  %v1116 = vld [vmem:[#allocation3 + $0x68] sm:$0xff]
  %v1117 = vld [vmem:[#allocation3 + $0x70] sm:$0xff]
  %v1118 = vld [vmem:[#allocation3 + $0x78] sm:$0xff]
  %v1119 = vld [vmem:[#allocation3 + $0x80] sm:$0xff]
  %v1120 = vld [vmem:[#allocation3 + $0x88] sm:$0xff]
  %v1121 = vld [vmem:[#allocation3 + $0x90] sm:$0xff]
  %v1122 = vld [vmem:[#allocation3 + $0x98] sm:$0xff]
  %v1123 = vld [vmem:[#allocation3 + $0xa0] sm:$0xff]
  %v1124 = vld [vmem:[#allocation3 + $0xa8] sm:$0xff]
  %v1125 = vld [vmem:[#allocation3 + $0xb0] sm:$0xff]
  %v1126 = vld [vmem:[#allocation3 + $0xb8] sm:$0xff]
  %v1127 = vld [vmem:[#allocation3 + $0xc0] sm:$0xff]
  %v1128 = vld [vmem:[#allocation3 + $0xc8] sm:$0xff]
  %v1129 = vld [vmem:[#allocation3 + $0xd0] sm:$0xff]
  %v1130 = vld [vmem:[#allocation3 + $0xd8] sm:$0xff]
  %v1131 = vld [vmem:[#allocation3 + $0xe0] sm:$0xff]
  %v1132 = vld [vmem:[#allocation3 + $0xe8] sm:$0xff]
  %v1133 = vld [vmem:[#allocation3 + $0xf0] sm:$0xff]
  %v1134 = vld [vmem:[#allocation3 + $0xf8] sm:$0xff]
  %v1135 = vsub.f32 %v943, %v1071
  %v1136 = vsub.f32 %v944, %v1072
  %v1137 = vsub.f32 %v945, %v1073
  %v1138 = vsub.f32 %v946, %v1074
  %v1139 = vsub.f32 %v947, %v1075
  %v1140 = vsub.f32 %v948, %v1076
  %v1141 = vsub.f32 %v949, %v1077
  %v1142 = vsub.f32 %v950, %v1078
  %v1143 = vsub.f32 %v951, %v1079
  %v1144 = vsub.f32 %v952, %v1080
  %v1145 = vsub.f32 %v953, %v1081
  %v1146 = vsub.f32 %v954, %v1082
  %v1147 = vsub.f32 %v955, %v1083
  %v1148 = vsub.f32 %v956, %v1084
  %v1149 = vsub.f32 %v957, %v1085
  %v1150 = vsub.f32 %v958, %v1086
  %v1151 = vsub.f32 %v959, %v1087
  %v1152 = vsub.f32 %v960, %v1088
  %v1153 = vsub.f32 %v961, %v1089
  %v1154 = vsub.f32 %v962, %v1090
  %v1155 = vsub.f32 %v963, %v1091
  %v1156 = vsub.f32 %v964, %v1092
  %v1157 = vsub.f32 %v965, %v1093
  %v1158 = vsub.f32 %v966, %v1094
  %v1159 = vsub.f32 %v967, %v1095
  %v1160 = vsub.f32 %v968, %v1096
  %v1161 = vsub.f32 %v969, %v1097
  %v1162 = vsub.f32 %v970, %v1098
  %v1163 = vsub.f32 %v971, %v1099
  %v1164 = vsub.f32 %v972, %v1100
  %v1165 = vsub.f32 %v973, %v1101
  %v1166 = vsub.f32 %v974, %v1102
  %v1167 = vmul.f32 %v1135, 1.442695
  %v1168 = vpow.pop %v1167
  %v1169 = vmul.f32 %v1136, 1.442695
  %v1170 = vpow.pop %v1169
  %v1171 = vmul.f32 %v1137, 1.442695
  %v1172 = vpow.pop %v1171
  %v1173 = vmul.f32 %v1138, 1.442695
  %v1174 = vpow.pop %v1173
  %v1175 = vmul.f32 %v1139, 1.442695
  %v1176 = vpow.pop %v1175
  %v1177 = vmul.f32 %v1140, 1.442695
  %v1178 = vpow.pop %v1177
  %v1179 = vmul.f32 %v1141, 1.442695
  %v1180 = vpow.pop %v1179
  %v1181 = vmul.f32 %v1142, 1.442695
  %v1182 = vpow.pop %v1181
  %v1183 = vmul.f32 %v1143, 1.442695
  %v1184 = vpow.pop %v1183
  %v1185 = vmul.f32 %v1144, 1.442695
  %v1186 = vpow.pop %v1185
  %v1187 = vmul.f32 %v1145, 1.442695
  %v1188 = vpow.pop %v1187
  %v1189 = vmul.f32 %v1146, 1.442695
  %v1190 = vpow.pop %v1189
  %v1191 = vmul.f32 %v1147, 1.442695
  %v1192 = vpow.pop %v1191
  %v1193 = vmul.f32 %v1148, 1.442695
  %v1194 = vpow.pop %v1193
  %v1195 = vmul.f32 %v1149, 1.442695
  %v1196 = vpow.pop %v1195
  %v1197 = vmul.f32 %v1150, 1.442695
  %v1198 = vpow.pop %v1197
  %v1199 = vmul.f32 %v1151, 1.442695
  %v1200 = vpow.pop %v1199
  %v1201 = vmul.f32 %v1152, 1.442695
  %v1202 = vpow.pop %v1201
  %v1203 = vmul.f32 %v1153, 1.442695
  %v1204 = vpow.pop %v1203
  %v1205 = vmul.f32 %v1154, 1.442695
  %v1206 = vpow.pop %v1205
  %v1207 = vmul.f32 %v1155, 1.442695
  %v1208 = vpow.pop %v1207
  %v1209 = vmul.f32 %v1156, 1.442695
  %v1210 = vpow.pop %v1209
  %v1211 = vmul.f32 %v1157, 1.442695
  %v1212 = vpow.pop %v1211
  %v1213 = vmul.f32 %v1158, 1.442695
  %v1214 = vpow.pop %v1213
  %v1215 = vmul.f32 %v1159, 1.442695
  %v1216 = vpow.pop %v1215
  %v1217 = vmul.f32 %v1160, 1.442695
  %v1218 = vpow.pop %v1217
  %v1219 = vmul.f32 %v1161, 1.442695
  %v1220 = vpow.pop %v1219
  %v1221 = vmul.f32 %v1162, 1.442695
  %v1222 = vpow.pop %v1221
  %v1223 = vmul.f32 %v1163, 1.442695
  %v1224 = vpow.pop %v1223
  %v1225 = vmul.f32 %v1164, 1.442695
  %v1226 = vpow.pop %v1225
  %v1227 = vmul.f32 %v1165, 1.442695
  %v1228 = vpow.pop %v1227
  %v1229 = vmul.f32 %v1166, 1.442695
  %v1230 = vpow.pop %v1229
  %v1231 = vmul.f32 %v1103, %v1168
  %v1232 = vmul.f32 %v1104, %v1170
  %v1233 = vmul.f32 %v1105, %v1172
  %v1234 = vmul.f32 %v1106, %v1174
  %v1235 = vmul.f32 %v1107, %v1176
  %v1236 = vmul.f32 %v1108, %v1178
  %v1237 = vmul.f32 %v1109, %v1180
  %v1238 = vmul.f32 %v1110, %v1182
  %v1239 = vmul.f32 %v1111, %v1184
  %v1240 = vmul.f32 %v1112, %v1186
  %v1241 = vmul.f32 %v1113, %v1188
  %v1242 = vmul.f32 %v1114, %v1190
  %v1243 = vmul.f32 %v1115, %v1192
  %v1244 = vmul.f32 %v1116, %v1194
  %v1245 = vmul.f32 %v1117, %v1196
  %v1246 = vmul.f32 %v1118, %v1198
  %v1247 = vmul.f32 %v1119, %v1200
  %v1248 = vmul.f32 %v1120, %v1202
  %v1249 = vmul.f32 %v1121, %v1204
  %v1250 = vmul.f32 %v1122, %v1206
  %v1251 = vmul.f32 %v1123, %v1208
  %v1252 = vmul.f32 %v1124, %v1210
  %v1253 = vmul.f32 %v1125, %v1212
  %v1254 = vmul.f32 %v1126, %v1214
  %v1255 = vmul.f32 %v1127, %v1216
  %v1256 = vmul.f32 %v1128, %v1218
  %v1257 = vmul.f32 %v1129, %v1220
  %v1258 = vmul.f32 %v1130, %v1222
  %v1259 = vmul.f32 %v1131, %v1224
  %v1260 = vmul.f32 %v1132, %v1226
  %v1261 = vmul.f32 %v1133, %v1228
  %v1262 = vmul.f32 %v1134, %v1230
  %1264 = vset.pattern.permute.xlu0 0
  %1265 = vperm.xlu0 %1264, %v1071
  %v1266 = vpop.permute.xlu0 %1265
  %1269 = vset.pattern.permute.xlu0 0
  %1270 = vperm.xlu0 %1269, %v1072
  %v1271 = vpop.permute.xlu0 %1270
  %1274 = vset.pattern.permute.xlu0 0
  %1275 = vperm.xlu0 %1274, %v1073
  %v1276 = vpop.permute.xlu0 %1275
  %1279 = vset.pattern.permute.xlu0 0
  %1280 = vperm.xlu0 %1279, %v1074
  %v1281 = vpop.permute.xlu0 %1280
  %1284 = vset.pattern.permute.xlu0 0
  %1285 = vperm.xlu0 %1284, %v1075
  %v1286 = vpop.permute.xlu0 %1285
  %1289 = vset.pattern.permute.xlu0 0
  %1290 = vperm.xlu0 %1289, %v1076
  %v1291 = vpop.permute.xlu0 %1290
  %1294 = vset.pattern.permute.xlu0 0
  %1295 = vperm.xlu0 %1294, %v1077
  %v1296 = vpop.permute.xlu0 %1295
  %1299 = vset.pattern.permute.xlu0 0
  %1300 = vperm.xlu0 %1299, %v1078
  %v1301 = vpop.permute.xlu0 %1300
  %1304 = vset.pattern.permute.xlu0 0
  %1305 = vperm.xlu0 %1304, %v1079
  %v1306 = vpop.permute.xlu0 %1305
  %1309 = vset.pattern.permute.xlu0 0
  %1310 = vperm.xlu0 %1309, %v1080
  %v1311 = vpop.permute.xlu0 %1310
  %1314 = vset.pattern.permute.xlu0 0
  %1315 = vperm.xlu0 %1314, %v1081
  %v1316 = vpop.permute.xlu0 %1315
  %1319 = vset.pattern.permute.xlu0 0
  %1320 = vperm.xlu0 %1319, %v1082
  %v1321 = vpop.permute.xlu0 %1320
  %1324 = vset.pattern.permute.xlu0 0
  %1325 = vperm.xlu0 %1324, %v1083
  %v1326 = vpop.permute.xlu0 %1325
  %1329 = vset.pattern.permute.xlu0 0
  %1330 = vperm.xlu0 %1329, %v1084
  %v1331 = vpop.permute.xlu0 %1330
  %1334 = vset.pattern.permute.xlu0 0
  %1335 = vperm.xlu0 %1334, %v1085
  %v1336 = vpop.permute.xlu0 %1335
  %1339 = vset.pattern.permute.xlu0 0
  %1340 = vperm.xlu0 %1339, %v1086
  %v1341 = vpop.permute.xlu0 %1340
  %1344 = vset.pattern.permute.xlu0 0
  %1345 = vperm.xlu0 %1344, %v1087
  %v1346 = vpop.permute.xlu0 %1345
  %1349 = vset.pattern.permute.xlu0 0
  %1350 = vperm.xlu0 %1349, %v1088
  %v1351 = vpop.permute.xlu0 %1350
  %1354 = vset.pattern.permute.xlu0 0
  %1355 = vperm.xlu0 %1354, %v1089
  %v1356 = vpop.permute.xlu0 %1355
  %1359 = vset.pattern.permute.xlu0 0
  %1360 = vperm.xlu0 %1359, %v1090
  %v1361 = vpop.permute.xlu0 %1360
  %1364 = vset.pattern.permute.xlu0 0
  %1365 = vperm.xlu0 %1364, %v1091
  %v1366 = vpop.permute.xlu0 %1365
  %1369 = vset.pattern.permute.xlu0 0
  %1370 = vperm.xlu0 %1369, %v1092
  %v1371 = vpop.permute.xlu0 %1370
  %1374 = vset.pattern.permute.xlu0 0
  %1375 = vperm.xlu0 %1374, %v1093
  %v1376 = vpop.permute.xlu0 %1375
  %1379 = vset.pattern.permute.xlu0 0
  %1380 = vperm.xlu0 %1379, %v1094
  %v1381 = vpop.permute.xlu0 %1380
  %1384 = vset.pattern.permute.xlu0 0
  %1385 = vperm.xlu0 %1384, %v1095
  %v1386 = vpop.permute.xlu0 %1385
  %1389 = vset.pattern.permute.xlu0 0
  %1390 = vperm.xlu0 %1389, %v1096
  %v1391 = vpop.permute.xlu0 %1390
  %1394 = vset.pattern.permute.xlu0 0
  %1395 = vperm.xlu0 %1394, %v1097
  %v1396 = vpop.permute.xlu0 %1395
  %1399 = vset.pattern.permute.xlu0 0
  %1400 = vperm.xlu0 %1399, %v1098
  %v1401 = vpop.permute.xlu0 %1400
  %1404 = vset.pattern.permute.xlu0 0
  %1405 = vperm.xlu0 %1404, %v1099
  %v1406 = vpop.permute.xlu0 %1405
  %1409 = vset.pattern.permute.xlu0 0
  %1410 = vperm.xlu0 %1409, %v1100
  %v1411 = vpop.permute.xlu0 %1410
  %1414 = vset.pattern.permute.xlu0 0
  %1415 = vperm.xlu0 %1414, %v1101
  %v1416 = vpop.permute.xlu0 %1415
  %1419 = vset.pattern.permute.xlu0 0
  %1420 = vperm.xlu0 %1419, %v1102
  %v1421 = vpop.permute.xlu0 %1420
  %v1423 = vsub.f32 %v879, %v1266
  %v1424 = vsub.f32 %v880, %v1266
  %v1425 = vsub.f32 %v881, %v1271
  %v1426 = vsub.f32 %v882, %v1271
  %v1427 = vsub.f32 %v883, %v1276
  %v1428 = vsub.f32 %v884, %v1276
  %v1429 = vsub.f32 %v885, %v1281
  %v1430 = vsub.f32 %v886, %v1281
  %v1431 = vsub.f32 %v887, %v1286
  %v1432 = vsub.f32 %v888, %v1286
  %v1433 = vsub.f32 %v889, %v1291
  %v1434 = vsub.f32 %v890, %v1291
  %v1435 = vsub.f32 %v891, %v1296
  %v1436 = vsub.f32 %v892, %v1296
  %v1437 = vsub.f32 %v893, %v1301
  %v1438 = vsub.f32 %v894, %v1301
  %v1439 = vsub.f32 %v895, %v1306
  %v1440 = vsub.f32 %v896, %v1306
  %v1441 = vsub.f32 %v897, %v1311
  %v1442 = vsub.f32 %v898, %v1311
  %v1443 = vsub.f32 %v899, %v1316
  %v1444 = vsub.f32 %v900, %v1316
  %v1445 = vsub.f32 %v901, %v1321
  %v1446 = vsub.f32 %v902, %v1321
  %v1447 = vsub.f32 %v903, %v1326
  %v1448 = vsub.f32 %v904, %v1326
  %v1449 = vsub.f32 %v905, %v1331
  %v1450 = vsub.f32 %v906, %v1331
  %v1451 = vsub.f32 %v907, %v1336
  %v1452 = vsub.f32 %v908, %v1336
  %v1453 = vsub.f32 %v909, %v1341
  %v1454 = vsub.f32 %v910, %v1341
  %v1455 = vsub.f32 %v911, %v1346
  %v1456 = vsub.f32 %v912, %v1346
  %v1457 = vsub.f32 %v913, %v1351
  %v1458 = vsub.f32 %v914, %v1351
  %v1459 = vsub.f32 %v915, %v1356
  %v1460 = vsub.f32 %v916, %v1356
  %v1461 = vsub.f32 %v917, %v1361
  %v1462 = vsub.f32 %v918, %v1361
  %v1463 = vsub.f32 %v919, %v1366
  %v1464 = vsub.f32 %v920, %v1366
  %v1465 = vsub.f32 %v921, %v1371
  %v1466 = vsub.f32 %v922, %v1371
  %v1467 = vsub.f32 %v923, %v1376
  %v1468 = vsub.f32 %v924, %v1376
  %v1469 = vsub.f32 %v925, %v1381
  %v1470 = vsub.f32 %v926, %v1381
  %v1471 = vsub.f32 %v927, %v1386
  %v1472 = vsub.f32 %v928, %v1386
  %v1473 = vsub.f32 %v929, %v1391
  %v1474 = vsub.f32 %v930, %v1391
  %v1475 = vsub.f32 %v931, %v1396
  %v1476 = vsub.f32 %v932, %v1396
  %v1477 = vsub.f32 %v933, %v1401
  %v1478 = vsub.f32 %v934, %v1401
  %v1479 = vsub.f32 %v935, %v1406
  %v1480 = vsub.f32 %v936, %v1406
  %v1481 = vsub.f32 %v937, %v1411
  %v1482 = vsub.f32 %v938, %v1411
  %v1483 = vsub.f32 %v939, %v1416
  %v1484 = vsub.f32 %v940, %v1416
  %v1485 = vsub.f32 %v941, %v1421
  %v1486 = vsub.f32 %v942, %v1421
  %v1487 = vmul.f32 %v1423, 1.442695
  %v1488 = vpow.pop %v1487
  %v1489 = vmul.f32 %v1424, 1.442695
  %v1490 = vpow.pop %v1489
  %v1491 = vmul.f32 %v1425, 1.442695
  %v1492 = vpow.pop %v1491
  %v1493 = vmul.f32 %v1426, 1.442695
  %v1494 = vpow.pop %v1493
  %v1495 = vmul.f32 %v1427, 1.442695
  %v1496 = vpow.pop %v1495
  %v1497 = vmul.f32 %v1428, 1.442695
  %v1498 = vpow.pop %v1497
  %v1499 = vmul.f32 %v1429, 1.442695
  %v1500 = vpow.pop %v1499
  %v1501 = vmul.f32 %v1430, 1.442695
  %v1502 = vpow.pop %v1501
  %v1503 = vmul.f32 %v1431, 1.442695
  %v1504 = vpow.pop %v1503
  %v1505 = vmul.f32 %v1432, 1.442695
  %v1506 = vpow.pop %v1505
  %v1507 = vmul.f32 %v1433, 1.442695
  %v1508 = vpow.pop %v1507
  %v1509 = vmul.f32 %v1434, 1.442695
  %v1510 = vpow.pop %v1509
  %v1511 = vmul.f32 %v1435, 1.442695
  %v1512 = vpow.pop %v1511
  %v1513 = vmul.f32 %v1436, 1.442695
  %v1514 = vpow.pop %v1513
  %v1515 = vmul.f32 %v1437, 1.442695
  %v1516 = vpow.pop %v1515
  %v1517 = vmul.f32 %v1438, 1.442695
  %v1518 = vpow.pop %v1517
  %v1519 = vmul.f32 %v1439, 1.442695
  %v1520 = vpow.pop %v1519
  %v1521 = vmul.f32 %v1440, 1.442695
  %v1522 = vpow.pop %v1521
  %v1523 = vmul.f32 %v1441, 1.442695
  %v1524 = vpow.pop %v1523
  %v1525 = vmul.f32 %v1442, 1.442695
  %v1526 = vpow.pop %v1525
  %v1527 = vmul.f32 %v1443, 1.442695
  %v1528 = vpow.pop %v1527
  %v1529 = vmul.f32 %v1444, 1.442695
  %v1530 = vpow.pop %v1529
  %v1531 = vmul.f32 %v1445, 1.442695
  %v1532 = vpow.pop %v1531
  %v1533 = vmul.f32 %v1446, 1.442695
  %v1534 = vpow.pop %v1533
  %v1535 = vmul.f32 %v1447, 1.442695
  %v1536 = vpow.pop %v1535
  %v1537 = vmul.f32 %v1448, 1.442695
  %v1538 = vpow.pop %v1537
  %v1539 = vmul.f32 %v1449, 1.442695
  %v1540 = vpow.pop %v1539
  %v1541 = vmul.f32 %v1450, 1.442695
  %v1542 = vpow.pop %v1541
  %v1543 = vmul.f32 %v1451, 1.442695
  %v1544 = vpow.pop %v1543
  %v1545 = vmul.f32 %v1452, 1.442695
  %v1546 = vpow.pop %v1545
  %v1547 = vmul.f32 %v1453, 1.442695
  %v1548 = vpow.pop %v1547
  %v1549 = vmul.f32 %v1454, 1.442695
  %v1550 = vpow.pop %v1549
  %v1551 = vmul.f32 %v1455, 1.442695
  %v1552 = vpow.pop %v1551
  %v1553 = vmul.f32 %v1456, 1.442695
  %v1554 = vpow.pop %v1553
  %v1555 = vmul.f32 %v1457, 1.442695
  %v1556 = vpow.pop %v1555
  %v1557 = vmul.f32 %v1458, 1.442695
  %v1558 = vpow.pop %v1557
  %v1559 = vmul.f32 %v1459, 1.442695
  %v1560 = vpow.pop %v1559
  %v1561 = vmul.f32 %v1460, 1.442695
  %v1562 = vpow.pop %v1561
  %v1563 = vmul.f32 %v1461, 1.442695
  %v1564 = vpow.pop %v1563
  %v1565 = vmul.f32 %v1462, 1.442695
  %v1566 = vpow.pop %v1565
  %v1567 = vmul.f32 %v1463, 1.442695
  %v1568 = vpow.pop %v1567
  %v1569 = vmul.f32 %v1464, 1.442695
  %v1570 = vpow.pop %v1569
  %v1571 = vmul.f32 %v1465, 1.442695
  %v1572 = vpow.pop %v1571
  %v1573 = vmul.f32 %v1466, 1.442695
  %v1574 = vpow.pop %v1573
  %v1575 = vmul.f32 %v1467, 1.442695
  %v1576 = vpow.pop %v1575
  %v1577 = vmul.f32 %v1468, 1.442695
  %v1578 = vpow.pop %v1577
  %v1579 = vmul.f32 %v1469, 1.442695
  %v1580 = vpow.pop %v1579
  %v1581 = vmul.f32 %v1470, 1.442695
  %v1582 = vpow.pop %v1581
  %v1583 = vmul.f32 %v1471, 1.442695
  %v1584 = vpow.pop %v1583
  %v1585 = vmul.f32 %v1472, 1.442695
  %v1586 = vpow.pop %v1585
  %v1587 = vmul.f32 %v1473, 1.442695
  %v1588 = vpow.pop %v1587
  %v1589 = vmul.f32 %v1474, 1.442695
  %v1590 = vpow.pop %v1589
  %v1591 = vmul.f32 %v1475, 1.442695
  %v1592 = vpow.pop %v1591
  %v1593 = vmul.f32 %v1476, 1.442695
  %v1594 = vpow.pop %v1593
  %v1595 = vmul.f32 %v1477, 1.442695
  %v1596 = vpow.pop %v1595
  %v1597 = vmul.f32 %v1478, 1.442695
  %v1598 = vpow.pop %v1597
  %v1599 = vmul.f32 %v1479, 1.442695
  %v1600 = vpow.pop %v1599
  %v1601 = vmul.f32 %v1480, 1.442695
  %v1602 = vpow.pop %v1601
  %v1603 = vmul.f32 %v1481, 1.442695
  %v1604 = vpow.pop %v1603
  %v1605 = vmul.f32 %v1482, 1.442695
  %v1606 = vpow.pop %v1605
  %v1607 = vmul.f32 %v1483, 1.442695
  %v1608 = vpow.pop %v1607
  %v1609 = vmul.f32 %v1484, 1.442695
  %v1610 = vpow.pop %v1609
  %v1611 = vmul.f32 %v1485, 1.442695
  %v1612 = vpow.pop %v1611
  %v1613 = vmul.f32 %v1486, 1.442695
  %v1614 = vpow.pop %v1613
  %v1615 = vsel %vm815, %v1488, 0.0
  %v1616 = vsel %vm816, %v1490, 0.0
  %v1617 = vsel %vm817, %v1492, 0.0
  %v1618 = vsel %vm818, %v1494, 0.0
  %v1619 = vsel %vm819, %v1496, 0.0
  %v1620 = vsel %vm820, %v1498, 0.0
  %v1621 = vsel %vm821, %v1500, 0.0
  %v1622 = vsel %vm822, %v1502, 0.0
  %v1623 = vsel %vm823, %v1504, 0.0
  %v1624 = vsel %vm824, %v1506, 0.0
  %v1625 = vsel %vm825, %v1508, 0.0
  %v1626 = vsel %vm826, %v1510, 0.0
  %v1627 = vsel %vm827, %v1512, 0.0
  %v1628 = vsel %vm828, %v1514, 0.0
  %v1629 = vsel %vm829, %v1516, 0.0
  %v1630 = vsel %vm830, %v1518, 0.0
  %v1631 = vsel %vm831, %v1520, 0.0
  %v1632 = vsel %vm832, %v1522, 0.0
  %v1633 = vsel %vm833, %v1524, 0.0
  %v1634 = vsel %vm834, %v1526, 0.0
  %v1635 = vsel %vm835, %v1528, 0.0
  %v1636 = vsel %vm836, %v1530, 0.0
  %v1637 = vsel %vm837, %v1532, 0.0
  %v1638 = vsel %vm838, %v1534, 0.0
  %v1639 = vsel %vm839, %v1536, 0.0
  %v1640 = vsel %vm840, %v1538, 0.0
  %v1641 = vsel %vm841, %v1540, 0.0
  %v1642 = vsel %vm842, %v1542, 0.0
  %v1643 = vsel %vm843, %v1544, 0.0
  %v1644 = vsel %vm844, %v1546, 0.0
  %v1645 = vsel %vm845, %v1548, 0.0
  %v1646 = vsel %vm846, %v1550, 0.0
  %v1647 = vsel %vm847, %v1552, 0.0
  %v1648 = vsel %vm848, %v1554, 0.0
  %v1649 = vsel %vm849, %v1556, 0.0
  %v1650 = vsel %vm850, %v1558, 0.0
  %v1651 = vsel %vm851, %v1560, 0.0
  %v1652 = vsel %vm852, %v1562, 0.0
  %v1653 = vsel %vm853, %v1564, 0.0
  %v1654 = vsel %vm854, %v1566, 0.0
  %v1655 = vsel %vm855, %v1568, 0.0
  %v1656 = vsel %vm856, %v1570, 0.0
  %v1657 = vsel %vm857, %v1572, 0.0
  %v1658 = vsel %vm858, %v1574, 0.0
  %v1659 = vsel %vm859, %v1576, 0.0
  %v1660 = vsel %vm860, %v1578, 0.0
  %v1661 = vsel %vm861, %v1580, 0.0
  %v1662 = vsel %vm862, %v1582, 0.0
  %v1663 = vsel %vm863, %v1584, 0.0
  %v1664 = vsel %vm864, %v1586, 0.0
  %v1665 = vsel %vm865, %v1588, 0.0
  %v1666 = vsel %vm866, %v1590, 0.0
  %v1667 = vsel %vm867, %v1592, 0.0
  %v1668 = vsel %vm868, %v1594, 0.0
  %v1669 = vsel %vm869, %v1596, 0.0
  %v1670 = vsel %vm870, %v1598, 0.0
  %v1671 = vsel %vm871, %v1600, 0.0
  %v1672 = vsel %vm872, %v1602, 0.0
  %v1673 = vsel %vm873, %v1604, 0.0
  %v1674 = vsel %vm874, %v1606, 0.0
  %v1675 = vsel %vm875, %v1608, 0.0
  %v1676 = vsel %vm876, %v1610, 0.0
  %v1677 = vsel %vm877, %v1612, 0.0
  %v1678 = vsel %vm878, %v1614, 0.0
  %v1679 = vadd.f32 %v1615, %v1616
  %1680 = vadd.xlane.f32.xlu0 %v1679
  %v1681 = vpop.xlane.xlu0 %1680
  %v1682 = vadd.f32 %v1617, %v1618
  %1683 = vadd.xlane.f32.xlu0 %v1682
  %v1684 = vpop.xlane.xlu0 %1683
  %v1685 = vadd.f32 %v1619, %v1620
  %1686 = vadd.xlane.f32.xlu0 %v1685
  %v1687 = vpop.xlane.xlu0 %1686
  %v1688 = vadd.f32 %v1621, %v1622
  %1689 = vadd.xlane.f32.xlu0 %v1688
  %v1690 = vpop.xlane.xlu0 %1689
  %v1691 = vadd.f32 %v1623, %v1624
  %1692 = vadd.xlane.f32.xlu0 %v1691
  %v1693 = vpop.xlane.xlu0 %1692
  %v1694 = vadd.f32 %v1625, %v1626
  %1695 = vadd.xlane.f32.xlu0 %v1694
  %v1696 = vpop.xlane.xlu0 %1695
  %v1697 = vadd.f32 %v1627, %v1628
  %1698 = vadd.xlane.f32.xlu0 %v1697
  %v1699 = vpop.xlane.xlu0 %1698
  %v1700 = vadd.f32 %v1629, %v1630
  %1701 = vadd.xlane.f32.xlu0 %v1700
  %v1702 = vpop.xlane.xlu0 %1701
  %v1703 = vadd.f32 %v1631, %v1632
  %1704 = vadd.xlane.f32.xlu0 %v1703
  %v1705 = vpop.xlane.xlu0 %1704
  %v1706 = vadd.f32 %v1633, %v1634
  %1707 = vadd.xlane.f32.xlu0 %v1706
  %v1708 = vpop.xlane.xlu0 %1707
  %v1709 = vadd.f32 %v1635, %v1636
  %1710 = vadd.xlane.f32.xlu0 %v1709
  %v1711 = vpop.xlane.xlu0 %1710
  %v1712 = vadd.f32 %v1637, %v1638
  %1713 = vadd.xlane.f32.xlu0 %v1712
  %v1714 = vpop.xlane.xlu0 %1713
  %v1715 = vadd.f32 %v1639, %v1640
  %1716 = vadd.xlane.f32.xlu0 %v1715
  %v1717 = vpop.xlane.xlu0 %1716
  %v1718 = vadd.f32 %v1641, %v1642
  %1719 = vadd.xlane.f32.xlu0 %v1718
  %v1720 = vpop.xlane.xlu0 %1719
  %v1721 = vadd.f32 %v1643, %v1644
  %1722 = vadd.xlane.f32.xlu0 %v1721
  %v1723 = vpop.xlane.xlu0 %1722
  %v1724 = vadd.f32 %v1645, %v1646
  %1725 = vadd.xlane.f32.xlu0 %v1724
  %v1726 = vpop.xlane.xlu0 %1725
  %v1727 = vadd.f32 %v1647, %v1648
  %1728 = vadd.xlane.f32.xlu0 %v1727
  %v1729 = vpop.xlane.xlu0 %1728
  %v1730 = vadd.f32 %v1649, %v1650
  %1731 = vadd.xlane.f32.xlu0 %v1730
  %v1732 = vpop.xlane.xlu0 %1731
  %v1733 = vadd.f32 %v1651, %v1652
  %1734 = vadd.xlane.f32.xlu0 %v1733
  %v1735 = vpop.xlane.xlu0 %1734
  %v1736 = vadd.f32 %v1653, %v1654
  %1737 = vadd.xlane.f32.xlu0 %v1736
  %v1738 = vpop.xlane.xlu0 %1737
  %v1739 = vadd.f32 %v1655, %v1656
  %1740 = vadd.xlane.f32.xlu0 %v1739
  %v1741 = vpop.xlane.xlu0 %1740
  %v1742 = vadd.f32 %v1657, %v1658
  %1743 = vadd.xlane.f32.xlu0 %v1742
  %v1744 = vpop.xlane.xlu0 %1743
  %v1745 = vadd.f32 %v1659, %v1660
  %1746 = vadd.xlane.f32.xlu0 %v1745
  %v1747 = vpop.xlane.xlu0 %1746
  %v1748 = vadd.f32 %v1661, %v1662
  %1749 = vadd.xlane.f32.xlu0 %v1748
  %v1750 = vpop.xlane.xlu0 %1749
  %v1751 = vadd.f32 %v1663, %v1664
  %1752 = vadd.xlane.f32.xlu0 %v1751
  %v1753 = vpop.xlane.xlu0 %1752
  %v1754 = vadd.f32 %v1665, %v1666
  %1755 = vadd.xlane.f32.xlu0 %v1754
  %v1756 = vpop.xlane.xlu0 %1755
  %v1757 = vadd.f32 %v1667, %v1668
  %1758 = vadd.xlane.f32.xlu0 %v1757
  %v1759 = vpop.xlane.xlu0 %1758
  %v1760 = vadd.f32 %v1669, %v1670
  %1761 = vadd.xlane.f32.xlu0 %v1760
  %v1762 = vpop.xlane.xlu0 %1761
  %v1763 = vadd.f32 %v1671, %v1672
  %1764 = vadd.xlane.f32.xlu0 %v1763
  %v1765 = vpop.xlane.xlu0 %1764
  %v1766 = vadd.f32 %v1673, %v1674
  %1767 = vadd.xlane.f32.xlu0 %v1766
  %v1768 = vpop.xlane.xlu0 %1767
  %v1769 = vadd.f32 %v1675, %v1676
  %1770 = vadd.xlane.f32.xlu0 %v1769
  %v1771 = vpop.xlane.xlu0 %1770
  %v1772 = vadd.f32 %v1677, %v1678
  %1773 = vadd.xlane.f32.xlu0 %v1772
  %v1774 = vpop.xlane.xlu0 %1773
  %v1775 = vadd.f32 %v1231, %v1681
  %v1776 = vadd.f32 %v1232, %v1684
  %v1777 = vadd.f32 %v1233, %v1687
  %v1778 = vadd.f32 %v1234, %v1690
  %v1779 = vadd.f32 %v1235, %v1693
  %v1780 = vadd.f32 %v1236, %v1696
  %v1781 = vadd.f32 %v1237, %v1699
  %v1782 = vadd.f32 %v1238, %v1702
  %v1783 = vadd.f32 %v1239, %v1705
  %v1784 = vadd.f32 %v1240, %v1708
  %v1785 = vadd.f32 %v1241, %v1711
  %v1786 = vadd.f32 %v1242, %v1714
  %v1787 = vadd.f32 %v1243, %v1717
  %v1788 = vadd.f32 %v1244, %v1720
  %v1789 = vadd.f32 %v1245, %v1723
  %v1790 = vadd.f32 %v1246, %v1726
  %v1791 = vadd.f32 %v1247, %v1729
  %v1792 = vadd.f32 %v1248, %v1732
  %v1793 = vadd.f32 %v1249, %v1735
  %v1794 = vadd.f32 %v1250, %v1738
  %v1795 = vadd.f32 %v1251, %v1741
  %v1796 = vadd.f32 %v1252, %v1744
  %v1797 = vadd.f32 %v1253, %v1747
  %v1798 = vadd.f32 %v1254, %v1750
  %v1799 = vadd.f32 %v1255, %v1753
  %v1800 = vadd.f32 %v1256, %v1756
  %v1801 = vadd.f32 %v1257, %v1759
  %v1802 = vadd.f32 %v1258, %v1762
  %v1803 = vadd.f32 %v1259, %v1765
  %v1804 = vadd.f32 %v1260, %v1768
  %v1805 = vadd.f32 %v1261, %v1771
  %v1806 = vadd.f32 %v1262, %v1774
  %vm1807 = vcmask 7168
  %1808 = vst.msk [vmem:[#allocation3] sm:$0xff] %vm1807, %v1775
  %1809 = vst.msk [vmem:[#allocation3 + $0x8] sm:$0xff] %vm1807, %v1776
  %1810 = vst.msk [vmem:[#allocation3 + $0x10] sm:$0xff] %vm1807, %v1777
  %1811 = vst.msk [vmem:[#allocation3 + $0x18] sm:$0xff] %vm1807, %v1778
  %1812 = vst.msk [vmem:[#allocation3 + $0x20] sm:$0xff] %vm1807, %v1779
  %1813 = vst.msk [vmem:[#allocation3 + $0x28] sm:$0xff] %vm1807, %v1780
  %1814 = vst.msk [vmem:[#allocation3 + $0x30] sm:$0xff] %vm1807, %v1781
  %1815 = vst.msk [vmem:[#allocation3 + $0x38] sm:$0xff] %vm1807, %v1782
  %1816 = vst.msk [vmem:[#allocation3 + $0x40] sm:$0xff] %vm1807, %v1783
  %1817 = vst.msk [vmem:[#allocation3 + $0x48] sm:$0xff] %vm1807, %v1784
  %1818 = vst.msk [vmem:[#allocation3 + $0x50] sm:$0xff] %vm1807, %v1785
  %1819 = vst.msk [vmem:[#allocation3 + $0x58] sm:$0xff] %vm1807, %v1786
  %1820 = vst.msk [vmem:[#allocation3 + $0x60] sm:$0xff] %vm1807, %v1787
  %1821 = vst.msk [vmem:[#allocation3 + $0x68] sm:$0xff] %vm1807, %v1788
  %1822 = vst.msk [vmem:[#allocation3 + $0x70] sm:$0xff] %vm1807, %v1789
  %1823 = vst.msk [vmem:[#allocation3 + $0x78] sm:$0xff] %vm1807, %v1790
  %1824 = vst.msk [vmem:[#allocation3 + $0x80] sm:$0xff] %vm1807, %v1791
  %1825 = vst.msk [vmem:[#allocation3 + $0x88] sm:$0xff] %vm1807, %v1792
  %1826 = vst.msk [vmem:[#allocation3 + $0x90] sm:$0xff] %vm1807, %v1793
  %1827 = vst.msk [vmem:[#allocation3 + $0x98] sm:$0xff] %vm1807, %v1794
  %1828 = vst.msk [vmem:[#allocation3 + $0xa0] sm:$0xff] %vm1807, %v1795
  %1829 = vst.msk [vmem:[#allocation3 + $0xa8] sm:$0xff] %vm1807, %v1796
  %1830 = vst.msk [vmem:[#allocation3 + $0xb0] sm:$0xff] %vm1807, %v1797
  %1831 = vst.msk [vmem:[#allocation3 + $0xb8] sm:$0xff] %vm1807, %v1798
  %1832 = vst.msk [vmem:[#allocation3 + $0xc0] sm:$0xff] %vm1807, %v1799
  %1833 = vst.msk [vmem:[#allocation3 + $0xc8] sm:$0xff] %vm1807, %v1800
  %1834 = vst.msk [vmem:[#allocation3 + $0xd0] sm:$0xff] %vm1807, %v1801
  %1835 = vst.msk [vmem:[#allocation3 + $0xd8] sm:$0xff] %vm1807, %v1802
  %1836 = vst.msk [vmem:[#allocation3 + $0xe0] sm:$0xff] %vm1807, %v1803
  %1837 = vst.msk [vmem:[#allocation3 + $0xe8] sm:$0xff] %vm1807, %v1804
  %1838 = vst.msk [vmem:[#allocation3 + $0xf0] sm:$0xff] %vm1807, %v1805
  %1839 = vst.msk [vmem:[#allocation3 + $0xf8] sm:$0xff] %vm1807, %v1806
  %1840 = vst.msk [vmem:[#allocation2] sm:$0xff] %vm1807, %v1071
  %1841 = vst.msk [vmem:[#allocation2 + $0x8] sm:$0xff] %vm1807, %v1072
  %1842 = vst.msk [vmem:[#allocation2 + $0x10] sm:$0xff] %vm1807, %v1073
  %1843 = vst.msk [vmem:[#allocation2 + $0x18] sm:$0xff] %vm1807, %v1074
  %1844 = vst.msk [vmem:[#allocation2 + $0x20] sm:$0xff] %vm1807, %v1075
  %1845 = vst.msk [vmem:[#allocation2 + $0x28] sm:$0xff] %vm1807, %v1076
  %1846 = vst.msk [vmem:[#allocation2 + $0x30] sm:$0xff] %vm1807, %v1077
  %1847 = vst.msk [vmem:[#allocation2 + $0x38] sm:$0xff] %vm1807, %v1078
  %1848 = vst.msk [vmem:[#allocation2 + $0x40] sm:$0xff] %vm1807, %v1079
  %1849 = vst.msk [vmem:[#allocation2 + $0x48] sm:$0xff] %vm1807, %v1080
  %1850 = vst.msk [vmem:[#allocation2 + $0x50] sm:$0xff] %vm1807, %v1081
  %1851 = vst.msk [vmem:[#allocation2 + $0x58] sm:$0xff] %vm1807, %v1082
  %1852 = vst.msk [vmem:[#allocation2 + $0x60] sm:$0xff] %vm1807, %v1083
  %1853 = vst.msk [vmem:[#allocation2 + $0x68] sm:$0xff] %vm1807, %v1084
  %1854 = vst.msk [vmem:[#allocation2 + $0x70] sm:$0xff] %vm1807, %v1085
  %1855 = vst.msk [vmem:[#allocation2 + $0x78] sm:$0xff] %vm1807, %v1086
  %1856 = vst.msk [vmem:[#allocation2 + $0x80] sm:$0xff] %vm1807, %v1087
  %1857 = vst.msk [vmem:[#allocation2 + $0x88] sm:$0xff] %vm1807, %v1088
  %1858 = vst.msk [vmem:[#allocation2 + $0x90] sm:$0xff] %vm1807, %v1089
  %1859 = vst.msk [vmem:[#allocation2 + $0x98] sm:$0xff] %vm1807, %v1090
  %1860 = vst.msk [vmem:[#allocation2 + $0xa0] sm:$0xff] %vm1807, %v1091
  %1861 = vst.msk [vmem:[#allocation2 + $0xa8] sm:$0xff] %vm1807, %v1092
  %1862 = vst.msk [vmem:[#allocation2 + $0xb0] sm:$0xff] %vm1807, %v1093
  %1863 = vst.msk [vmem:[#allocation2 + $0xb8] sm:$0xff] %vm1807, %v1094
  %1864 = vst.msk [vmem:[#allocation2 + $0xc0] sm:$0xff] %vm1807, %v1095
  %1865 = vst.msk [vmem:[#allocation2 + $0xc8] sm:$0xff] %vm1807, %v1096
  %1866 = vst.msk [vmem:[#allocation2 + $0xd0] sm:$0xff] %vm1807, %v1097
  %1867 = vst.msk [vmem:[#allocation2 + $0xd8] sm:$0xff] %vm1807, %v1098
  %1868 = vst.msk [vmem:[#allocation2 + $0xe0] sm:$0xff] %vm1807, %v1099
  %1869 = vst.msk [vmem:[#allocation2 + $0xe8] sm:$0xff] %vm1807, %v1100
  %1870 = vst.msk [vmem:[#allocation2 + $0xf0] sm:$0xff] %vm1807, %v1101
  %1871 = vst.msk [vmem:[#allocation2 + $0xf8] sm:$0xff] %vm1807, %v1102
  // Predicated region
  $region22: #{supervised_contrastive_loss.5} parent=0 // pred_check
    %p1872 = pneg %p18
  $region23: #{supervised_contrastive_loss.5} parent=0 // pred_check_branch
    %1874 = sbr.rel (%p1872) target = $region25
  $region24: #{supervised_contrastive_loss.5} parent=0 // pred_region
    %v1875 = vld [vmem:[#allocation3] sm:$0xff]
    %v1876 = vld [vmem:[#allocation3 + $0x8] sm:$0xff]
    %v1877 = vld [vmem:[#allocation3 + $0x10] sm:$0xff]
    %v1878 = vld [vmem:[#allocation3 + $0x18] sm:$0xff]
    %v1879 = vld [vmem:[#allocation3 + $0x20] sm:$0xff]
    %v1880 = vld [vmem:[#allocation3 + $0x28] sm:$0xff]
    %v1881 = vld [vmem:[#allocation3 + $0x30] sm:$0xff]
    %v1882 = vld [vmem:[#allocation3 + $0x38] sm:$0xff]
    %v1883 = vld [vmem:[#allocation3 + $0x40] sm:$0xff]
    %v1884 = vld [vmem:[#allocation3 + $0x48] sm:$0xff]
    %v1885 = vld [vmem:[#allocation3 + $0x50] sm:$0xff]
    %v1886 = vld [vmem:[#allocation3 + $0x58] sm:$0xff]
    %v1887 = vld [vmem:[#allocation3 + $0x60] sm:$0xff]
    %v1888 = vld [vmem:[#allocation3 + $0x68] sm:$0xff]
    %v1889 = vld [vmem:[#allocation3 + $0x70] sm:$0xff]
    %v1890 = vld [vmem:[#allocation3 + $0x78] sm:$0xff]
    %v1891 = vld [vmem:[#allocation3 + $0x80] sm:$0xff]
    %v1892 = vld [vmem:[#allocation3 + $0x88] sm:$0xff]
    %v1893 = vld [vmem:[#allocation3 + $0x90] sm:$0xff]
    %v1894 = vld [vmem:[#allocation3 + $0x98] sm:$0xff]
    %v1895 = vld [vmem:[#allocation3 + $0xa0] sm:$0xff]
    %v1896 = vld [vmem:[#allocation3 + $0xa8] sm:$0xff]
    %v1897 = vld [vmem:[#allocation3 + $0xb0] sm:$0xff]
    %v1898 = vld [vmem:[#allocation3 + $0xb8] sm:$0xff]
    %v1899 = vld [vmem:[#allocation3 + $0xc0] sm:$0xff]
    %v1900 = vld [vmem:[#allocation3 + $0xc8] sm:$0xff]
    %v1901 = vld [vmem:[#allocation3 + $0xd0] sm:$0xff]
    %v1902 = vld [vmem:[#allocation3 + $0xd8] sm:$0xff]
    %v1903 = vld [vmem:[#allocation3 + $0xe0] sm:$0xff]
    %v1904 = vld [vmem:[#allocation3 + $0xe8] sm:$0xff]
    %v1905 = vld [vmem:[#allocation3 + $0xf0] sm:$0xff]
    %v1906 = vld [vmem:[#allocation3 + $0xf8] sm:$0xff]
    %vm1907 = vcmp.gt.f32.partialorder %v1875, 0.0
    %vm1908 = vcmp.gt.f32.partialorder %v1876, 0.0
    %vm1909 = vcmp.gt.f32.partialorder %v1877, 0.0
    %vm1910 = vcmp.gt.f32.partialorder %v1878, 0.0
    %vm1911 = vcmp.gt.f32.partialorder %v1879, 0.0
    %vm1912 = vcmp.gt.f32.partialorder %v1880, 0.0
    %vm1913 = vcmp.gt.f32.partialorder %v1881, 0.0
    %vm1914 = vcmp.gt.f32.partialorder %v1882, 0.0
    %vm1915 = vcmp.gt.f32.partialorder %v1883, 0.0
    %vm1916 = vcmp.gt.f32.partialorder %v1884, 0.0
    %vm1917 = vcmp.gt.f32.partialorder %v1885, 0.0
    %vm1918 = vcmp.gt.f32.partialorder %v1886, 0.0
    %vm1919 = vcmp.gt.f32.partialorder %v1887, 0.0
    %vm1920 = vcmp.gt.f32.partialorder %v1888, 0.0
    %vm1921 = vcmp.gt.f32.partialorder %v1889, 0.0
    %vm1922 = vcmp.gt.f32.partialorder %v1890, 0.0
    %vm1923 = vcmp.gt.f32.partialorder %v1891, 0.0
    %vm1924 = vcmp.gt.f32.partialorder %v1892, 0.0
    %vm1925 = vcmp.gt.f32.partialorder %v1893, 0.0
    %vm1926 = vcmp.gt.f32.partialorder %v1894, 0.0
    %vm1927 = vcmp.gt.f32.partialorder %v1895, 0.0
    %vm1928 = vcmp.gt.f32.partialorder %v1896, 0.0
    %vm1929 = vcmp.gt.f32.partialorder %v1897, 0.0
    %vm1930 = vcmp.gt.f32.partialorder %v1898, 0.0
    %vm1931 = vcmp.gt.f32.partialorder %v1899, 0.0
    %vm1932 = vcmp.gt.f32.partialorder %v1900, 0.0
    %vm1933 = vcmp.gt.f32.partialorder %v1901, 0.0
    %vm1934 = vcmp.gt.f32.partialorder %v1902, 0.0
    %vm1935 = vcmp.gt.f32.partialorder %v1903, 0.0
    %vm1936 = vcmp.gt.f32.partialorder %v1904, 0.0
    %vm1937 = vcmp.gt.f32.partialorder %v1905, 0.0
    %vm1938 = vcmp.gt.f32.partialorder %v1906, 0.0
    %v1939 = vld [vmem:[#allocation2] sm:$0xff]
    %v1940 = vld [vmem:[#allocation2 + $0x8] sm:$0xff]
    %v1941 = vld [vmem:[#allocation2 + $0x10] sm:$0xff]
    %v1942 = vld [vmem:[#allocation2 + $0x18] sm:$0xff]
    %v1943 = vld [vmem:[#allocation2 + $0x20] sm:$0xff]
    %v1944 = vld [vmem:[#allocation2 + $0x28] sm:$0xff]
    %v1945 = vld [vmem:[#allocation2 + $0x30] sm:$0xff]
    %v1946 = vld [vmem:[#allocation2 + $0x38] sm:$0xff]
    %v1947 = vld [vmem:[#allocation2 + $0x40] sm:$0xff]
    %v1948 = vld [vmem:[#allocation2 + $0x48] sm:$0xff]
    %v1949 = vld [vmem:[#allocation2 + $0x50] sm:$0xff]
    %v1950 = vld [vmem:[#allocation2 + $0x58] sm:$0xff]
    %v1951 = vld [vmem:[#allocation2 + $0x60] sm:$0xff]
    %v1952 = vld [vmem:[#allocation2 + $0x68] sm:$0xff]
    %v1953 = vld [vmem:[#allocation2 + $0x70] sm:$0xff]
    %v1954 = vld [vmem:[#allocation2 + $0x78] sm:$0xff]
    %v1955 = vld [vmem:[#allocation2 + $0x80] sm:$0xff]
    %v1956 = vld [vmem:[#allocation2 + $0x88] sm:$0xff]
    %v1957 = vld [vmem:[#allocation2 + $0x90] sm:$0xff]
    %v1958 = vld [vmem:[#allocation2 + $0x98] sm:$0xff]
    %v1959 = vld [vmem:[#allocation2 + $0xa0] sm:$0xff]
    %v1960 = vld [vmem:[#allocation2 + $0xa8] sm:$0xff]
    %v1961 = vld [vmem:[#allocation2 + $0xb0] sm:$0xff]
    %v1962 = vld [vmem:[#allocation2 + $0xb8] sm:$0xff]
    %v1963 = vld [vmem:[#allocation2 + $0xc0] sm:$0xff]
    %v1964 = vld [vmem:[#allocation2 + $0xc8] sm:$0xff]
    %v1965 = vld [vmem:[#allocation2 + $0xd0] sm:$0xff]
    %v1966 = vld [vmem:[#allocation2 + $0xd8] sm:$0xff]
    %v1967 = vld [vmem:[#allocation2 + $0xe0] sm:$0xff]
    %v1968 = vld [vmem:[#allocation2 + $0xe8] sm:$0xff]
    %v1969 = vld [vmem:[#allocation2 + $0xf0] sm:$0xff]
    %v1970 = vld [vmem:[#allocation2 + $0xf8] sm:$0xff]
    %v1971 = vlog2.pop %v1875
    %v1972 = vmul.f32 %v1971, 0.6931472
    %v1973 = vlog2.pop %v1876
    %v1974 = vmul.f32 %v1973, 0.6931472
    %v1975 = vlog2.pop %v1877
    %v1976 = vmul.f32 %v1975, 0.6931472
    %v1977 = vlog2.pop %v1878
    %v1978 = vmul.f32 %v1977, 0.6931472
    %v1979 = vlog2.pop %v1879
    %v1980 = vmul.f32 %v1979, 0.6931472
    %v1981 = vlog2.pop %v1880
    %v1982 = vmul.f32 %v1981, 0.6931472
    %v1983 = vlog2.pop %v1881
    %v1984 = vmul.f32 %v1983, 0.6931472
    %v1985 = vlog2.pop %v1882
    %v1986 = vmul.f32 %v1985, 0.6931472
    %v1987 = vlog2.pop %v1883
    %v1988 = vmul.f32 %v1987, 0.6931472
    %v1989 = vlog2.pop %v1884
    %v1990 = vmul.f32 %v1989, 0.6931472
    %v1991 = vlog2.pop %v1885
    %v1992 = vmul.f32 %v1991, 0.6931472
    %v1993 = vlog2.pop %v1886
    %v1994 = vmul.f32 %v1993, 0.6931472
    %v1995 = vlog2.pop %v1887
    %v1996 = vmul.f32 %v1995, 0.6931472
    %v1997 = vlog2.pop %v1888
    %v1998 = vmul.f32 %v1997, 0.6931472
    %v1999 = vlog2.pop %v1889
    %v2000 = vmul.f32 %v1999, 0.6931472
    %v2001 = vlog2.pop %v1890
    %v2002 = vmul.f32 %v2001, 0.6931472
    %v2003 = vlog2.pop %v1891
    %v2004 = vmul.f32 %v2003, 0.6931472
    %v2005 = vlog2.pop %v1892
    %v2006 = vmul.f32 %v2005, 0.6931472
    %v2007 = vlog2.pop %v1893
    %v2008 = vmul.f32 %v2007, 0.6931472
    %v2009 = vlog2.pop %v1894
    %v2010 = vmul.f32 %v2009, 0.6931472
    %v2011 = vlog2.pop %v1895
    %v2012 = vmul.f32 %v2011, 0.6931472
    %v2013 = vlog2.pop %v1896
    %v2014 = vmul.f32 %v2013, 0.6931472
    %v2015 = vlog2.pop %v1897
    %v2016 = vmul.f32 %v2015, 0.6931472
    %v2017 = vlog2.pop %v1898
    %v2018 = vmul.f32 %v2017, 0.6931472
    %v2019 = vlog2.pop %v1899
    %v2020 = vmul.f32 %v2019, 0.6931472
    %v2021 = vlog2.pop %v1900
    %v2022 = vmul.f32 %v2021, 0.6931472
    %v2023 = vlog2.pop %v1901
    %v2024 = vmul.f32 %v2023, 0.6931472
    %v2025 = vlog2.pop %v1902
    %v2026 = vmul.f32 %v2025, 0.6931472
    %v2027 = vlog2.pop %v1903
    %v2028 = vmul.f32 %v2027, 0.6931472
    %v2029 = vlog2.pop %v1904
    %v2030 = vmul.f32 %v2029, 0.6931472
    %v2031 = vlog2.pop %v1905
    %v2032 = vmul.f32 %v2031, 0.6931472
    %v2033 = vlog2.pop %v1906
    %v2034 = vmul.f32 %v2033, 0.6931472
    %v2035 = vadd.f32 %v1939, %v1972
    %v2036 = vadd.f32 %v1940, %v1974
    %v2037 = vadd.f32 %v1941, %v1976
    %v2038 = vadd.f32 %v1942, %v1978
    %v2039 = vadd.f32 %v1943, %v1980
    %v2040 = vadd.f32 %v1944, %v1982
    %v2041 = vadd.f32 %v1945, %v1984
    %v2042 = vadd.f32 %v1946, %v1986
    %v2043 = vadd.f32 %v1947, %v1988
    %v2044 = vadd.f32 %v1948, %v1990
    %v2045 = vadd.f32 %v1949, %v1992
    %v2046 = vadd.f32 %v1950, %v1994
    %v2047 = vadd.f32 %v1951, %v1996
    %v2048 = vadd.f32 %v1952, %v1998
    %v2049 = vadd.f32 %v1953, %v2000
    %v2050 = vadd.f32 %v1954, %v2002
    %v2051 = vadd.f32 %v1955, %v2004
    %v2052 = vadd.f32 %v1956, %v2006
    %v2053 = vadd.f32 %v1957, %v2008
    %v2054 = vadd.f32 %v1958, %v2010
    %v2055 = vadd.f32 %v1959, %v2012
    %v2056 = vadd.f32 %v1960, %v2014
    %v2057 = vadd.f32 %v1961, %v2016
    %v2058 = vadd.f32 %v1962, %v2018
    %v2059 = vadd.f32 %v1963, %v2020
    %v2060 = vadd.f32 %v1964, %v2022
    %v2061 = vadd.f32 %v1965, %v2024
    %v2062 = vadd.f32 %v1966, %v2026
    %v2063 = vadd.f32 %v1967, %v2028
    %v2064 = vadd.f32 %v1968, %v2030
    %v2065 = vadd.f32 %v1969, %v2032
    %v2066 = vadd.f32 %v1970, %v2034
    %v2067 = vsel %vm1907, %v2035, -inf
    %v2068 = vsel %vm1908, %v2036, -inf
    %v2069 = vsel %vm1909, %v2037, -inf
    %v2070 = vsel %vm1910, %v2038, -inf
    %v2071 = vsel %vm1911, %v2039, -inf
    %v2072 = vsel %vm1912, %v2040, -inf
    %v2073 = vsel %vm1913, %v2041, -inf
    %v2074 = vsel %vm1914, %v2042, -inf
    %v2075 = vsel %vm1915, %v2043, -inf
    %v2076 = vsel %vm1916, %v2044, -inf
    %v2077 = vsel %vm1917, %v2045, -inf
    %v2078 = vsel %vm1918, %v2046, -inf
    %v2079 = vsel %vm1919, %v2047, -inf
    %v2080 = vsel %vm1920, %v2048, -inf
    %v2081 = vsel %vm1921, %v2049, -inf
    %v2082 = vsel %vm1922, %v2050, -inf
    %v2083 = vsel %vm1923, %v2051, -inf
    %v2084 = vsel %vm1924, %v2052, -inf
    %v2085 = vsel %vm1925, %v2053, -inf
    %v2086 = vsel %vm1926, %v2054, -inf
    %v2087 = vsel %vm1927, %v2055, -inf
    %v2088 = vsel %vm1928, %v2056, -inf
    %v2089 = vsel %vm1929, %v2057, -inf
    %v2090 = vsel %vm1930, %v2058, -inf
    %v2091 = vsel %vm1931, %v2059, -inf
    %v2092 = vsel %vm1932, %v2060, -inf
    %v2093 = vsel %vm1933, %v2061, -inf
    %v2094 = vsel %vm1934, %v2062, -inf
    %v2095 = vsel %vm1935, %v2063, -inf
    %v2096 = vsel %vm1936, %v2064, -inf
    %v2097 = vsel %vm1937, %v2065, -inf
    %v2098 = vsel %vm1938, %v2066, -inf
    %v2099 = vld [vmem:[#allocation4] sm:$0xff]
    %v2100 = vld [vmem:[#allocation4 + $0x8] sm:$0xff]
    %v2101 = vld [vmem:[#allocation4 + $0x10] sm:$0xff]
    %v2102 = vld [vmem:[#allocation4 + $0x18] sm:$0xff]
    %v2103 = vld [vmem:[#allocation4 + $0x20] sm:$0xff]
    %v2104 = vld [vmem:[#allocation4 + $0x28] sm:$0xff]
    %v2105 = vld [vmem:[#allocation4 + $0x30] sm:$0xff]
    %v2106 = vld [vmem:[#allocation4 + $0x38] sm:$0xff]
    %v2107 = vld [vmem:[#allocation4 + $0x40] sm:$0xff]
    %v2108 = vld [vmem:[#allocation4 + $0x48] sm:$0xff]
    %v2109 = vld [vmem:[#allocation4 + $0x50] sm:$0xff]
    %v2110 = vld [vmem:[#allocation4 + $0x58] sm:$0xff]
    %v2111 = vld [vmem:[#allocation4 + $0x60] sm:$0xff]
    %v2112 = vld [vmem:[#allocation4 + $0x68] sm:$0xff]
    %v2113 = vld [vmem:[#allocation4 + $0x70] sm:$0xff]
    %v2114 = vld [vmem:[#allocation4 + $0x78] sm:$0xff]
    %v2115 = vld [vmem:[#allocation4 + $0x80] sm:$0xff]
    %v2116 = vld [vmem:[#allocation4 + $0x88] sm:$0xff]
    %v2117 = vld [vmem:[#allocation4 + $0x90] sm:$0xff]
    %v2118 = vld [vmem:[#allocation4 + $0x98] sm:$0xff]
    %v2119 = vld [vmem:[#allocation4 + $0xa0] sm:$0xff]
    %v2120 = vld [vmem:[#allocation4 + $0xa8] sm:$0xff]
    %v2121 = vld [vmem:[#allocation4 + $0xb0] sm:$0xff]
    %v2122 = vld [vmem:[#allocation4 + $0xb8] sm:$0xff]
    %v2123 = vld [vmem:[#allocation4 + $0xc0] sm:$0xff]
    %v2124 = vld [vmem:[#allocation4 + $0xc8] sm:$0xff]
    %v2125 = vld [vmem:[#allocation4 + $0xd0] sm:$0xff]
    %v2126 = vld [vmem:[#allocation4 + $0xd8] sm:$0xff]
    %v2127 = vld [vmem:[#allocation4 + $0xe0] sm:$0xff]
    %v2128 = vld [vmem:[#allocation4 + $0xe8] sm:$0xff]
    %v2129 = vld [vmem:[#allocation4 + $0xf0] sm:$0xff]
    %v2130 = vld [vmem:[#allocation4 + $0xf8] sm:$0xff]
    %v2131 = vld [vmem:[#allocation4 + $0x100] sm:$0xff]
    %v2132 = vld [vmem:[#allocation4 + $0x108] sm:$0xff]
    %v2133 = vld [vmem:[#allocation4 + $0x110] sm:$0xff]
    %v2134 = vld [vmem:[#allocation4 + $0x118] sm:$0xff]
    %v2135 = vld [vmem:[#allocation4 + $0x120] sm:$0xff]
    %v2136 = vld [vmem:[#allocation4 + $0x128] sm:$0xff]
    %v2137 = vld [vmem:[#allocation4 + $0x130] sm:$0xff]
    %v2138 = vld [vmem:[#allocation4 + $0x138] sm:$0xff]
    %v2139 = vld [vmem:[#allocation4 + $0x140] sm:$0xff]
    %v2140 = vld [vmem:[#allocation4 + $0x148] sm:$0xff]
    %v2141 = vld [vmem:[#allocation4 + $0x150] sm:$0xff]
    %v2142 = vld [vmem:[#allocation4 + $0x158] sm:$0xff]
    %v2143 = vld [vmem:[#allocation4 + $0x160] sm:$0xff]
    %v2144 = vld [vmem:[#allocation4 + $0x168] sm:$0xff]
    %v2145 = vld [vmem:[#allocation4 + $0x170] sm:$0xff]
    %v2146 = vld [vmem:[#allocation4 + $0x178] sm:$0xff]
    %v2147 = vld [vmem:[#allocation4 + $0x180] sm:$0xff]
    %v2148 = vld [vmem:[#allocation4 + $0x188] sm:$0xff]
    %v2149 = vld [vmem:[#allocation4 + $0x190] sm:$0xff]
    %v2150 = vld [vmem:[#allocation4 + $0x198] sm:$0xff]
    %v2151 = vld [vmem:[#allocation4 + $0x1a0] sm:$0xff]
    %v2152 = vld [vmem:[#allocation4 + $0x1a8] sm:$0xff]
    %v2153 = vld [vmem:[#allocation4 + $0x1b0] sm:$0xff]
    %v2154 = vld [vmem:[#allocation4 + $0x1b8] sm:$0xff]
    %v2155 = vld [vmem:[#allocation4 + $0x1c0] sm:$0xff]
    %v2156 = vld [vmem:[#allocation4 + $0x1c8] sm:$0xff]
    %v2157 = vld [vmem:[#allocation4 + $0x1d0] sm:$0xff]
    %v2158 = vld [vmem:[#allocation4 + $0x1d8] sm:$0xff]
    %v2159 = vld [vmem:[#allocation4 + $0x1e0] sm:$0xff]
    %v2160 = vld [vmem:[#allocation4 + $0x1e8] sm:$0xff]
    %v2161 = vld [vmem:[#allocation4 + $0x1f0] sm:$0xff]
    %v2162 = vld [vmem:[#allocation4 + $0x1f8] sm:$0xff]
    %s2163 = smul.u32 0, 256
    %v2164 = vlaneseq
    %v2165 = vshrl.u32 %v2164, 7
    %v2166 = vadd.s32 %v2165, 8
    %v2167 = vadd.s32 %v2165, 16
    %v2168 = vadd.s32 %v2165, 24
    %v2169 = vadd.s32 %v2165, 32
    %v2170 = vadd.s32 %v2165, 40
    %v2171 = vadd.s32 %v2165, 48
    %v2172 = vadd.s32 %v2165, 56
    %v2173 = vadd.s32 %v2165, 64
    %v2174 = vadd.s32 %v2165, 72
    %v2175 = vadd.s32 %v2165, 80
    %v2176 = vadd.s32 %v2165, 88
    %v2177 = vadd.s32 %v2165, 96
    %v2178 = vadd.s32 %v2165, 104
    %v2179 = vadd.s32 %v2165, 112
    %v2180 = vadd.s32 %v2165, 120
    %v2181 = vadd.s32 %v2165, 128
    %v2182 = vadd.s32 %v2165, 136
    %v2183 = vadd.s32 %v2165, 144
    %v2184 = vadd.s32 %v2165, 152
    %v2185 = vadd.s32 %v2165, 160
    %v2186 = vadd.s32 %v2165, 168
    %v2187 = vadd.s32 %v2165, 176
    %v2188 = vadd.s32 %v2165, 184
    %v2189 = vadd.s32 %v2165, 192
    %v2190 = vadd.s32 %v2165, 200
    %v2191 = vadd.s32 %v2165, 208
    %v2192 = vadd.s32 %v2165, 216
    %v2193 = vadd.s32 %v2165, 224
    %v2194 = vadd.s32 %v2165, 232
    %v2195 = vadd.s32 %v2165, 240
    %v2196 = vadd.s32 %v2165, 248
    %v2197 = vstv %s2163
    %v2198 = vadd.s32 %v2197, %v2165
    %v2199 = vadd.s32 %v2197, %v2166
    %v2200 = vadd.s32 %v2197, %v2167
    %v2201 = vadd.s32 %v2197, %v2168
    %v2202 = vadd.s32 %v2197, %v2169
    %v2203 = vadd.s32 %v2197, %v2170
    %v2204 = vadd.s32 %v2197, %v2171
    %v2205 = vadd.s32 %v2197, %v2172
    %v2206 = vadd.s32 %v2197, %v2173
    %v2207 = vadd.s32 %v2197, %v2174
    %v2208 = vadd.s32 %v2197, %v2175
    %v2209 = vadd.s32 %v2197, %v2176
    %v2210 = vadd.s32 %v2197, %v2177
    %v2211 = vadd.s32 %v2197, %v2178
    %v2212 = vadd.s32 %v2197, %v2179
    %v2213 = vadd.s32 %v2197, %v2180
    %v2214 = vadd.s32 %v2197, %v2181
    %v2215 = vadd.s32 %v2197, %v2182
    %v2216 = vadd.s32 %v2197, %v2183
    %v2217 = vadd.s32 %v2197, %v2184
    %v2218 = vadd.s32 %v2197, %v2185
    %v2219 = vadd.s32 %v2197, %v2186
    %v2220 = vadd.s32 %v2197, %v2187
    %v2221 = vadd.s32 %v2197, %v2188
    %v2222 = vadd.s32 %v2197, %v2189
    %v2223 = vadd.s32 %v2197, %v2190
    %v2224 = vadd.s32 %v2197, %v2191
    %v2225 = vadd.s32 %v2197, %v2192
    %v2226 = vadd.s32 %v2197, %v2193
    %v2227 = vadd.s32 %v2197, %v2194
    %v2228 = vadd.s32 %v2197, %v2195
    %v2229 = vadd.s32 %v2197, %v2196
    %v2230 = vld [vmem:[%s3] sm:$0x3]
    %v2231 = vlaneseq
    %v2232 = vshrl.u32 %v2231, 7
    %v2233 = vsub.s32 0, %v2232
    %v2234 = vrot.slane %v2230, %v2233
    %v2235 = vlaneseq
    %v2236 = vshrl.u32 %v2235, 7
    %v2237 = vsub.s32 1, %v2236
    %v2238 = vrot.slane %v2230, %v2237
    %vm2239 = vcmp.eq.s32.totalorder %v647, %v2234
    %vm2240 = vcmp.eq.s32.totalorder %v647, %v2238
    %vm2241 = vcmp.eq.s32.totalorder %v650, %v2234
    %vm2242 = vcmp.eq.s32.totalorder %v650, %v2238
    %vm2243 = vcmp.eq.s32.totalorder %v653, %v2234
    %vm2244 = vcmp.eq.s32.totalorder %v653, %v2238
    %vm2245 = vcmp.eq.s32.totalorder %v656, %v2234
    %vm2246 = vcmp.eq.s32.totalorder %v656, %v2238
    %vm2247 = vcmp.eq.s32.totalorder %v659, %v2234
    %vm2248 = vcmp.eq.s32.totalorder %v659, %v2238
    %vm2249 = vcmp.eq.s32.totalorder %v662, %v2234
    %vm2250 = vcmp.eq.s32.totalorder %v662, %v2238
    %vm2251 = vcmp.eq.s32.totalorder %v665, %v2234
    %vm2252 = vcmp.eq.s32.totalorder %v665, %v2238
    %vm2253 = vcmp.eq.s32.totalorder %v668, %v2234
    %vm2254 = vcmp.eq.s32.totalorder %v668, %v2238
    %vm2255 = vcmp.eq.s32.totalorder %v671, %v2234
    %vm2256 = vcmp.eq.s32.totalorder %v671, %v2238
    %vm2257 = vcmp.eq.s32.totalorder %v674, %v2234
    %vm2258 = vcmp.eq.s32.totalorder %v674, %v2238
    %vm2259 = vcmp.eq.s32.totalorder %v677, %v2234
    %vm2260 = vcmp.eq.s32.totalorder %v677, %v2238
    %vm2261 = vcmp.eq.s32.totalorder %v680, %v2234
    %vm2262 = vcmp.eq.s32.totalorder %v680, %v2238
    %vm2263 = vcmp.eq.s32.totalorder %v683, %v2234
    %vm2264 = vcmp.eq.s32.totalorder %v683, %v2238
    %vm2265 = vcmp.eq.s32.totalorder %v686, %v2234
    %vm2266 = vcmp.eq.s32.totalorder %v686, %v2238
    %vm2267 = vcmp.eq.s32.totalorder %v689, %v2234
    %vm2268 = vcmp.eq.s32.totalorder %v689, %v2238
    %vm2269 = vcmp.eq.s32.totalorder %v692, %v2234
    %vm2270 = vcmp.eq.s32.totalorder %v692, %v2238
    %vm2271 = vcmp.eq.s32.totalorder %v695, %v2234
    %vm2272 = vcmp.eq.s32.totalorder %v695, %v2238
    %vm2273 = vcmp.eq.s32.totalorder %v698, %v2234
    %vm2274 = vcmp.eq.s32.totalorder %v698, %v2238
    %vm2275 = vcmp.eq.s32.totalorder %v701, %v2234
    %vm2276 = vcmp.eq.s32.totalorder %v701, %v2238
    %vm2277 = vcmp.eq.s32.totalorder %v704, %v2234
    %vm2278 = vcmp.eq.s32.totalorder %v704, %v2238
    %vm2279 = vcmp.eq.s32.totalorder %v707, %v2234
    %vm2280 = vcmp.eq.s32.totalorder %v707, %v2238
    %vm2281 = vcmp.eq.s32.totalorder %v710, %v2234
    %vm2282 = vcmp.eq.s32.totalorder %v710, %v2238
    %vm2283 = vcmp.eq.s32.totalorder %v713, %v2234
    %vm2284 = vcmp.eq.s32.totalorder %v713, %v2238
    %vm2285 = vcmp.eq.s32.totalorder %v716, %v2234
    %vm2286 = vcmp.eq.s32.totalorder %v716, %v2238
    %vm2287 = vcmp.eq.s32.totalorder %v719, %v2234
    %vm2288 = vcmp.eq.s32.totalorder %v719, %v2238
    %vm2289 = vcmp.eq.s32.totalorder %v722, %v2234
    %vm2290 = vcmp.eq.s32.totalorder %v722, %v2238
    %vm2291 = vcmp.eq.s32.totalorder %v725, %v2234
    %vm2292 = vcmp.eq.s32.totalorder %v725, %v2238
    %vm2293 = vcmp.eq.s32.totalorder %v728, %v2234
    %vm2294 = vcmp.eq.s32.totalorder %v728, %v2238
    %vm2295 = vcmp.eq.s32.totalorder %v731, %v2234
    %vm2296 = vcmp.eq.s32.totalorder %v731, %v2238
    %vm2297 = vcmp.eq.s32.totalorder %v734, %v2234
    %vm2298 = vcmp.eq.s32.totalorder %v734, %v2238
    %vm2299 = vcmp.eq.s32.totalorder %v737, %v2234
    %vm2300 = vcmp.eq.s32.totalorder %v737, %v2238
    %vm2301 = vcmp.eq.s32.totalorder %v740, %v2234
    %vm2302 = vcmp.eq.s32.totalorder %v740, %v2238
    %vm2303 = vcmp.ne.s32.totalorder %v2198, %v640
    %vm2304 = vcmp.ne.s32.totalorder %v2198, %v641
    %vm2305 = vcmp.ne.s32.totalorder %v2199, %v640
    %vm2306 = vcmp.ne.s32.totalorder %v2199, %v641
    %vm2307 = vcmp.ne.s32.totalorder %v2200, %v640
    %vm2308 = vcmp.ne.s32.totalorder %v2200, %v641
    %vm2309 = vcmp.ne.s32.totalorder %v2201, %v640
    %vm2310 = vcmp.ne.s32.totalorder %v2201, %v641
    %vm2311 = vcmp.ne.s32.totalorder %v2202, %v640
    %vm2312 = vcmp.ne.s32.totalorder %v2202, %v641
    %vm2313 = vcmp.ne.s32.totalorder %v2203, %v640
    %vm2314 = vcmp.ne.s32.totalorder %v2203, %v641
    %vm2315 = vcmp.ne.s32.totalorder %v2204, %v640
    %vm2316 = vcmp.ne.s32.totalorder %v2204, %v641
    %vm2317 = vcmp.ne.s32.totalorder %v2205, %v640
    %vm2318 = vcmp.ne.s32.totalorder %v2205, %v641
    %vm2319 = vcmp.ne.s32.totalorder %v2206, %v640
    %vm2320 = vcmp.ne.s32.totalorder %v2206, %v641
    %vm2321 = vcmp.ne.s32.totalorder %v2207, %v640
    %vm2322 = vcmp.ne.s32.totalorder %v2207, %v641
    %vm2323 = vcmp.ne.s32.totalorder %v2208, %v640
    %vm2324 = vcmp.ne.s32.totalorder %v2208, %v641
    %vm2325 = vcmp.ne.s32.totalorder %v2209, %v640
    %vm2326 = vcmp.ne.s32.totalorder %v2209, %v641
    %vm2327 = vcmp.ne.s32.totalorder %v2210, %v640
    %vm2328 = vcmp.ne.s32.totalorder %v2210, %v641
    %vm2329 = vcmp.ne.s32.totalorder %v2211, %v640
    %vm2330 = vcmp.ne.s32.totalorder %v2211, %v641
    %vm2331 = vcmp.ne.s32.totalorder %v2212, %v640
    %vm2332 = vcmp.ne.s32.totalorder %v2212, %v641
    %vm2333 = vcmp.ne.s32.totalorder %v2213, %v640
    %vm2334 = vcmp.ne.s32.totalorder %v2213, %v641
    %vm2335 = vcmp.ne.s32.totalorder %v2214, %v640
    %vm2336 = vcmp.ne.s32.totalorder %v2214, %v641
    %vm2337 = vcmp.ne.s32.totalorder %v2215, %v640
    %vm2338 = vcmp.ne.s32.totalorder %v2215, %v641
    %vm2339 = vcmp.ne.s32.totalorder %v2216, %v640
    %vm2340 = vcmp.ne.s32.totalorder %v2216, %v641
    %vm2341 = vcmp.ne.s32.totalorder %v2217, %v640
    %vm2342 = vcmp.ne.s32.totalorder %v2217, %v641
    %vm2343 = vcmp.ne.s32.totalorder %v2218, %v640
    %vm2344 = vcmp.ne.s32.totalorder %v2218, %v641
    %vm2345 = vcmp.ne.s32.totalorder %v2219, %v640
    %vm2346 = vcmp.ne.s32.totalorder %v2219, %v641
    %vm2347 = vcmp.ne.s32.totalorder %v2220, %v640
    %vm2348 = vcmp.ne.s32.totalorder %v2220, %v641
    %vm2349 = vcmp.ne.s32.totalorder %v2221, %v640
    %vm2350 = vcmp.ne.s32.totalorder %v2221, %v641
    %vm2351 = vcmp.ne.s32.totalorder %v2222, %v640
    %vm2352 = vcmp.ne.s32.totalorder %v2222, %v641
    %vm2353 = vcmp.ne.s32.totalorder %v2223, %v640
    %vm2354 = vcmp.ne.s32.totalorder %v2223, %v641
    %vm2355 = vcmp.ne.s32.totalorder %v2224, %v640
    %vm2356 = vcmp.ne.s32.totalorder %v2224, %v641
    %vm2357 = vcmp.ne.s32.totalorder %v2225, %v640
    %vm2358 = vcmp.ne.s32.totalorder %v2225, %v641
    %vm2359 = vcmp.ne.s32.totalorder %v2226, %v640
    %vm2360 = vcmp.ne.s32.totalorder %v2226, %v641
    %vm2361 = vcmp.ne.s32.totalorder %v2227, %v640
    %vm2362 = vcmp.ne.s32.totalorder %v2227, %v641
    %vm2363 = vcmp.ne.s32.totalorder %v2228, %v640
    %vm2364 = vcmp.ne.s32.totalorder %v2228, %v641
    %vm2365 = vcmp.ne.s32.totalorder %v2229, %v640
    %vm2366 = vcmp.ne.s32.totalorder %v2229, %v641
    %vm2367 = vmand %vm2239, %vm2303
    %vm2368 = vmand %vm2240, %vm2304
    %vm2369 = vmand %vm2241, %vm2305
    %vm2370 = vmand %vm2242, %vm2306
    %vm2371 = vmand %vm2243, %vm2307
    %vm2372 = vmand %vm2244, %vm2308
    %vm2373 = vmand %vm2245, %vm2309
    %vm2374 = vmand %vm2246, %vm2310
    %vm2375 = vmand %vm2247, %vm2311
    %vm2376 = vmand %vm2248, %vm2312
    %vm2377 = vmand %vm2249, %vm2313
    %vm2378 = vmand %vm2250, %vm2314
    %vm2379 = vmand %vm2251, %vm2315
    %vm2380 = vmand %vm2252, %vm2316
    %vm2381 = vmand %vm2253, %vm2317
    %vm2382 = vmand %vm2254, %vm2318
    %vm2383 = vmand %vm2255, %vm2319
    %vm2384 = vmand %vm2256, %vm2320
    %vm2385 = vmand %vm2257, %vm2321
    %vm2386 = vmand %vm2258, %vm2322
    %vm2387 = vmand %vm2259, %vm2323
    %vm2388 = vmand %vm2260, %vm2324
    %vm2389 = vmand %vm2261, %vm2325
    %vm2390 = vmand %vm2262, %vm2326
    %vm2391 = vmand %vm2263, %vm2327
    %vm2392 = vmand %vm2264, %vm2328
    %vm2393 = vmand %vm2265, %vm2329
    %vm2394 = vmand %vm2266, %vm2330
    %vm2395 = vmand %vm2267, %vm2331
    %vm2396 = vmand %vm2268, %vm2332
    %vm2397 = vmand %vm2269, %vm2333
    %vm2398 = vmand %vm2270, %vm2334
    %vm2399 = vmand %vm2271, %vm2335
    %vm2400 = vmand %vm2272, %vm2336
    %vm2401 = vmand %vm2273, %vm2337
    %vm2402 = vmand %vm2274, %vm2338
    %vm2403 = vmand %vm2275, %vm2339
    %vm2404 = vmand %vm2276, %vm2340
    %vm2405 = vmand %vm2277, %vm2341
    %vm2406 = vmand %vm2278, %vm2342
    %vm2407 = vmand %vm2279, %vm2343
    %vm2408 = vmand %vm2280, %vm2344
    %vm2409 = vmand %vm2281, %vm2345
    %vm2410 = vmand %vm2282, %vm2346
    %vm2411 = vmand %vm2283, %vm2347
    %vm2412 = vmand %vm2284, %vm2348
    %vm2413 = vmand %vm2285, %vm2349
    %vm2414 = vmand %vm2286, %vm2350
    %vm2415 = vmand %vm2287, %vm2351
    %vm2416 = vmand %vm2288, %vm2352
    %vm2417 = vmand %vm2289, %vm2353
    %vm2418 = vmand %vm2290, %vm2354
    %vm2419 = vmand %vm2291, %vm2355
    %vm2420 = vmand %vm2292, %vm2356
    %vm2421 = vmand %vm2293, %vm2357
    %vm2422 = vmand %vm2294, %vm2358
    %vm2423 = vmand %vm2295, %vm2359
    %vm2424 = vmand %vm2296, %vm2360
    %vm2425 = vmand %vm2297, %vm2361
    %vm2426 = vmand %vm2298, %vm2362
    %vm2427 = vmand %vm2299, %vm2363
    %vm2428 = vmand %vm2300, %vm2364
    %vm2429 = vmand %vm2301, %vm2365
    %vm2430 = vmand %vm2302, %vm2366
    %vm2431 = vcmp.lt.s32.totalorder %v2198, 8
    %vm2432 = vcmp.lt.s32.totalorder %v2199, 8
    %vm2433 = vcmp.lt.s32.totalorder %v2200, 8
    %vm2434 = vcmp.lt.s32.totalorder %v2201, 8
    %vm2435 = vcmp.lt.s32.totalorder %v2202, 8
    %vm2436 = vcmp.lt.s32.totalorder %v2203, 8
    %vm2437 = vcmp.lt.s32.totalorder %v2204, 8
    %vm2438 = vcmp.lt.s32.totalorder %v2205, 8
    %vm2439 = vcmp.lt.s32.totalorder %v2206, 8
    %vm2440 = vcmp.lt.s32.totalorder %v2207, 8
    %vm2441 = vcmp.lt.s32.totalorder %v2208, 8
    %vm2442 = vcmp.lt.s32.totalorder %v2209, 8
    %vm2443 = vcmp.lt.s32.totalorder %v2210, 8
    %vm2444 = vcmp.lt.s32.totalorder %v2211, 8
    %vm2445 = vcmp.lt.s32.totalorder %v2212, 8
    %vm2446 = vcmp.lt.s32.totalorder %v2213, 8
    %vm2447 = vcmp.lt.s32.totalorder %v2214, 8
    %vm2448 = vcmp.lt.s32.totalorder %v2215, 8
    %vm2449 = vcmp.lt.s32.totalorder %v2216, 8
    %vm2450 = vcmp.lt.s32.totalorder %v2217, 8
    %vm2451 = vcmp.lt.s32.totalorder %v2218, 8
    %vm2452 = vcmp.lt.s32.totalorder %v2219, 8
    %vm2453 = vcmp.lt.s32.totalorder %v2220, 8
    %vm2454 = vcmp.lt.s32.totalorder %v2221, 8
    %vm2455 = vcmp.lt.s32.totalorder %v2222, 8
    %vm2456 = vcmp.lt.s32.totalorder %v2223, 8
    %vm2457 = vcmp.lt.s32.totalorder %v2224, 8
    %vm2458 = vcmp.lt.s32.totalorder %v2225, 8
    %vm2459 = vcmp.lt.s32.totalorder %v2226, 8
    %vm2460 = vcmp.lt.s32.totalorder %v2227, 8
    %vm2461 = vcmp.lt.s32.totalorder %v2228, 8
    %vm2462 = vcmp.lt.s32.totalorder %v2229, 8
    %vm2463 = vmand %vm2367, %vm2431
    %vm2464 = vmand %vm2368, %vm2431
    %vm2465 = vmand %vm2369, %vm2432
    %vm2466 = vmand %vm2370, %vm2432
    %vm2467 = vmand %vm2371, %vm2433
    %vm2468 = vmand %vm2372, %vm2433
    %vm2469 = vmand %vm2373, %vm2434
    %vm2470 = vmand %vm2374, %vm2434
    %vm2471 = vmand %vm2375, %vm2435
    %vm2472 = vmand %vm2376, %vm2435
    %vm2473 = vmand %vm2377, %vm2436
    %vm2474 = vmand %vm2378, %vm2436
    %vm2475 = vmand %vm2379, %vm2437
    %vm2476 = vmand %vm2380, %vm2437
    %vm2477 = vmand %vm2381, %vm2438
    %vm2478 = vmand %vm2382, %vm2438
    %vm2479 = vmand %vm2383, %vm2439
    %vm2480 = vmand %vm2384, %vm2439
    %vm2481 = vmand %vm2385, %vm2440
    %vm2482 = vmand %vm2386, %vm2440
    %vm2483 = vmand %vm2387, %vm2441
    %vm2484 = vmand %vm2388, %vm2441
    %vm2485 = vmand %vm2389, %vm2442
    %vm2486 = vmand %vm2390, %vm2442
    %vm2487 = vmand %vm2391, %vm2443
    %vm2488 = vmand %vm2392, %vm2443
    %vm2489 = vmand %vm2393, %vm2444
    %vm2490 = vmand %vm2394, %vm2444
    %vm2491 = vmand %vm2395, %vm2445
    %vm2492 = vmand %vm2396, %vm2445
    %vm2493 = vmand %vm2397, %vm2446
    %vm2494 = vmand %vm2398, %vm2446
    %vm2495 = vmand %vm2399, %vm2447
    %vm2496 = vmand %vm2400, %vm2447
    %vm2497 = vmand %vm2401, %vm2448
    %vm2498 = vmand %vm2402, %vm2448
    %vm2499 = vmand %vm2403, %vm2449
    %vm2500 = vmand %vm2404, %vm2449
    %vm2501 = vmand %vm2405, %vm2450
    %vm2502 = vmand %vm2406, %vm2450
    %vm2503 = vmand %vm2407, %vm2451
    %vm2504 = vmand %vm2408, %vm2451
    %vm2505 = vmand %vm2409, %vm2452
    %vm2506 = vmand %vm2410, %vm2452
    %vm2507 = vmand %vm2411, %vm2453
    %vm2508 = vmand %vm2412, %vm2453
    %vm2509 = vmand %vm2413, %vm2454
    %vm2510 = vmand %vm2414, %vm2454
    %vm2511 = vmand %vm2415, %vm2455
    %vm2512 = vmand %vm2416, %vm2455
    %vm2513 = vmand %vm2417, %vm2456
    %vm2514 = vmand %vm2418, %vm2456
    %vm2515 = vmand %vm2419, %vm2457
    %vm2516 = vmand %vm2420, %vm2457
    %vm2517 = vmand %vm2421, %vm2458
    %vm2518 = vmand %vm2422, %vm2458
    %vm2519 = vmand %vm2423, %vm2459
    %vm2520 = vmand %vm2424, %vm2459
    %vm2521 = vmand %vm2425, %vm2460
    %vm2522 = vmand %vm2426, %vm2460
    %vm2523 = vmand %vm2427, %vm2461
    %vm2524 = vmand %vm2428, %vm2461
    %vm2525 = vmand %vm2429, %vm2462
    %vm2526 = vmand %vm2430, %vm2462
    %vm2527 = vcmp.lt.s32.totalorder %v640, 8
    %vm2528 = vcmp.lt.s32.totalorder %v641, 8
    %vm2529 = vmand %vm2463, %vm2527
    %vm2530 = vmand %vm2464, %vm2528
    %vm2531 = vmand %vm2465, %vm2527
    %vm2532 = vmand %vm2466, %vm2528
    %vm2533 = vmand %vm2467, %vm2527
    %vm2534 = vmand %vm2468, %vm2528
    %vm2535 = vmand %vm2469, %vm2527
    %vm2536 = vmand %vm2470, %vm2528
    %vm2537 = vmand %vm2471, %vm2527
    %vm2538 = vmand %vm2472, %vm2528
    %vm2539 = vmand %vm2473, %vm2527
    %vm2540 = vmand %vm2474, %vm2528
    %vm2541 = vmand %vm2475, %vm2527
    %vm2542 = vmand %vm2476, %vm2528
    %vm2543 = vmand %vm2477, %vm2527
    %vm2544 = vmand %vm2478, %vm2528
    %vm2545 = vmand %vm2479, %vm2527
    %vm2546 = vmand %vm2480, %vm2528
    %vm2547 = vmand %vm2481, %vm2527
    %vm2548 = vmand %vm2482, %vm2528
    %vm2549 = vmand %vm2483, %vm2527
    %vm2550 = vmand %vm2484, %vm2528
    %vm2551 = vmand %vm2485, %vm2527
    %vm2552 = vmand %vm2486, %vm2528
    %vm2553 = vmand %vm2487, %vm2527
    %vm2554 = vmand %vm2488, %vm2528
    %vm2555 = vmand %vm2489, %vm2527
    %vm2556 = vmand %vm2490, %vm2528
    %vm2557 = vmand %vm2491, %vm2527
    %vm2558 = vmand %vm2492, %vm2528
    %vm2559 = vmand %vm2493, %vm2527
    %vm2560 = vmand %vm2494, %vm2528
    %vm2561 = vmand %vm2495, %vm2527
    %vm2562 = vmand %vm2496, %vm2528
    %vm2563 = vmand %vm2497, %vm2527
    %vm2564 = vmand %vm2498, %vm2528
    %vm2565 = vmand %vm2499, %vm2527
    %vm2566 = vmand %vm2500, %vm2528
    %vm2567 = vmand %vm2501, %vm2527
    %vm2568 = vmand %vm2502, %vm2528
    %vm2569 = vmand %vm2503, %vm2527
    %vm2570 = vmand %vm2504, %vm2528
    %vm2571 = vmand %vm2505, %vm2527
    %vm2572 = vmand %vm2506, %vm2528
    %vm2573 = vmand %vm2507, %vm2527
    %vm2574 = vmand %vm2508, %vm2528
    %vm2575 = vmand %vm2509, %vm2527
    %vm2576 = vmand %vm2510, %vm2528
    %vm2577 = vmand %vm2511, %vm2527
    %vm2578 = vmand %vm2512, %vm2528
    %vm2579 = vmand %vm2513, %vm2527
    %vm2580 = vmand %vm2514, %vm2528
    %vm2581 = vmand %vm2515, %vm2527
    %vm2582 = vmand %vm2516, %vm2528
    %vm2583 = vmand %vm2517, %vm2527
    %vm2584 = vmand %vm2518, %vm2528
    %vm2585 = vmand %vm2519, %vm2527
    %vm2586 = vmand %vm2520, %vm2528
    %vm2587 = vmand %vm2521, %vm2527
    %vm2588 = vmand %vm2522, %vm2528
    %vm2589 = vmand %vm2523, %vm2527
    %vm2590 = vmand %vm2524, %vm2528
    %vm2591 = vmand %vm2525, %vm2527
    %vm2592 = vmand %vm2526, %vm2528
    %2594 = vset.pattern.permute.xlu0 0
    %2595 = vperm.xlu0 %2594, %v2067
    %v2596 = vpop.permute.xlu0 %2595
    %2599 = vset.pattern.permute.xlu0 0
    %2600 = vperm.xlu0 %2599, %v2068
    %v2601 = vpop.permute.xlu0 %2600
    %2604 = vset.pattern.permute.xlu0 0
    %2605 = vperm.xlu0 %2604, %v2069
    %v2606 = vpop.permute.xlu0 %2605
    %2609 = vset.pattern.permute.xlu0 0
    %2610 = vperm.xlu0 %2609, %v2070
    %v2611 = vpop.permute.xlu0 %2610
    %2614 = vset.pattern.permute.xlu0 0
    %2615 = vperm.xlu0 %2614, %v2071
    %v2616 = vpop.permute.xlu0 %2615
    %2619 = vset.pattern.permute.xlu0 0
    %2620 = vperm.xlu0 %2619, %v2072
    %v2621 = vpop.permute.xlu0 %2620
    %2624 = vset.pattern.permute.xlu0 0
    %2625 = vperm.xlu0 %2624, %v2073
    %v2626 = vpop.permute.xlu0 %2625
    %2629 = vset.pattern.permute.xlu0 0
    %2630 = vperm.xlu0 %2629, %v2074
    %v2631 = vpop.permute.xlu0 %2630
    %2634 = vset.pattern.permute.xlu0 0
    %2635 = vperm.xlu0 %2634, %v2075
    %v2636 = vpop.permute.xlu0 %2635
    %2639 = vset.pattern.permute.xlu0 0
    %2640 = vperm.xlu0 %2639, %v2076
    %v2641 = vpop.permute.xlu0 %2640
    %2644 = vset.pattern.permute.xlu0 0
    %2645 = vperm.xlu0 %2644, %v2077
    %v2646 = vpop.permute.xlu0 %2645
    %2649 = vset.pattern.permute.xlu0 0
    %2650 = vperm.xlu0 %2649, %v2078
    %v2651 = vpop.permute.xlu0 %2650
    %2654 = vset.pattern.permute.xlu0 0
    %2655 = vperm.xlu0 %2654, %v2079
    %v2656 = vpop.permute.xlu0 %2655
    %2659 = vset.pattern.permute.xlu0 0
    %2660 = vperm.xlu0 %2659, %v2080
    %v2661 = vpop.permute.xlu0 %2660
    %2664 = vset.pattern.permute.xlu0 0
    %2665 = vperm.xlu0 %2664, %v2081
    %v2666 = vpop.permute.xlu0 %2665
    %2669 = vset.pattern.permute.xlu0 0
    %2670 = vperm.xlu0 %2669, %v2082
    %v2671 = vpop.permute.xlu0 %2670
    %2674 = vset.pattern.permute.xlu0 0
    %2675 = vperm.xlu0 %2674, %v2083
    %v2676 = vpop.permute.xlu0 %2675
    %2679 = vset.pattern.permute.xlu0 0
    %2680 = vperm.xlu0 %2679, %v2084
    %v2681 = vpop.permute.xlu0 %2680
    %2684 = vset.pattern.permute.xlu0 0
    %2685 = vperm.xlu0 %2684, %v2085
    %v2686 = vpop.permute.xlu0 %2685
    %2689 = vset.pattern.permute.xlu0 0
    %2690 = vperm.xlu0 %2689, %v2086
    %v2691 = vpop.permute.xlu0 %2690
    %2694 = vset.pattern.permute.xlu0 0
    %2695 = vperm.xlu0 %2694, %v2087
    %v2696 = vpop.permute.xlu0 %2695
    %2699 = vset.pattern.permute.xlu0 0
    %2700 = vperm.xlu0 %2699, %v2088
    %v2701 = vpop.permute.xlu0 %2700
    %2704 = vset.pattern.permute.xlu0 0
    %2705 = vperm.xlu0 %2704, %v2089
    %v2706 = vpop.permute.xlu0 %2705
    %2709 = vset.pattern.permute.xlu0 0
    %2710 = vperm.xlu0 %2709, %v2090
    %v2711 = vpop.permute.xlu0 %2710
    %2714 = vset.pattern.permute.xlu0 0
    %2715 = vperm.xlu0 %2714, %v2091
    %v2716 = vpop.permute.xlu0 %2715
    %2719 = vset.pattern.permute.xlu0 0
    %2720 = vperm.xlu0 %2719, %v2092
    %v2721 = vpop.permute.xlu0 %2720
    %2724 = vset.pattern.permute.xlu0 0
    %2725 = vperm.xlu0 %2724, %v2093
    %v2726 = vpop.permute.xlu0 %2725
    %2729 = vset.pattern.permute.xlu0 0
    %2730 = vperm.xlu0 %2729, %v2094
    %v2731 = vpop.permute.xlu0 %2730
    %2734 = vset.pattern.permute.xlu0 0
    %2735 = vperm.xlu0 %2734, %v2095
    %v2736 = vpop.permute.xlu0 %2735
    %2739 = vset.pattern.permute.xlu0 0
    %2740 = vperm.xlu0 %2739, %v2096
    %v2741 = vpop.permute.xlu0 %2740
    %2744 = vset.pattern.permute.xlu0 0
    %2745 = vperm.xlu0 %2744, %v2097
    %v2746 = vpop.permute.xlu0 %2745
    %2749 = vset.pattern.permute.xlu0 0
    %2750 = vperm.xlu0 %2749, %v2098
    %v2751 = vpop.permute.xlu0 %2750
    %v2753 = vsub.f32 %v2596, %v2099
    %v2754 = vsub.f32 %v2596, %v2100
    %v2755 = vsub.f32 %v2601, %v2101
    %v2756 = vsub.f32 %v2601, %v2102
    %v2757 = vsub.f32 %v2606, %v2103
    %v2758 = vsub.f32 %v2606, %v2104
    %v2759 = vsub.f32 %v2611, %v2105
    %v2760 = vsub.f32 %v2611, %v2106
    %v2761 = vsub.f32 %v2616, %v2107
    %v2762 = vsub.f32 %v2616, %v2108
    %v2763 = vsub.f32 %v2621, %v2109
    %v2764 = vsub.f32 %v2621, %v2110
    %v2765 = vsub.f32 %v2626, %v2111
    %v2766 = vsub.f32 %v2626, %v2112
    %v2767 = vsub.f32 %v2631, %v2113
    %v2768 = vsub.f32 %v2631, %v2114
    %v2769 = vsub.f32 %v2636, %v2115
    %v2770 = vsub.f32 %v2636, %v2116
    %v2771 = vsub.f32 %v2641, %v2117
    %v2772 = vsub.f32 %v2641, %v2118
    %v2773 = vsub.f32 %v2646, %v2119
    %v2774 = vsub.f32 %v2646, %v2120
    %v2775 = vsub.f32 %v2651, %v2121
    %v2776 = vsub.f32 %v2651, %v2122
    %v2777 = vsub.f32 %v2656, %v2123
    %v2778 = vsub.f32 %v2656, %v2124
    %v2779 = vsub.f32 %v2661, %v2125
    %v2780 = vsub.f32 %v2661, %v2126
    %v2781 = vsub.f32 %v2666, %v2127
    %v2782 = vsub.f32 %v2666, %v2128
    %v2783 = vsub.f32 %v2671, %v2129
    %v2784 = vsub.f32 %v2671, %v2130
    %v2785 = vsub.f32 %v2676, %v2131
    %v2786 = vsub.f32 %v2676, %v2132
    %v2787 = vsub.f32 %v2681, %v2133
    %v2788 = vsub.f32 %v2681, %v2134
    %v2789 = vsub.f32 %v2686, %v2135
    %v2790 = vsub.f32 %v2686, %v2136
    %v2791 = vsub.f32 %v2691, %v2137
    %v2792 = vsub.f32 %v2691, %v2138
    %v2793 = vsub.f32 %v2696, %v2139
    %v2794 = vsub.f32 %v2696, %v2140
    %v2795 = vsub.f32 %v2701, %v2141
    %v2796 = vsub.f32 %v2701, %v2142
    %v2797 = vsub.f32 %v2706, %v2143
    %v2798 = vsub.f32 %v2706, %v2144
    %v2799 = vsub.f32 %v2711, %v2145
    %v2800 = vsub.f32 %v2711, %v2146
    %v2801 = vsub.f32 %v2716, %v2147
    %v2802 = vsub.f32 %v2716, %v2148
    %v2803 = vsub.f32 %v2721, %v2149
    %v2804 = vsub.f32 %v2721, %v2150
    %v2805 = vsub.f32 %v2726, %v2151
    %v2806 = vsub.f32 %v2726, %v2152
    %v2807 = vsub.f32 %v2731, %v2153
    %v2808 = vsub.f32 %v2731, %v2154
    %v2809 = vsub.f32 %v2736, %v2155
    %v2810 = vsub.f32 %v2736, %v2156
    %v2811 = vsub.f32 %v2741, %v2157
    %v2812 = vsub.f32 %v2741, %v2158
    %v2813 = vsub.f32 %v2746, %v2159
    %v2814 = vsub.f32 %v2746, %v2160
    %v2815 = vsub.f32 %v2751, %v2161
    %v2816 = vsub.f32 %v2751, %v2162
    %v2817 = vmax.f32 %v2753, 0.0
    %v2818 = vmax.f32 %v2754, 0.0
    %v2819 = vmax.f32 %v2755, 0.0
    %v2820 = vmax.f32 %v2756, 0.0
    %v2821 = vmax.f32 %v2757, 0.0
    %v2822 = vmax.f32 %v2758, 0.0
    %v2823 = vmax.f32 %v2759, 0.0
    %v2824 = vmax.f32 %v2760, 0.0
    %v2825 = vmax.f32 %v2761, 0.0
    %v2826 = vmax.f32 %v2762, 0.0
    %v2827 = vmax.f32 %v2763, 0.0
    %v2828 = vmax.f32 %v2764, 0.0
    %v2829 = vmax.f32 %v2765, 0.0
    %v2830 = vmax.f32 %v2766, 0.0
    %v2831 = vmax.f32 %v2767, 0.0
    %v2832 = vmax.f32 %v2768, 0.0
    %v2833 = vmax.f32 %v2769, 0.0
    %v2834 = vmax.f32 %v2770, 0.0
    %v2835 = vmax.f32 %v2771, 0.0
    %v2836 = vmax.f32 %v2772, 0.0
    %v2837 = vmax.f32 %v2773, 0.0
    %v2838 = vmax.f32 %v2774, 0.0
    %v2839 = vmax.f32 %v2775, 0.0
    %v2840 = vmax.f32 %v2776, 0.0
    %v2841 = vmax.f32 %v2777, 0.0
    %v2842 = vmax.f32 %v2778, 0.0
    %v2843 = vmax.f32 %v2779, 0.0
    %v2844 = vmax.f32 %v2780, 0.0
    %v2845 = vmax.f32 %v2781, 0.0
    %v2846 = vmax.f32 %v2782, 0.0
    %v2847 = vmax.f32 %v2783, 0.0
    %v2848 = vmax.f32 %v2784, 0.0
    %v2849 = vmax.f32 %v2785, 0.0
    %v2850 = vmax.f32 %v2786, 0.0
    %v2851 = vmax.f32 %v2787, 0.0
    %v2852 = vmax.f32 %v2788, 0.0
    %v2853 = vmax.f32 %v2789, 0.0
    %v2854 = vmax.f32 %v2790, 0.0
    %v2855 = vmax.f32 %v2791, 0.0
    %v2856 = vmax.f32 %v2792, 0.0
    %v2857 = vmax.f32 %v2793, 0.0
    %v2858 = vmax.f32 %v2794, 0.0
    %v2859 = vmax.f32 %v2795, 0.0
    %v2860 = vmax.f32 %v2796, 0.0
    %v2861 = vmax.f32 %v2797, 0.0
    %v2862 = vmax.f32 %v2798, 0.0
    %v2863 = vmax.f32 %v2799, 0.0
    %v2864 = vmax.f32 %v2800, 0.0
    %v2865 = vmax.f32 %v2801, 0.0
    %v2866 = vmax.f32 %v2802, 0.0
    %v2867 = vmax.f32 %v2803, 0.0
    %v2868 = vmax.f32 %v2804, 0.0
    %v2869 = vmax.f32 %v2805, 0.0
    %v2870 = vmax.f32 %v2806, 0.0
    %v2871 = vmax.f32 %v2807, 0.0
    %v2872 = vmax.f32 %v2808, 0.0
    %v2873 = vmax.f32 %v2809, 0.0
    %v2874 = vmax.f32 %v2810, 0.0
    %v2875 = vmax.f32 %v2811, 0.0
    %v2876 = vmax.f32 %v2812, 0.0
    %v2877 = vmax.f32 %v2813, 0.0
    %v2878 = vmax.f32 %v2814, 0.0
    %v2879 = vmax.f32 %v2815, 0.0
    %v2880 = vmax.f32 %v2816, 0.0
    %v2881 = vand.u32 2147483647, %v2753
    %v2882 = vand.u32 2147483647, %v2754
    %v2883 = vand.u32 2147483647, %v2755
    %v2884 = vand.u32 2147483647, %v2756
    %v2885 = vand.u32 2147483647, %v2757
    %v2886 = vand.u32 2147483647, %v2758
    %v2887 = vand.u32 2147483647, %v2759
    %v2888 = vand.u32 2147483647, %v2760
    %v2889 = vand.u32 2147483647, %v2761
    %v2890 = vand.u32 2147483647, %v2762
    %v2891 = vand.u32 2147483647, %v2763
    %v2892 = vand.u32 2147483647, %v2764
    %v2893 = vand.u32 2147483647, %v2765
    %v2894 = vand.u32 2147483647, %v2766
    %v2895 = vand.u32 2147483647, %v2767
    %v2896 = vand.u32 2147483647, %v2768
    %v2897 = vand.u32 2147483647, %v2769
    %v2898 = vand.u32 2147483647, %v2770
    %v2899 = vand.u32 2147483647, %v2771
    %v2900 = vand.u32 2147483647, %v2772
    %v2901 = vand.u32 2147483647, %v2773
    %v2902 = vand.u32 2147483647, %v2774
    %v2903 = vand.u32 2147483647, %v2775
    %v2904 = vand.u32 2147483647, %v2776
    %v2905 = vand.u32 2147483647, %v2777
    %v2906 = vand.u32 2147483647, %v2778
    %v2907 = vand.u32 2147483647, %v2779
    %v2908 = vand.u32 2147483647, %v2780
    %v2909 = vand.u32 2147483647, %v2781
    %v2910 = vand.u32 2147483647, %v2782
    %v2911 = vand.u32 2147483647, %v2783
    %v2912 = vand.u32 2147483647, %v2784
    %v2913 = vand.u32 2147483647, %v2785
    %v2914 = vand.u32 2147483647, %v2786
    %v2915 = vand.u32 2147483647, %v2787
    %v2916 = vand.u32 2147483647, %v2788
    %v2917 = vand.u32 2147483647, %v2789
    %v2918 = vand.u32 2147483647, %v2790
    %v2919 = vand.u32 2147483647, %v2791
    %v2920 = vand.u32 2147483647, %v2792
    %v2921 = vand.u32 2147483647, %v2793
    %v2922 = vand.u32 2147483647, %v2794
    %v2923 = vand.u32 2147483647, %v2795
    %v2924 = vand.u32 2147483647, %v2796
    %v2925 = vand.u32 2147483647, %v2797
    %v2926 = vand.u32 2147483647, %v2798
    %v2927 = vand.u32 2147483647, %v2799
    %v2928 = vand.u32 2147483647, %v2800
    %v2929 = vand.u32 2147483647, %v2801
    %v2930 = vand.u32 2147483647, %v2802
    %v2931 = vand.u32 2147483647, %v2803
    %v2932 = vand.u32 2147483647, %v2804
    %v2933 = vand.u32 2147483647, %v2805
    %v2934 = vand.u32 2147483647, %v2806
    %v2935 = vand.u32 2147483647, %v2807
    %v2936 = vand.u32 2147483647, %v2808
    %v2937 = vand.u32 2147483647, %v2809
    %v2938 = vand.u32 2147483647, %v2810
    %v2939 = vand.u32 2147483647, %v2811
    %v2940 = vand.u32 2147483647, %v2812
    %v2941 = vand.u32 2147483647, %v2813
    %v2942 = vand.u32 2147483647, %v2814
    %v2943 = vand.u32 2147483647, %v2815
    %v2944 = vand.u32 2147483647, %v2816
    %v2945 = vsub.f32 0.0, %v2881
    %v2946 = vsub.f32 0.0, %v2882
    %v2947 = vsub.f32 0.0, %v2883
    %v2948 = vsub.f32 0.0, %v2884
    %v2949 = vsub.f32 0.0, %v2885
    %v2950 = vsub.f32 0.0, %v2886
    %v2951 = vsub.f32 0.0, %v2887
    %v2952 = vsub.f32 0.0, %v2888
    %v2953 = vsub.f32 0.0, %v2889
    %v2954 = vsub.f32 0.0, %v2890
    %v2955 = vsub.f32 0.0, %v2891
    %v2956 = vsub.f32 0.0, %v2892
    %v2957 = vsub.f32 0.0, %v2893
    %v2958 = vsub.f32 0.0, %v2894
    %v2959 = vsub.f32 0.0, %v2895
    %v2960 = vsub.f32 0.0, %v2896
    %v2961 = vsub.f32 0.0, %v2897
    %v2962 = vsub.f32 0.0, %v2898
    %v2963 = vsub.f32 0.0, %v2899
    %v2964 = vsub.f32 0.0, %v2900
    %v2965 = vsub.f32 0.0, %v2901
    %v2966 = vsub.f32 0.0, %v2902
    %v2967 = vsub.f32 0.0, %v2903
    %v2968 = vsub.f32 0.0, %v2904
    %v2969 = vsub.f32 0.0, %v2905
    %v2970 = vsub.f32 0.0, %v2906
    %v2971 = vsub.f32 0.0, %v2907
    %v2972 = vsub.f32 0.0, %v2908
    %v2973 = vsub.f32 0.0, %v2909
    %v2974 = vsub.f32 0.0, %v2910
    %v2975 = vsub.f32 0.0, %v2911
    %v2976 = vsub.f32 0.0, %v2912
    %v2977 = vsub.f32 0.0, %v2913
    %v2978 = vsub.f32 0.0, %v2914
    %v2979 = vsub.f32 0.0, %v2915
    %v2980 = vsub.f32 0.0, %v2916
    %v2981 = vsub.f32 0.0, %v2917
    %v2982 = vsub.f32 0.0, %v2918
    %v2983 = vsub.f32 0.0, %v2919
    %v2984 = vsub.f32 0.0, %v2920
    %v2985 = vsub.f32 0.0, %v2921
    %v2986 = vsub.f32 0.0, %v2922
    %v2987 = vsub.f32 0.0, %v2923
    %v2988 = vsub.f32 0.0, %v2924
    %v2989 = vsub.f32 0.0, %v2925
    %v2990 = vsub.f32 0.0, %v2926
    %v2991 = vsub.f32 0.0, %v2927
    %v2992 = vsub.f32 0.0, %v2928
    %v2993 = vsub.f32 0.0, %v2929
    %v2994 = vsub.f32 0.0, %v2930
    %v2995 = vsub.f32 0.0, %v2931
    %v2996 = vsub.f32 0.0, %v2932
    %v2997 = vsub.f32 0.0, %v2933
    %v2998 = vsub.f32 0.0, %v2934
    %v2999 = vsub.f32 0.0, %v2935
    %v3000 = vsub.f32 0.0, %v2936
    %v3001 = vsub.f32 0.0, %v2937
    %v3002 = vsub.f32 0.0, %v2938
    %v3003 = vsub.f32 0.0, %v2939
    %v3004 = vsub.f32 0.0, %v2940
    %v3005 = vsub.f32 0.0, %v2941
    %v3006 = vsub.f32 0.0, %v2942
    %v3007 = vsub.f32 0.0, %v2943
    %v3008 = vsub.f32 0.0, %v2944
    %v3009 = vmul.f32 %v2945, 1.442695
    %v3010 = vpow.pop %v3009
    %v3011 = vmul.f32 %v2946, 1.442695
    %v3012 = vpow.pop %v3011
    %v3013 = vmul.f32 %v2947, 1.442695
    %v3014 = vpow.pop %v3013
    %v3015 = vmul.f32 %v2948, 1.442695
    %v3016 = vpow.pop %v3015
    %v3017 = vmul.f32 %v2949, 1.442695
    %v3018 = vpow.pop %v3017
    %v3019 = vmul.f32 %v2950, 1.442695
    %v3020 = vpow.pop %v3019
    %v3021 = vmul.f32 %v2951, 1.442695
    %v3022 = vpow.pop %v3021
    %v3023 = vmul.f32 %v2952, 1.442695
    %v3024 = vpow.pop %v3023
    %v3025 = vmul.f32 %v2953, 1.442695
    %v3026 = vpow.pop %v3025
    %v3027 = vmul.f32 %v2954, 1.442695
    %v3028 = vpow.pop %v3027
    %v3029 = vmul.f32 %v2955, 1.442695
    %v3030 = vpow.pop %v3029
    %v3031 = vmul.f32 %v2956, 1.442695
    %v3032 = vpow.pop %v3031
    %v3033 = vmul.f32 %v2957, 1.442695
    %v3034 = vpow.pop %v3033
    %v3035 = vmul.f32 %v2958, 1.442695
    %v3036 = vpow.pop %v3035
    %v3037 = vmul.f32 %v2959, 1.442695
    %v3038 = vpow.pop %v3037
    %v3039 = vmul.f32 %v2960, 1.442695
    %v3040 = vpow.pop %v3039
    %v3041 = vmul.f32 %v2961, 1.442695
    %v3042 = vpow.pop %v3041
    %v3043 = vmul.f32 %v2962, 1.442695
    %v3044 = vpow.pop %v3043
    %v3045 = vmul.f32 %v2963, 1.442695
    %v3046 = vpow.pop %v3045
    %v3047 = vmul.f32 %v2964, 1.442695
    %v3048 = vpow.pop %v3047
    %v3049 = vmul.f32 %v2965, 1.442695
    %v3050 = vpow.pop %v3049
    %v3051 = vmul.f32 %v2966, 1.442695
    %v3052 = vpow.pop %v3051
    %v3053 = vmul.f32 %v2967, 1.442695
    %v3054 = vpow.pop %v3053
    %v3055 = vmul.f32 %v2968, 1.442695
    %v3056 = vpow.pop %v3055
    %v3057 = vmul.f32 %v2969, 1.442695
    %v3058 = vpow.pop %v3057
    %v3059 = vmul.f32 %v2970, 1.442695
    %v3060 = vpow.pop %v3059
    %v3061 = vmul.f32 %v2971, 1.442695
    %v3062 = vpow.pop %v3061
    %v3063 = vmul.f32 %v2972, 1.442695
    %v3064 = vpow.pop %v3063
    %v3065 = vmul.f32 %v2973, 1.442695
    %v3066 = vpow.pop %v3065
    %v3067 = vmul.f32 %v2974, 1.442695
    %v3068 = vpow.pop %v3067
    %v3069 = vmul.f32 %v2975, 1.442695
    %v3070 = vpow.pop %v3069
    %v3071 = vmul.f32 %v2976, 1.442695
    %v3072 = vpow.pop %v3071
    %v3073 = vmul.f32 %v2977, 1.442695
    %v3074 = vpow.pop %v3073
    %v3075 = vmul.f32 %v2978, 1.442695
    %v3076 = vpow.pop %v3075
    %v3077 = vmul.f32 %v2979, 1.442695
    %v3078 = vpow.pop %v3077
    %v3079 = vmul.f32 %v2980, 1.442695
    %v3080 = vpow.pop %v3079
    %v3081 = vmul.f32 %v2981, 1.442695
    %v3082 = vpow.pop %v3081
    %v3083 = vmul.f32 %v2982, 1.442695
    %v3084 = vpow.pop %v3083
    %v3085 = vmul.f32 %v2983, 1.442695
    %v3086 = vpow.pop %v3085
    %v3087 = vmul.f32 %v2984, 1.442695
    %v3088 = vpow.pop %v3087
    %v3089 = vmul.f32 %v2985, 1.442695
    %v3090 = vpow.pop %v3089
    %v3091 = vmul.f32 %v2986, 1.442695
    %v3092 = vpow.pop %v3091
    %v3093 = vmul.f32 %v2987, 1.442695
    %v3094 = vpow.pop %v3093
    %v3095 = vmul.f32 %v2988, 1.442695
    %v3096 = vpow.pop %v3095
    %v3097 = vmul.f32 %v2989, 1.442695
    %v3098 = vpow.pop %v3097
    %v3099 = vmul.f32 %v2990, 1.442695
    %v3100 = vpow.pop %v3099
    %v3101 = vmul.f32 %v2991, 1.442695
    %v3102 = vpow.pop %v3101
    %v3103 = vmul.f32 %v2992, 1.442695
    %v3104 = vpow.pop %v3103
    %v3105 = vmul.f32 %v2993, 1.442695
    %v3106 = vpow.pop %v3105
    %v3107 = vmul.f32 %v2994, 1.442695
    %v3108 = vpow.pop %v3107
    %v3109 = vmul.f32 %v2995, 1.442695
    %v3110 = vpow.pop %v3109
    %v3111 = vmul.f32 %v2996, 1.442695
    %v3112 = vpow.pop %v3111
    %v3113 = vmul.f32 %v2997, 1.442695
    %v3114 = vpow.pop %v3113
    %v3115 = vmul.f32 %v2998, 1.442695
    %v3116 = vpow.pop %v3115
    %v3117 = vmul.f32 %v2999, 1.442695
    %v3118 = vpow.pop %v3117
    %v3119 = vmul.f32 %v3000, 1.442695
    %v3120 = vpow.pop %v3119
    %v3121 = vmul.f32 %v3001, 1.442695
    %v3122 = vpow.pop %v3121
    %v3123 = vmul.f32 %v3002, 1.442695
    %v3124 = vpow.pop %v3123
    %v3125 = vmul.f32 %v3003, 1.442695
    %v3126 = vpow.pop %v3125
    %v3127 = vmul.f32 %v3004, 1.442695
    %v3128 = vpow.pop %v3127
    %v3129 = vmul.f32 %v3005, 1.442695
    %v3130 = vpow.pop %v3129
    %v3131 = vmul.f32 %v3006, 1.442695
    %v3132 = vpow.pop %v3131
    %v3133 = vmul.f32 %v3007, 1.442695
    %v3134 = vpow.pop %v3133
    %v3135 = vmul.f32 %v3008, 1.442695
    %v3136 = vpow.pop %v3135
    %v3137 = vadd.f32 %v3010, 1.0
    %v3138 = vadd.f32 %v3012, 1.0
    %v3139 = vadd.f32 %v3014, 1.0
    %v3140 = vadd.f32 %v3016, 1.0
    %v3141 = vadd.f32 %v3018, 1.0
    %v3142 = vadd.f32 %v3020, 1.0
    %v3143 = vadd.f32 %v3022, 1.0
    %v3144 = vadd.f32 %v3024, 1.0
    %v3145 = vadd.f32 %v3026, 1.0
    %v3146 = vadd.f32 %v3028, 1.0
    %v3147 = vadd.f32 %v3030, 1.0
    %v3148 = vadd.f32 %v3032, 1.0
    %v3149 = vadd.f32 %v3034, 1.0
    %v3150 = vadd.f32 %v3036, 1.0
    %v3151 = vadd.f32 %v3038, 1.0
    %v3152 = vadd.f32 %v3040, 1.0
    %v3153 = vadd.f32 %v3042, 1.0
    %v3154 = vadd.f32 %v3044, 1.0
    %v3155 = vadd.f32 %v3046, 1.0
    %v3156 = vadd.f32 %v3048, 1.0
    %v3157 = vadd.f32 %v3050, 1.0
    %v3158 = vadd.f32 %v3052, 1.0
    %v3159 = vadd.f32 %v3054, 1.0
    %v3160 = vadd.f32 %v3056, 1.0
    %v3161 = vadd.f32 %v3058, 1.0
    %v3162 = vadd.f32 %v3060, 1.0
    %v3163 = vadd.f32 %v3062, 1.0
    %v3164 = vadd.f32 %v3064, 1.0
    %v3165 = vadd.f32 %v3066, 1.0
    %v3166 = vadd.f32 %v3068, 1.0
    %v3167 = vadd.f32 %v3070, 1.0
    %v3168 = vadd.f32 %v3072, 1.0
    %v3169 = vadd.f32 %v3074, 1.0
    %v3170 = vadd.f32 %v3076, 1.0
    %v3171 = vadd.f32 %v3078, 1.0
    %v3172 = vadd.f32 %v3080, 1.0
    %v3173 = vadd.f32 %v3082, 1.0
    %v3174 = vadd.f32 %v3084, 1.0
    %v3175 = vadd.f32 %v3086, 1.0
    %v3176 = vadd.f32 %v3088, 1.0
    %v3177 = vadd.f32 %v3090, 1.0
    %v3178 = vadd.f32 %v3092, 1.0
    %v3179 = vadd.f32 %v3094, 1.0
    %v3180 = vadd.f32 %v3096, 1.0
    %v3181 = vadd.f32 %v3098, 1.0
    %v3182 = vadd.f32 %v3100, 1.0
    %v3183 = vadd.f32 %v3102, 1.0
    %v3184 = vadd.f32 %v3104, 1.0
    %v3185 = vadd.f32 %v3106, 1.0
    %v3186 = vadd.f32 %v3108, 1.0
    %v3187 = vadd.f32 %v3110, 1.0
    %v3188 = vadd.f32 %v3112, 1.0
    %v3189 = vadd.f32 %v3114, 1.0
    %v3190 = vadd.f32 %v3116, 1.0
    %v3191 = vadd.f32 %v3118, 1.0
    %v3192 = vadd.f32 %v3120, 1.0
    %v3193 = vadd.f32 %v3122, 1.0
    %v3194 = vadd.f32 %v3124, 1.0
    %v3195 = vadd.f32 %v3126, 1.0
    %v3196 = vadd.f32 %v3128, 1.0
    %v3197 = vadd.f32 %v3130, 1.0
    %v3198 = vadd.f32 %v3132, 1.0
    %v3199 = vadd.f32 %v3134, 1.0
    %v3200 = vadd.f32 %v3136, 1.0
    %v3201 = vlog2.pop %v3137
    %v3202 = vmul.f32 %v3201, 0.6931472
    %v3203 = vlog2.pop %v3138
    %v3204 = vmul.f32 %v3203, 0.6931472
    %v3205 = vlog2.pop %v3139
    %v3206 = vmul.f32 %v3205, 0.6931472
    %v3207 = vlog2.pop %v3140
    %v3208 = vmul.f32 %v3207, 0.6931472
    %v3209 = vlog2.pop %v3141
    %v3210 = vmul.f32 %v3209, 0.6931472
    %v3211 = vlog2.pop %v3142
    %v3212 = vmul.f32 %v3211, 0.6931472
    %v3213 = vlog2.pop %v3143
    %v3214 = vmul.f32 %v3213, 0.6931472
    %v3215 = vlog2.pop %v3144
    %v3216 = vmul.f32 %v3215, 0.6931472
    %v3217 = vlog2.pop %v3145
    %v3218 = vmul.f32 %v3217, 0.6931472
    %v3219 = vlog2.pop %v3146
    %v3220 = vmul.f32 %v3219, 0.6931472
    %v3221 = vlog2.pop %v3147
    %v3222 = vmul.f32 %v3221, 0.6931472
    %v3223 = vlog2.pop %v3148
    %v3224 = vmul.f32 %v3223, 0.6931472
    %v3225 = vlog2.pop %v3149
    %v3226 = vmul.f32 %v3225, 0.6931472
    %v3227 = vlog2.pop %v3150
    %v3228 = vmul.f32 %v3227, 0.6931472
    %v3229 = vlog2.pop %v3151
    %v3230 = vmul.f32 %v3229, 0.6931472
    %v3231 = vlog2.pop %v3152
    %v3232 = vmul.f32 %v3231, 0.6931472
    %v3233 = vlog2.pop %v3153
    %v3234 = vmul.f32 %v3233, 0.6931472
    %v3235 = vlog2.pop %v3154
    %v3236 = vmul.f32 %v3235, 0.6931472
    %v3237 = vlog2.pop %v3155
    %v3238 = vmul.f32 %v3237, 0.6931472
    %v3239 = vlog2.pop %v3156
    %v3240 = vmul.f32 %v3239, 0.6931472
    %v3241 = vlog2.pop %v3157
    %v3242 = vmul.f32 %v3241, 0.6931472
    %v3243 = vlog2.pop %v3158
    %v3244 = vmul.f32 %v3243, 0.6931472
    %v3245 = vlog2.pop %v3159
    %v3246 = vmul.f32 %v3245, 0.6931472
    %v3247 = vlog2.pop %v3160
    %v3248 = vmul.f32 %v3247, 0.6931472
    %v3249 = vlog2.pop %v3161
    %v3250 = vmul.f32 %v3249, 0.6931472
    %v3251 = vlog2.pop %v3162
    %v3252 = vmul.f32 %v3251, 0.6931472
    %v3253 = vlog2.pop %v3163
    %v3254 = vmul.f32 %v3253, 0.6931472
    %v3255 = vlog2.pop %v3164
    %v3256 = vmul.f32 %v3255, 0.6931472
    %v3257 = vlog2.pop %v3165
    %v3258 = vmul.f32 %v3257, 0.6931472
    %v3259 = vlog2.pop %v3166
    %v3260 = vmul.f32 %v3259, 0.6931472
    %v3261 = vlog2.pop %v3167
    %v3262 = vmul.f32 %v3261, 0.6931472
    %v3263 = vlog2.pop %v3168
    %v3264 = vmul.f32 %v3263, 0.6931472
    %v3265 = vlog2.pop %v3169
    %v3266 = vmul.f32 %v3265, 0.6931472
    %v3267 = vlog2.pop %v3170
    %v3268 = vmul.f32 %v3267, 0.6931472
    %v3269 = vlog2.pop %v3171
    %v3270 = vmul.f32 %v3269, 0.6931472
    %v3271 = vlog2.pop %v3172
    %v3272 = vmul.f32 %v3271, 0.6931472
    %v3273 = vlog2.pop %v3173
    %v3274 = vmul.f32 %v3273, 0.6931472
    %v3275 = vlog2.pop %v3174
    %v3276 = vmul.f32 %v3275, 0.6931472
    %v3277 = vlog2.pop %v3175
    %v3278 = vmul.f32 %v3277, 0.6931472
    %v3279 = vlog2.pop %v3176
    %v3280 = vmul.f32 %v3279, 0.6931472
    %v3281 = vlog2.pop %v3177
    %v3282 = vmul.f32 %v3281, 0.6931472
    %v3283 = vlog2.pop %v3178
    %v3284 = vmul.f32 %v3283, 0.6931472
    %v3285 = vlog2.pop %v3179
    %v3286 = vmul.f32 %v3285, 0.6931472
    %v3287 = vlog2.pop %v3180
    %v3288 = vmul.f32 %v3287, 0.6931472
    %v3289 = vlog2.pop %v3181
    %v3290 = vmul.f32 %v3289, 0.6931472
    %v3291 = vlog2.pop %v3182
    %v3292 = vmul.f32 %v3291, 0.6931472
    %v3293 = vlog2.pop %v3183
    %v3294 = vmul.f32 %v3293, 0.6931472
    %v3295 = vlog2.pop %v3184
    %v3296 = vmul.f32 %v3295, 0.6931472
    %v3297 = vlog2.pop %v3185
    %v3298 = vmul.f32 %v3297, 0.6931472
    %v3299 = vlog2.pop %v3186
    %v3300 = vmul.f32 %v3299, 0.6931472
    %v3301 = vlog2.pop %v3187
    %v3302 = vmul.f32 %v3301, 0.6931472
    %v3303 = vlog2.pop %v3188
    %v3304 = vmul.f32 %v3303, 0.6931472
    %v3305 = vlog2.pop %v3189
    %v3306 = vmul.f32 %v3305, 0.6931472
    %v3307 = vlog2.pop %v3190
    %v3308 = vmul.f32 %v3307, 0.6931472
    %v3309 = vlog2.pop %v3191
    %v3310 = vmul.f32 %v3309, 0.6931472
    %v3311 = vlog2.pop %v3192
    %v3312 = vmul.f32 %v3311, 0.6931472
    %v3313 = vlog2.pop %v3193
    %v3314 = vmul.f32 %v3313, 0.6931472
    %v3315 = vlog2.pop %v3194
    %v3316 = vmul.f32 %v3315, 0.6931472
    %v3317 = vlog2.pop %v3195
    %v3318 = vmul.f32 %v3317, 0.6931472
    %v3319 = vlog2.pop %v3196
    %v3320 = vmul.f32 %v3319, 0.6931472
    %v3321 = vlog2.pop %v3197
    %v3322 = vmul.f32 %v3321, 0.6931472
    %v3323 = vlog2.pop %v3198
    %v3324 = vmul.f32 %v3323, 0.6931472
    %v3325 = vlog2.pop %v3199
    %v3326 = vmul.f32 %v3325, 0.6931472
    %v3327 = vlog2.pop %v3200
    %v3328 = vmul.f32 %v3327, 0.6931472
    %v3329 = vadd.f32 %v2817, %v3202
    %v3330 = vadd.f32 %v2818, %v3204
    %v3331 = vadd.f32 %v2819, %v3206
    %v3332 = vadd.f32 %v2820, %v3208
    %v3333 = vadd.f32 %v2821, %v3210
    %v3334 = vadd.f32 %v2822, %v3212
    %v3335 = vadd.f32 %v2823, %v3214
    %v3336 = vadd.f32 %v2824, %v3216
    %v3337 = vadd.f32 %v2825, %v3218
    %v3338 = vadd.f32 %v2826, %v3220
    %v3339 = vadd.f32 %v2827, %v3222
    %v3340 = vadd.f32 %v2828, %v3224
    %v3341 = vadd.f32 %v2829, %v3226
    %v3342 = vadd.f32 %v2830, %v3228
    %v3343 = vadd.f32 %v2831, %v3230
    %v3344 = vadd.f32 %v2832, %v3232
    %v3345 = vadd.f32 %v2833, %v3234
    %v3346 = vadd.f32 %v2834, %v3236
    %v3347 = vadd.f32 %v2835, %v3238
    %v3348 = vadd.f32 %v2836, %v3240
    %v3349 = vadd.f32 %v2837, %v3242
    %v3350 = vadd.f32 %v2838, %v3244
    %v3351 = vadd.f32 %v2839, %v3246
    %v3352 = vadd.f32 %v2840, %v3248
    %v3353 = vadd.f32 %v2841, %v3250
    %v3354 = vadd.f32 %v2842, %v3252
    %v3355 = vadd.f32 %v2843, %v3254
    %v3356 = vadd.f32 %v2844, %v3256
    %v3357 = vadd.f32 %v2845, %v3258
    %v3358 = vadd.f32 %v2846, %v3260
    %v3359 = vadd.f32 %v2847, %v3262
    %v3360 = vadd.f32 %v2848, %v3264
    %v3361 = vadd.f32 %v2849, %v3266
    %v3362 = vadd.f32 %v2850, %v3268
    %v3363 = vadd.f32 %v2851, %v3270
    %v3364 = vadd.f32 %v2852, %v3272
    %v3365 = vadd.f32 %v2853, %v3274
    %v3366 = vadd.f32 %v2854, %v3276
    %v3367 = vadd.f32 %v2855, %v3278
    %v3368 = vadd.f32 %v2856, %v3280
    %v3369 = vadd.f32 %v2857, %v3282
    %v3370 = vadd.f32 %v2858, %v3284
    %v3371 = vadd.f32 %v2859, %v3286
    %v3372 = vadd.f32 %v2860, %v3288
    %v3373 = vadd.f32 %v2861, %v3290
    %v3374 = vadd.f32 %v2862, %v3292
    %v3375 = vadd.f32 %v2863, %v3294
    %v3376 = vadd.f32 %v2864, %v3296
    %v3377 = vadd.f32 %v2865, %v3298
    %v3378 = vadd.f32 %v2866, %v3300
    %v3379 = vadd.f32 %v2867, %v3302
    %v3380 = vadd.f32 %v2868, %v3304
    %v3381 = vadd.f32 %v2869, %v3306
    %v3382 = vadd.f32 %v2870, %v3308
    %v3383 = vadd.f32 %v2871, %v3310
    %v3384 = vadd.f32 %v2872, %v3312
    %v3385 = vadd.f32 %v2873, %v3314
    %v3386 = vadd.f32 %v2874, %v3316
    %v3387 = vadd.f32 %v2875, %v3318
    %v3388 = vadd.f32 %v2876, %v3320
    %v3389 = vadd.f32 %v2877, %v3322
    %v3390 = vadd.f32 %v2878, %v3324
    %v3391 = vadd.f32 %v2879, %v3326
    %v3392 = vadd.f32 %v2880, %v3328
    %v3393 = vsel %vm2529, %v3329, 0.0
    %v3394 = vsel %vm2530, %v3330, 0.0
    %v3395 = vsel %vm2531, %v3331, 0.0
    %v3396 = vsel %vm2532, %v3332, 0.0
    %v3397 = vsel %vm2533, %v3333, 0.0
    %v3398 = vsel %vm2534, %v3334, 0.0
    %v3399 = vsel %vm2535, %v3335, 0.0
    %v3400 = vsel %vm2536, %v3336, 0.0
    %v3401 = vsel %vm2537, %v3337, 0.0
    %v3402 = vsel %vm2538, %v3338, 0.0
    %v3403 = vsel %vm2539, %v3339, 0.0
    %v3404 = vsel %vm2540, %v3340, 0.0
    %v3405 = vsel %vm2541, %v3341, 0.0
    %v3406 = vsel %vm2542, %v3342, 0.0
    %v3407 = vsel %vm2543, %v3343, 0.0
    %v3408 = vsel %vm2544, %v3344, 0.0
    %v3409 = vsel %vm2545, %v3345, 0.0
    %v3410 = vsel %vm2546, %v3346, 0.0
    %v3411 = vsel %vm2547, %v3347, 0.0
    %v3412 = vsel %vm2548, %v3348, 0.0
    %v3413 = vsel %vm2549, %v3349, 0.0
    %v3414 = vsel %vm2550, %v3350, 0.0
    %v3415 = vsel %vm2551, %v3351, 0.0
    %v3416 = vsel %vm2552, %v3352, 0.0
    %v3417 = vsel %vm2553, %v3353, 0.0
    %v3418 = vsel %vm2554, %v3354, 0.0
    %v3419 = vsel %vm2555, %v3355, 0.0
    %v3420 = vsel %vm2556, %v3356, 0.0
    %v3421 = vsel %vm2557, %v3357, 0.0
    %v3422 = vsel %vm2558, %v3358, 0.0
    %v3423 = vsel %vm2559, %v3359, 0.0
    %v3424 = vsel %vm2560, %v3360, 0.0
    %v3425 = vsel %vm2561, %v3361, 0.0
    %v3426 = vsel %vm2562, %v3362, 0.0
    %v3427 = vsel %vm2563, %v3363, 0.0
    %v3428 = vsel %vm2564, %v3364, 0.0
    %v3429 = vsel %vm2565, %v3365, 0.0
    %v3430 = vsel %vm2566, %v3366, 0.0
    %v3431 = vsel %vm2567, %v3367, 0.0
    %v3432 = vsel %vm2568, %v3368, 0.0
    %v3433 = vsel %vm2569, %v3369, 0.0
    %v3434 = vsel %vm2570, %v3370, 0.0
    %v3435 = vsel %vm2571, %v3371, 0.0
    %v3436 = vsel %vm2572, %v3372, 0.0
    %v3437 = vsel %vm2573, %v3373, 0.0
    %v3438 = vsel %vm2574, %v3374, 0.0
    %v3439 = vsel %vm2575, %v3375, 0.0
    %v3440 = vsel %vm2576, %v3376, 0.0
    %v3441 = vsel %vm2577, %v3377, 0.0
    %v3442 = vsel %vm2578, %v3378, 0.0
    %v3443 = vsel %vm2579, %v3379, 0.0
    %v3444 = vsel %vm2580, %v3380, 0.0
    %v3445 = vsel %vm2581, %v3381, 0.0
    %v3446 = vsel %vm2582, %v3382, 0.0
    %v3447 = vsel %vm2583, %v3383, 0.0
    %v3448 = vsel %vm2584, %v3384, 0.0
    %v3449 = vsel %vm2585, %v3385, 0.0
    %v3450 = vsel %vm2586, %v3386, 0.0
    %v3451 = vsel %vm2587, %v3387, 0.0
    %v3452 = vsel %vm2588, %v3388, 0.0
    %v3453 = vsel %vm2589, %v3389, 0.0
    %v3454 = vsel %vm2590, %v3390, 0.0
    %v3455 = vsel %vm2591, %v3391, 0.0
    %v3456 = vsel %vm2592, %v3392, 0.0
    %v3457 = vadd.f32 %v3393, %v3394
    %3458 = vadd.xlane.f32.xlu0 %v3457
    %v3459 = vpop.xlane.xlu0 %3458
    %v3460 = vadd.f32 %v3395, %v3396
    %3461 = vadd.xlane.f32.xlu0 %v3460
    %v3462 = vpop.xlane.xlu0 %3461
    %v3463 = vadd.f32 %v3397, %v3398
    %3464 = vadd.xlane.f32.xlu0 %v3463
    %v3465 = vpop.xlane.xlu0 %3464
    %v3466 = vadd.f32 %v3399, %v3400
    %3467 = vadd.xlane.f32.xlu0 %v3466
    %v3468 = vpop.xlane.xlu0 %3467
    %v3469 = vadd.f32 %v3401, %v3402
    %3470 = vadd.xlane.f32.xlu0 %v3469
    %v3471 = vpop.xlane.xlu0 %3470
    %v3472 = vadd.f32 %v3403, %v3404
    %3473 = vadd.xlane.f32.xlu0 %v3472
    %v3474 = vpop.xlane.xlu0 %3473
    %v3475 = vadd.f32 %v3405, %v3406
    %3476 = vadd.xlane.f32.xlu0 %v3475
    %v3477 = vpop.xlane.xlu0 %3476
    %v3478 = vadd.f32 %v3407, %v3408
    %3479 = vadd.xlane.f32.xlu0 %v3478
    %v3480 = vpop.xlane.xlu0 %3479
    %v3481 = vadd.f32 %v3409, %v3410
    %3482 = vadd.xlane.f32.xlu0 %v3481
    %v3483 = vpop.xlane.xlu0 %3482
    %v3484 = vadd.f32 %v3411, %v3412
    %3485 = vadd.xlane.f32.xlu0 %v3484
    %v3486 = vpop.xlane.xlu0 %3485
    %v3487 = vadd.f32 %v3413, %v3414
    %3488 = vadd.xlane.f32.xlu0 %v3487
    %v3489 = vpop.xlane.xlu0 %3488
    %v3490 = vadd.f32 %v3415, %v3416
    %3491 = vadd.xlane.f32.xlu0 %v3490
    %v3492 = vpop.xlane.xlu0 %3491
    %v3493 = vadd.f32 %v3417, %v3418
    %3494 = vadd.xlane.f32.xlu0 %v3493
    %v3495 = vpop.xlane.xlu0 %3494
    %v3496 = vadd.f32 %v3419, %v3420
    %3497 = vadd.xlane.f32.xlu0 %v3496
    %v3498 = vpop.xlane.xlu0 %3497
    %v3499 = vadd.f32 %v3421, %v3422
    %3500 = vadd.xlane.f32.xlu0 %v3499
    %v3501 = vpop.xlane.xlu0 %3500
    %v3502 = vadd.f32 %v3423, %v3424
    %3503 = vadd.xlane.f32.xlu0 %v3502
    %v3504 = vpop.xlane.xlu0 %3503
    %v3505 = vadd.f32 %v3425, %v3426
    %3506 = vadd.xlane.f32.xlu0 %v3505
    %v3507 = vpop.xlane.xlu0 %3506
    %v3508 = vadd.f32 %v3427, %v3428
    %3509 = vadd.xlane.f32.xlu0 %v3508
    %v3510 = vpop.xlane.xlu0 %3509
    %v3511 = vadd.f32 %v3429, %v3430
    %3512 = vadd.xlane.f32.xlu0 %v3511
    %v3513 = vpop.xlane.xlu0 %3512
    %v3514 = vadd.f32 %v3431, %v3432
    %3515 = vadd.xlane.f32.xlu0 %v3514
    %v3516 = vpop.xlane.xlu0 %3515
    %v3517 = vadd.f32 %v3433, %v3434
    %3518 = vadd.xlane.f32.xlu0 %v3517
    %v3519 = vpop.xlane.xlu0 %3518
    %v3520 = vadd.f32 %v3435, %v3436
    %3521 = vadd.xlane.f32.xlu0 %v3520
    %v3522 = vpop.xlane.xlu0 %3521
    %v3523 = vadd.f32 %v3437, %v3438
    %3524 = vadd.xlane.f32.xlu0 %v3523
    %v3525 = vpop.xlane.xlu0 %3524
    %v3526 = vadd.f32 %v3439, %v3440
    %3527 = vadd.xlane.f32.xlu0 %v3526
    %v3528 = vpop.xlane.xlu0 %3527
    %v3529 = vadd.f32 %v3441, %v3442
    %3530 = vadd.xlane.f32.xlu0 %v3529
    %v3531 = vpop.xlane.xlu0 %3530
    %v3532 = vadd.f32 %v3443, %v3444
    %3533 = vadd.xlane.f32.xlu0 %v3532
    %v3534 = vpop.xlane.xlu0 %3533
    %v3535 = vadd.f32 %v3445, %v3446
    %3536 = vadd.xlane.f32.xlu0 %v3535
    %v3537 = vpop.xlane.xlu0 %3536
    %v3538 = vadd.f32 %v3447, %v3448
    %3539 = vadd.xlane.f32.xlu0 %v3538
    %v3540 = vpop.xlane.xlu0 %3539
    %v3541 = vadd.f32 %v3449, %v3450
    %3542 = vadd.xlane.f32.xlu0 %v3541
    %v3543 = vpop.xlane.xlu0 %3542
    %v3544 = vadd.f32 %v3451, %v3452
    %3545 = vadd.xlane.f32.xlu0 %v3544
    %v3546 = vpop.xlane.xlu0 %3545
    %v3547 = vadd.f32 %v3453, %v3454
    %3548 = vadd.xlane.f32.xlu0 %v3547
    %v3549 = vpop.xlane.xlu0 %3548
    %v3550 = vadd.f32 %v3455, %v3456
    %3551 = vadd.xlane.f32.xlu0 %v3550
    %v3552 = vpop.xlane.xlu0 %3551
    %3553 = vst.msk [vmem:[%s4] sm:$0xff] %vm1807, %v3459
    %3554 = vst.msk [vmem:[%s4 + $0x8] sm:$0xff] %vm1807, %v3462
    %3555 = vst.msk [vmem:[%s4 + $0x10] sm:$0xff] %vm1807, %v3465
    %3556 = vst.msk [vmem:[%s4 + $0x18] sm:$0xff] %vm1807, %v3468
    %3557 = vst.msk [vmem:[%s4 + $0x20] sm:$0xff] %vm1807, %v3471
    %3558 = vst.msk [vmem:[%s4 + $0x28] sm:$0xff] %vm1807, %v3474
    %3559 = vst.msk [vmem:[%s4 + $0x30] sm:$0xff] %vm1807, %v3477
    %3560 = vst.msk [vmem:[%s4 + $0x38] sm:$0xff] %vm1807, %v3480
    %3561 = vst.msk [vmem:[%s4 + $0x40] sm:$0xff] %vm1807, %v3483
    %3562 = vst.msk [vmem:[%s4 + $0x48] sm:$0xff] %vm1807, %v3486
    %3563 = vst.msk [vmem:[%s4 + $0x50] sm:$0xff] %vm1807, %v3489
    %3564 = vst.msk [vmem:[%s4 + $0x58] sm:$0xff] %vm1807, %v3492
    %3565 = vst.msk [vmem:[%s4 + $0x60] sm:$0xff] %vm1807, %v3495
    %3566 = vst.msk [vmem:[%s4 + $0x68] sm:$0xff] %vm1807, %v3498
    %3567 = vst.msk [vmem:[%s4 + $0x70] sm:$0xff] %vm1807, %v3501
    %3568 = vst.msk [vmem:[%s4 + $0x78] sm:$0xff] %vm1807, %v3504
    %3569 = vst.msk [vmem:[%s4 + $0x80] sm:$0xff] %vm1807, %v3507
    %3570 = vst.msk [vmem:[%s4 + $0x88] sm:$0xff] %vm1807, %v3510
    %3571 = vst.msk [vmem:[%s4 + $0x90] sm:$0xff] %vm1807, %v3513
    %3572 = vst.msk [vmem:[%s4 + $0x98] sm:$0xff] %vm1807, %v3516
    %3573 = vst.msk [vmem:[%s4 + $0xa0] sm:$0xff] %vm1807, %v3519
    %3574 = vst.msk [vmem:[%s4 + $0xa8] sm:$0xff] %vm1807, %v3522
    %3575 = vst.msk [vmem:[%s4 + $0xb0] sm:$0xff] %vm1807, %v3525
    %3576 = vst.msk [vmem:[%s4 + $0xb8] sm:$0xff] %vm1807, %v3528
    %3577 = vst.msk [vmem:[%s4 + $0xc0] sm:$0xff] %vm1807, %v3531
    %3578 = vst.msk [vmem:[%s4 + $0xc8] sm:$0xff] %vm1807, %v3534
    %3579 = vst.msk [vmem:[%s4 + $0xd0] sm:$0xff] %vm1807, %v3537
    %3580 = vst.msk [vmem:[%s4 + $0xd8] sm:$0xff] %vm1807, %v3540
    %3581 = vst.msk [vmem:[%s4 + $0xe0] sm:$0xff] %vm1807, %v3543
    %3582 = vst.msk [vmem:[%s4 + $0xe8] sm:$0xff] %vm1807, %v3546
    %3583 = vst.msk [vmem:[%s4 + $0xf0] sm:$0xff] %vm1807, %v3549
    %3584 = vst.msk [vmem:[%s4 + $0xf8] sm:$0xff] %vm1807, %v3552
  $region25: #{supervised_contrastive_loss.5} parent=0 // pred_fallthru
    _
  // Predicated region
  $region26: #{supervised_contrastive_loss.5} parent=0 // pred_check
    _
  $region27: #{supervised_contrastive_loss.5} parent=0 // pred_check_branch
    %3586 = sbr.rel (0) target = $region29
  $region28: #{supervised_contrastive_loss.5} parent=0 // pred_region
    _
  $region29: #{supervised_contrastive_loss.5} parent=0 // pred_fallthru
    _
  // Predicated region
  $region30: #{supervised_contrastive_loss.5} parent=0 // pred_check
    _
  $region31: #{supervised_contrastive_loss.5} parent=0 // pred_check_branch
    %3588 = sbr.rel (0) target = $region33
  $region32: #{supervised_contrastive_loss.5} parent=0 // pred_region
    _
  $region33: #{supervised_contrastive_loss.5} parent=0 // pred_fallthru
    _

</llo_original>
